<compile_context>
chip_gen: v5e
topology: v5e:2x2
jax: 0.10.0
libtpu: 0.0.40
codegen_flags: <defaults>
</compile_context>

<pallas_src>
import functools

import jax
import jax.numpy as jnp
import numpy as np
from jax.experimental import pallas as pl
from jax.experimental.pallas import tpu as pltpu


# 2-D dot_general dimension numbers (no materialized transposes in the hot path).
NT_DIM_NUMBERS = (((1,), (1,)), ((), ()))   # A @ B^T   (contract last dims)
TN_DIM_NUMBERS = (((0,), (0,)), ((), ()))   # A^T @ B   (contract first dims)

_EPS = 1e-5


# ----------------------------------------------------------------------------
# Kernel 1: BatchNorm (pre-folded scale/shift) + multi-head attention + to_out
#           + residual-1, one batch element per grid step.
# ----------------------------------------------------------------------------
def attention_kernel(x_ref, scl_ref, shift_ref, wk_ref, wq_ref, wv_ref,
                     wo_ref, bo_ref, out_ref, attn_acc,
                     *, heads, dim_head_pad, compute_dtype, approx_recip):
    f32 = jnp.float32
    x = x_ref[...]                                            # (dim, N) f32

    # BatchNorm1d apply; cross-batch stats precomputed in the wrapper.
    xn = (x * scl_ref[...] + shift_ref[...]).astype(compute_dtype)

    # All heads fused: one (inner_pad, dim) @ (dim, N) matmul per projection.
    # Softmax scale is folded into the Q weights; the reference's q<->k swap is
    # folded into which weight feeds which dot operand below.
    k_all = jnp.dot(wk_ref[...], xn, preferred_element_type=f32).astype(compute_dtype)
    q_all = jnp.dot(wq_ref[...], xn, preferred_element_type=f32).astype(compute_dtype)
    v_all = jnp.dot(wv_ref[...], xn, preferred_element_type=f32).astype(compute_dtype)

    for h in range(heads):                  # small static unroll over heads
        rs = h * dim_head_pad               # 16-row aligned head stride
        k_h = k_all[rs:rs + dim_head_pad, :]
        q_h = q_all[rs:rs + dim_head_pad, :]
        v_h = v_all[rs:rs + dim_head_pad, :]

        # dots[i, j] = sum_d Kproj[d, i] * Qproj[d, j]  (scale already in Q wts;
        # zero-padded feature rows contribute nothing).
        dots = jax.lax.dot_general(k_h, q_h, TN_DIM_NUMBERS,
                                   preferred_element_type=f32)          # (N, N)
        m = jnp.max(dots, axis=-1, keepdims=True)
        e = jnp.exp(dots - m)
        denom = jnp.sum(e, axis=-1, keepdims=True)
        attn = e * pl.reciprocal(denom, approx=approx_recip)            # softmax(-1)

        # o[d, i] = sum_j v[d, j] * attn[i, j]
        o_h = jax.lax.dot_general(v_h, attn.astype(compute_dtype), NT_DIM_NUMBERS,
                                  preferred_element_type=f32)           # (dhp, N)
        # Tile-aligned static-offset store into the head-concat scratch.
        attn_acc[rs:rs + dim_head_pad, :] = o_h.astype(compute_dtype)

    # to_out: dense 1x1 conv with bias, then residual 1.
    att = jnp.dot(wo_ref[...], attn_acc[...], preferred_element_type=f32)
    out_ref[...] = att + bo_ref[...] + x


# ----------------------------------------------------------------------------
# Kernel 2: FFN (BatchNorm -> grouped 1x1 conv -> ReLU -> 1x1 conv) + residual-2,
#           one batch element per grid step.  Dropout(p=0.0) == identity.
# ----------------------------------------------------------------------------
def ffn_kernel(att_ref, scl_ref, shift_ref, w1_ref, w2_ref, out_ref,
               *, compute_dtype):
    f32 = jnp.float32
    att = att_ref[...]                                        # (dim, N) f32
    yn = (att * scl_ref[...] + shift_ref[...]).astype(compute_dtype)
    h1 = jnp.dot(w1_ref[...], yn, preferred_element_type=f32)   # block-diag grouped conv
    h1 = jnp.maximum(h1, 0.0).astype(compute_dtype)             # ReLU
    h2 = jnp.dot(w2_ref[...], h1, preferred_element_type=f32)   # dense 1x1 conv, no bias
    out_ref[...] = att + h2                                     # residual 2


# ----------------------------------------------------------------------------
# Wrapper
# ----------------------------------------------------------------------------
def _fold_bn(t, gamma, beta, eps=_EPS):
    """Training-mode BatchNorm1d stats over (batch, points), folded into per-channel
    (dim, 1) scale/shift.  Tiny XLA reduction; makes the pallas grid steps independent."""
    dim = t.shape[1]
    mean = jnp.mean(t, axis=(0, 2))
    var = jnp.maximum(jnp.var(t, axis=(0, 2)), 0.0)    # two-pass biased var, clamped
    scl = gamma * jax.lax.rsqrt(var + eps)
    shift = beta - mean * scl
    return scl.reshape(dim, 1), shift.reshape(dim, 1)


@functools.partial(jax.jit, static_argnames=("heads", "compute_dtype"))
def transformer_block(x, params, *, heads, compute_dtype=jnp.bfloat16):
    b, dim, n = x.shape
    cd = compute_dtype
    inner_p = params["wk_eff"].shape[0]          # heads * dim_head_pad
    inner = params["w1_eff"].shape[0]            # heads * dim_head
    dim_head_pad = inner_p // heads

    # Activations stay (B, dim, N): squeeze the batch dim per grid step.
    act_spec = pl.BlockSpec((None, dim, n), lambda bi: (bi, 0, 0))

    def full(shape):                             # grid-invariant (resident) operand
        return pl.BlockSpec(shape, lambda bi: (0, 0))

    cparams = pltpu.CompilerParams(dimension_semantics=("parallel",))

    # ------------------------------ Attention ------------------------------
    scl_a, shift_a = _fold_bn(x, params["gamma_a"], params["beta_a"])
    attn_cost = pl.CostEstimate(
        flops=int(b * (6 * inner_p * dim * n
                       + 4 * heads * dim_head_pad * n * n
                       + 2 * dim * inner_p * n)),
        transcendentals=int(b * heads * n * (n + 1)),
        bytes_accessed=int(2 * b * dim * n * 4 + 4 * inner_p * dim * 2),
    )
    att = pl.pallas_call(
        functools.partial(attention_kernel, heads=heads, dim_head_pad=dim_head_pad,
                          compute_dtype=cd, approx_recip=(cd != jnp.float32)),
        grid=(b,),
        in_specs=[act_spec,
                  full((dim, 1)), full((dim, 1)),
                  full((inner_p, dim)), full((inner_p, dim)), full((inner_p, dim)),
                  full((dim, inner_p)), full((dim, 1))],
        out_specs=act_spec,
        out_shape=jax.ShapeDtypeStruct((b, dim, n), x.dtype),
        scratch_shapes=[pltpu.VMEM((inner_p, n), cd)],
        compiler_params=cparams,
        cost_estimate=attn_cost,
    )(x, scl_a, shift_a,
      params["wk_eff"].astype(cd), params["wq_eff"].astype(cd),
      params["wv_eff"].astype(cd), params["wo_eff"].astype(cd),
      params["bo"].reshape(dim, 1))

    # --------------------------------- FFN ---------------------------------
    scl_f, shift_f = _fold_bn(att, params["gamma_f"], params["beta_f"])
    ffn_cost = pl.CostEstimate(
        flops=int(b * 4 * inner * dim * n),
        transcendentals=0,
        bytes_accessed=int(2 * b * dim * n * 4 + 2 * inner * dim * 2),
    )
    out = pl.pallas_call(
        functools.partial(ffn_kernel, compute_dtype=cd),
        grid=(b,),
        in_specs=[act_spec,
                  full((dim, 1)), full((dim, 1)),
                  full((inner, dim)), full((dim, inner))],
        out_specs=act_spec,
        out_shape=jax.ShapeDtypeStruct((b, dim, n), x.dtype),
        compiler_params=cparams,
        cost_estimate=ffn_cost,
    )(att, scl_f, shift_f, params["w1_eff"].astype(cd), params["w2"].astype(cd))

    return out


# ----------------------------------------------------------------------------
# Parameter setup (host glue): fold the grouped-conv structure, the einops channel
# interleave, the softmax scale and the dim_head tile padding into dense weights.
# ----------------------------------------------------------------------------
def _pad_to_multiple(v, m):
    return ((v + m - 1) // m) * m


def qkv_effective(W, dim, heads, dim_head, dim_head_pad, scale=1.0):
    """(heads*dim_head_pad, dim) matrix; row h*dim_head_pad + d is the grouped-conv
    output channel feeding attention head h, feature d; rows d >= dim_head are zero."""
    gi = dim // heads
    Wn = np.asarray(W, np.float32)
    eff = np.zeros((heads * dim_head_pad, dim), np.float32)
    for h in range(heads):
        for d in range(dim_head):
            c = d * heads + h              # conv output channel for (head h, feature d)
            g = c // dim_head              # conv group of channel c
            eff[h * dim_head_pad + d, g * gi:(g + 1) * gi] = Wn[c]
    return jnp.asarray(eff * scale)


def wo_effective(Wo, heads, dim_head, dim_head_pad):
    """to_out conv weight with zero columns inserted at the padded head features."""
    Wn = np.asarray(Wo, np.float32)
    dim = Wn.shape[0]
    eff = np.zeros((dim, heads * dim_head_pad), np.float32)
    for h in range(heads):
        eff[:, h * dim_head_pad:h * dim_head_pad + dim_head] = \
            Wn[:, h * dim_head:(h + 1) * dim_head]
    return jnp.asarray(eff)


def block_diag_eff(W, dim, heads, dim_head):
    """FFN grouped 1x1 conv as a block-diagonal dense (inner, dim) matrix."""
    gi = dim // heads
    inner = heads * dim_head
    Wn = np.asarray(W, np.float32)
    eff = np.zeros((inner, dim), np.float32)
    for g in range(heads):
        eff[g * dim_head:(g + 1) * dim_head, g * gi:(g + 1) * gi] = \
            Wn[g * dim_head:(g + 1) * dim_head]
    return jnp.asarray(eff)


def init_params(key, dim, heads, dim_head):
    inner = heads * dim_head
    gi = dim // heads
    dim_head_pad = _pad_to_multiple(dim_head, 16)   # bf16 sublane-tile aligned heads
    ks = jax.random.split(key, 7)

    def uinit(k, shape, fan_in):
        bound = 1.0 / float(np.sqrt(fan_in))
        return jax.random.uniform(k, shape, jnp.float32, -bound, bound)

    raw = dict(
        Wk=uinit(ks[0], (inner, gi), gi),
        Wq=uinit(ks[1], (inner, gi), gi),
        Wv=uinit(ks[2], (inner, gi), gi),
        Wo=uinit(ks[3], (dim, inner), inner),
        bo=uinit(ks[4], (dim,), inner),
        W1=uinit(ks[5], (inner, gi), gi),
        W2=uinit(ks[6], (dim, inner), inner),
        gamma_a=jnp.ones((dim,), jnp.float32),
        beta_a=jnp.zeros((dim,), jnp.float32),
        gamma_f=jnp.ones((dim,), jnp.float32),
        beta_f=jnp.zeros((dim,), jnp.float32),
    )
    scale = float(dim_head) ** -0.5
    params = dict(
        gamma_a=raw["gamma_a"], beta_a=raw["beta_a"],
        gamma_f=raw["gamma_f"], beta_f=raw["beta_f"],
        wk_eff=qkv_effective(raw["Wk"], dim, heads, dim_head, dim_head_pad),
        wq_eff=qkv_effective(raw["Wq"], dim, heads, dim_head, dim_head_pad, scale=scale),
        wv_eff=qkv_effective(raw["Wv"], dim, heads, dim_head, dim_head_pad),
        wo_eff=wo_effective(raw["Wo"], heads, dim_head, dim_head_pad),
        bo=raw["bo"],
        w1_eff=block_diag_eff(raw["W1"], dim, heads, dim_head),
        w2=raw["W2"],
    )
    return raw, params


# ----------------------------------------------------------------------------
# Pure-numpy reference (direct translation of the PyTorch forward) for checking
# ----------------------------------------------------------------------------
def reference(x, raw, heads, dim_head, eps=_EPS):
    x = np.asarray(x, np.float32)
    b, dim, n = x.shape
    inner = heads * dim_head

    def bn(t, gamma, beta):
        mean = t.mean(axis=(0, 2), keepdims=True)
        var = ((t - mean) ** 2).mean(axis=(0, 2), keepdims=True)
        return (t - mean) / np.sqrt(var + eps) * np.asarray(gamma).reshape(1, dim, 1) \
               + np.asarray(beta).reshape(1, dim, 1)

    def gconv(t, W, groups):
        Cin, Cout = t.shape[1], np.asarray(W).shape[0]
        tg = t.reshape(b, groups, Cin // groups, n)
        Wg = np.asarray(W, np.float32).reshape(groups, Cout // groups, Cin // groups)
        return np.einsum('gec,bgcn->bgen', Wg, tg).reshape(b, Cout, n)

    xn = bn(x, raw['gamma_a'], raw['beta_a'])
    kc, qc, vc = (gconv(xn, raw[w], heads) for w in ('Wk', 'Wq', 'Wv'))

    def rearr(t):  # 'b (d h) n -> b h n d'
        return t.reshape(b, dim_head, heads, n).transpose(0, 2, 3, 1)

    q, k, v = rearr(kc), rearr(qc), rearr(vc)                # note the q<->k swap
    dots = np.einsum('bhid,bhjd->bhij', q, k) * (float(dim_head) ** -0.5)
    dots = dots - dots.max(axis=-1, keepdims=True)
    e = np.exp(dots)
    attn = e / e.sum(axis=-1, keepdims=True)
    o = np.einsum('bhij,bhjd->bhid', attn, v)
    o = o.transpose(0, 1, 3, 2).reshape(b, inner, n)         # 'b h n d -> b (h d) n'
    att = np.einsum('dc,bcn->bdn', np.asarray(raw['Wo'], np.float32), o) \
        + np.asarray(raw['bo'], np.float32).reshape(1, dim, 1)
    att = att + x

    yn = bn(att, raw['gamma_f'], raw['beta_f'])
    h1 = np.maximum(gconv(yn, raw['W1'], heads), 0.0)
    h2 = np.einsum('dc,bcn->bdn', np.asarray(raw['W2'], np.float32), h1)
    return att + h2


# ----------------------------------------------------------------------------
if __name__ == "__main__":
    B, DIM, N = 2, 16, 128          # N multiple of 128 -> lane-dense (dim, N) slabs
    HEADS, DIM_HEAD = 4, 8

    key = jax.random.PRNGKey(0)
    kx, kp = jax.random.split(key)
    x = jax.random.normal(kx, (B, DIM, N), jnp.float32)
    raw, params = init_params(kp, DIM, HEADS, DIM_HEAD)
    ref = reference(x, raw, HEADS, DIM_HEAD)

    # f32 MXU-operand path (tight check against the numpy reference, exact recip).
    out_f32 = jax.block_until_ready(
        transformer_block(x, params, heads=HEADS, compute_dtype=jnp.float32))
    assert out_f32.shape == (B, DIM, N)
    err32 = float(np.abs(np.asarray(out_f32) - ref).max())
    assert np.allclose(np.asarray(out_f32), ref, atol=2e-3, rtol=2e-3), err32

    # bf16 MXU-operand path (production config; f32 accumulation, looser tolerance).
    out_bf16 = jax.block_until_ready(
        transformer_block(x, params, heads=HEADS, compute_dtype=jnp.bfloat16))
    errbf = float(np.abs(np.asarray(out_bf16) - ref).max())
    assert np.allclose(np.asarray(out_bf16), ref, atol=5e-2, rtol=5e-2), errbf

    print("KERNEL_OK")
</pallas_src>

<mosaic_0001>
module attributes {stable_mosaic.version = 11 : i64} {
  func.func @attention_kernel(%arg0: i32, %arg1: memref<1x16x128xf32, #tpu.memory_space<vmem>>, %arg2: memref<16x1xf32, #tpu.memory_space<vmem>>, %arg3: memref<16x1xf32, #tpu.memory_space<vmem>>, %arg4: memref<64x16xf32, #tpu.memory_space<vmem>>, %arg5: memref<64x16xf32, #tpu.memory_space<vmem>>, %arg6: memref<64x16xf32, #tpu.memory_space<vmem>>, %arg7: memref<16x64xf32, #tpu.memory_space<vmem>>, %arg8: memref<16x1xf32, #tpu.memory_space<vmem>>, %arg9: memref<1x16x128xf32, #tpu.memory_space<vmem>>, %arg10: memref<64x128xf32, #tpu.memory_space<vmem>>) attributes {dimension_semantics = [#tpu.dimension_semantics<parallel>], iteration_bounds = array<i64: 2>, scalar_prefetch = 0 : i64, scratch_operands = 1 : i64, tpu.core_type = #tpu.core_type<tc>, window_params = [{transform_indices = @transform_0, window_bounds = array<i64: 1, 16, 128>}, {pipeline_mode = #tpu.pipeline_mode<synchronous>, transform_indices = @transform_1, window_bounds = array<i64: 16, 1>}, {pipeline_mode = #tpu.pipeline_mode<synchronous>, transform_indices = @transform_2, window_bounds = array<i64: 16, 1>}, {pipeline_mode = #tpu.pipeline_mode<synchronous>, transform_indices = @transform_3, window_bounds = array<i64: 64, 16>}, {pipeline_mode = #tpu.pipeline_mode<synchronous>, transform_indices = @transform_4, window_bounds = array<i64: 64, 16>}, {pipeline_mode = #tpu.pipeline_mode<synchronous>, transform_indices = @transform_5, window_bounds = array<i64: 64, 16>}, {pipeline_mode = #tpu.pipeline_mode<synchronous>, transform_indices = @transform_6, window_bounds = array<i64: 16, 64>}, {pipeline_mode = #tpu.pipeline_mode<synchronous>, transform_indices = @transform_7, window_bounds = array<i64: 16, 1>}, {transform_indices = @transform_8, window_bounds = array<i64: 1, 16, 128>}]} {
    %c0 = arith.constant 0 : index
    %c0_0 = arith.constant 0 : index
    %c0_1 = arith.constant 0 : index
    %0 = vector.load %arg1[%c0, %c0_0, %c0_1] : memref<1x16x128xf32, #tpu.memory_space<vmem>>, vector<1x16x128xf32>
    %1 = vector.shape_cast %0 : vector<1x16x128xf32> to vector<16x128xf32>
    %c0_2 = arith.constant 0 : index
    %c0_3 = arith.constant 0 : index
    %2 = vector.load %arg2[%c0_2, %c0_3] : memref<16x1xf32, #tpu.memory_space<vmem>>, vector<16x1xf32>
    %3 = vector.broadcast %2 : vector<16x1xf32> to vector<16x128xf32>
    %4 = arith.mulf %1, %3 : vector<16x128xf32>
    %c0_4 = arith.constant 0 : index
    %c0_5 = arith.constant 0 : index
    %5 = vector.load %arg3[%c0_4, %c0_5] : memref<16x1xf32, #tpu.memory_space<vmem>>, vector<16x1xf32>
    %6 = vector.broadcast %5 : vector<16x1xf32> to vector<16x128xf32>
    %7 = arith.addf %4, %6 : vector<16x128xf32>
    %c0_6 = arith.constant 0 : index
    %c0_7 = arith.constant 0 : index
    %8 = vector.load %arg4[%c0_6, %c0_7] : memref<64x16xf32, #tpu.memory_space<vmem>>, vector<64x16xf32>
    %cst = arith.constant dense<0.000000e+00> : vector<64x128xf32>
    %9 = tpu.matmul %8, %7, %cst {dimension_numbers = #tpu.dot_dimension_numbers<[1], [0], [0], [1], [0, 0, 1, 1], [], []>} : vector<64x16xf32>, vector<16x128xf32>, vector<64x128xf32> -> vector<64x128xf32>
    %c0_8 = arith.constant 0 : index
    %c0_9 = arith.constant 0 : index
    %10 = vector.load %arg5[%c0_8, %c0_9] : memref<64x16xf32, #tpu.memory_space<vmem>>, vector<64x16xf32>
    %cst_10 = arith.constant dense<0.000000e+00> : vector<64x128xf32>
    %11 = tpu.matmul %10, %7, %cst_10 {dimension_numbers = #tpu.dot_dimension_numbers<[1], [0], [0], [1], [0, 0, 1, 1], [], []>} : vector<64x16xf32>, vector<16x128xf32>, vector<64x128xf32> -> vector<64x128xf32>
    %c0_11 = arith.constant 0 : index
    %c0_12 = arith.constant 0 : index
    %12 = vector.load %arg6[%c0_11, %c0_12] : memref<64x16xf32, #tpu.memory_space<vmem>>, vector<64x16xf32>
    %cst_13 = arith.constant dense<0.000000e+00> : vector<64x128xf32>
    %13 = tpu.matmul %12, %7, %cst_13 {dimension_numbers = #tpu.dot_dimension_numbers<[1], [0], [0], [1], [0, 0, 1, 1], [], []>} : vector<64x16xf32>, vector<16x128xf32>, vector<64x128xf32> -> vector<64x128xf32>
    %14 = vector.extract_strided_slice %9 {offsets = [0, 0], sizes = [16, 128], strides = [1, 1]} : vector<64x128xf32> to vector<16x128xf32>
    %15 = vector.extract_strided_slice %11 {offsets = [0, 0], sizes = [16, 128], strides = [1, 1]} : vector<64x128xf32> to vector<16x128xf32>
    %16 = vector.extract_strided_slice %13 {offsets = [0, 0], sizes = [16, 128], strides = [1, 1]} : vector<64x128xf32> to vector<16x128xf32>
    %cst_14 = arith.constant dense<0.000000e+00> : vector<128x128xf32>
    %17 = tpu.matmul %14, %15, %cst_14 {dimension_numbers = #tpu.dot_dimension_numbers<[0], [0], [1], [1], [0, 1, 1, 1], [], []>} : vector<16x128xf32>, vector<16x128xf32>, vector<128x128xf32> -> vector<128x128xf32>
    %cst_15 = arith.constant dense<0xFF800000> : vector<128xf32>
    %18 = vector.multi_reduction <maximumf>, %17, %cst_15 [1] : vector<128x128xf32> to vector<128xf32>
    %19 = vector.shape_cast %18 : vector<128xf32> to vector<128x1xf32>
    %20 = vector.broadcast %19 : vector<128x1xf32> to vector<128x128xf32>
    %21 = arith.subf %17, %20 : vector<128x128xf32>
    %22 = math.exp %21 : vector<128x128xf32>
    %cst_16 = arith.constant dense<0.000000e+00> : vector<128xf32>
    %23 = vector.multi_reduction <add>, %22, %cst_16 [1] : vector<128x128xf32> to vector<128xf32>
    %24 = vector.shape_cast %23 : vector<128xf32> to vector<128x1xf32>
    %25 = tpu.reciprocal %24 : vector<128x1xf32> -> vector<128x1xf32>
    %26 = vector.broadcast %25 : vector<128x1xf32> to vector<128x128xf32>
    %27 = arith.mulf %22, %26 : vector<128x128xf32>
    %cst_17 = arith.constant dense<0.000000e+00> : vector<16x128xf32>
    %28 = tpu.matmul %16, %27, %cst_17 {dimension_numbers = #tpu.dot_dimension_numbers<[1], [1], [0], [0], [0, 0, 1, 0], [], []>} : vector<16x128xf32>, vector<128x128xf32>, vector<16x128xf32> -> vector<16x128xf32>
    %c0_18 = arith.constant 0 : index
    %c0_19 = arith.constant 0 : index
    %29 = vector.load %arg10[%c0_18, %c0_19] : memref<64x128xf32, #tpu.memory_space<vmem>>, vector<16x128xf32>
    tpu.vector_store %arg10[%c0_18, %c0_19], %28 {strides = array<i32>} : memref<64x128xf32, #tpu.memory_space<vmem>>, vector<16x128xf32>,
    %30 = vector.extract_strided_slice %9 {offsets = [16, 0], sizes = [16, 128], strides = [1, 1]} : vector<64x128xf32> to vector<16x128xf32>
    %31 = vector.extract_strided_slice %11 {offsets = [16, 0], sizes = [16, 128], strides = [1, 1]} : vector<64x128xf32> to vector<16x128xf32>
    %32 = vector.extract_strided_slice %13 {offsets = [16, 0], sizes = [16, 128], strides = [1, 1]} : vector<64x128xf32> to vector<16x128xf32>
    %cst_20 = arith.constant dense<0.000000e+00> : vector<128x128xf32>
    %33 = tpu.matmul %30, %31, %cst_20 {dimension_numbers = #tpu.dot_dimension_numbers<[0], [0], [1], [1], [0, 1, 1, 1], [], []>} : vector<16x128xf32>, vector<16x128xf32>, vector<128x128xf32> -> vector<128x128xf32>
    %cst_21 = arith.constant dense<0xFF800000> : vector<128xf32>
    %34 = vector.multi_reduction <maximumf>, %33, %cst_21 [1] : vector<128x128xf32> to vector<128xf32>
    %35 = vector.shape_cast %34 : vector<128xf32> to vector<128x1xf32>
    %36 = vector.broadcast %35 : vector<128x1xf32> to vector<128x128xf32>
    %37 = arith.subf %33, %36 : vector<128x128xf32>
    %38 = math.exp %37 : vector<128x128xf32>
    %cst_22 = arith.constant dense<0.000000e+00> : vector<128xf32>
    %39 = vector.multi_reduction <add>, %38, %cst_22 [1] : vector<128x128xf32> to vector<128xf32>
    %40 = vector.shape_cast %39 : vector<128xf32> to vector<128x1xf32>
    %41 = tpu.reciprocal %40 : vector<128x1xf32> -> vector<128x1xf32>
    %42 = vector.broadcast %41 : vector<128x1xf32> to vector<128x128xf32>
    %43 = arith.mulf %38, %42 : vector<128x128xf32>
    %cst_23 = arith.constant dense<0.000000e+00> : vector<16x128xf32>
    %44 = tpu.matmul %32, %43, %cst_23 {dimension_numbers = #tpu.dot_dimension_numbers<[1], [1], [0], [0], [0, 0, 1, 0], [], []>} : vector<16x128xf32>, vector<128x128xf32>, vector<16x128xf32> -> vector<16x128xf32>
    %c16 = arith.constant 16 : index
    %c0_24 = arith.constant 0 : index
    %45 = vector.load %arg10[%c16, %c0_24] : memref<64x128xf32, #tpu.memory_space<vmem>>, vector<16x128xf32>
    tpu.vector_store %arg10[%c16, %c0_24], %44 {strides = array<i32>} : memref<64x128xf32, #tpu.memory_space<vmem>>, vector<16x128xf32>,
    %46 = vector.extract_strided_slice %9 {offsets = [32, 0], sizes = [16, 128], strides = [1, 1]} : vector<64x128xf32> to vector<16x128xf32>
    %47 = vector.extract_strided_slice %11 {offsets = [32, 0], sizes = [16, 128], strides = [1, 1]} : vector<64x128xf32> to vector<16x128xf32>
    %48 = vector.extract_strided_slice %13 {offsets = [32, 0], sizes = [16, 128], strides = [1, 1]} : vector<64x128xf32> to vector<16x128xf32>
    %cst_25 = arith.constant dense<0.000000e+00> : vector<128x128xf32>
    %49 = tpu.matmul %46, %47, %cst_25 {dimension_numbers = #tpu.dot_dimension_numbers<[0], [0], [1], [1], [0, 1, 1, 1], [], []>} : vector<16x128xf32>, vector<16x128xf32>, vector<128x128xf32> -> vector<128x128xf32>
    %cst_26 = arith.constant dense<0xFF800000> : vector<128xf32>
    %50 = vector.multi_reduction <maximumf>, %49, %cst_26 [1] : vector<128x128xf32> to vector<128xf32>
    %51 = vector.shape_cast %50 : vector<128xf32> to vector<128x1xf32>
    %52 = vector.broadcast %51 : vector<128x1xf32> to vector<128x128xf32>
    %53 = arith.subf %49, %52 : vector<128x128xf32>
    %54 = math.exp %53 : vector<128x128xf32>
    %cst_27 = arith.constant dense<0.000000e+00> : vector<128xf32>
    %55 = vector.multi_reduction <add>, %54, %cst_27 [1] : vector<128x128xf32> to vector<128xf32>
    %56 = vector.shape_cast %55 : vector<128xf32> to vector<128x1xf32>
    %57 = tpu.reciprocal %56 : vector<128x1xf32> -> vector<128x1xf32>
    %58 = vector.broadcast %57 : vector<128x1xf32> to vector<128x128xf32>
    %59 = arith.mulf %54, %58 : vector<128x128xf32>
    %cst_28 = arith.constant dense<0.000000e+00> : vector<16x128xf32>
    %60 = tpu.matmul %48, %59, %cst_28 {dimension_numbers = #tpu.dot_dimension_numbers<[1], [1], [0], [0], [0, 0, 1, 0], [], []>} : vector<16x128xf32>, vector<128x128xf32>, vector<16x128xf32> -> vector<16x128xf32>
    %c32 = arith.constant 32 : index
    %c0_29 = arith.constant 0 : index
    %61 = vector.load %arg10[%c32, %c0_29] : memref<64x128xf32, #tpu.memory_space<vmem>>, vector<16x128xf32>
    tpu.vector_store %arg10[%c32, %c0_29], %60 {strides = array<i32>} : memref<64x128xf32, #tpu.memory_space<vmem>>, vector<16x128xf32>,
    %62 = vector.extract_strided_slice %9 {offsets = [48, 0], sizes = [16, 128], strides = [1, 1]} : vector<64x128xf32> to vector<16x128xf32>
    %63 = vector.extract_strided_slice %11 {offsets = [48, 0], sizes = [16, 128], strides = [1, 1]} : vector<64x128xf32> to vector<16x128xf32>
    %64 = vector.extract_strided_slice %13 {offsets = [48, 0], sizes = [16, 128], strides = [1, 1]} : vector<64x128xf32> to vector<16x128xf32>
    %cst_30 = arith.constant dense<0.000000e+00> : vector<128x128xf32>
    %65 = tpu.matmul %62, %63, %cst_30 {dimension_numbers = #tpu.dot_dimension_numbers<[0], [0], [1], [1], [0, 1, 1, 1], [], []>} : vector<16x128xf32>, vector<16x128xf32>, vector<128x128xf32> -> vector<128x128xf32>
    %cst_31 = arith.constant dense<0xFF800000> : vector<128xf32>
    %66 = vector.multi_reduction <maximumf>, %65, %cst_31 [1] : vector<128x128xf32> to vector<128xf32>
    %67 = vector.shape_cast %66 : vector<128xf32> to vector<128x1xf32>
    %68 = vector.broadcast %67 : vector<128x1xf32> to vector<128x128xf32>
    %69 = arith.subf %65, %68 : vector<128x128xf32>
    %70 = math.exp %69 : vector<128x128xf32>
    %cst_32 = arith.constant dense<0.000000e+00> : vector<128xf32>
    %71 = vector.multi_reduction <add>, %70, %cst_32 [1] : vector<128x128xf32> to vector<128xf32>
    %72 = vector.shape_cast %71 : vector<128xf32> to vector<128x1xf32>
    %73 = tpu.reciprocal %72 : vector<128x1xf32> -> vector<128x1xf32>
    %74 = vector.broadcast %73 : vector<128x1xf32> to vector<128x128xf32>
    %75 = arith.mulf %70, %74 : vector<128x128xf32>
    %cst_33 = arith.constant dense<0.000000e+00> : vector<16x128xf32>
    %76 = tpu.matmul %64, %75, %cst_33 {dimension_numbers = #tpu.dot_dimension_numbers<[1], [1], [0], [0], [0, 0, 1, 0], [], []>} : vector<16x128xf32>, vector<128x128xf32>, vector<16x128xf32> -> vector<16x128xf32>
    %c48 = arith.constant 48 : index
    %c0_34 = arith.constant 0 : index
    %77 = vector.load %arg10[%c48, %c0_34] : memref<64x128xf32, #tpu.memory_space<vmem>>, vector<16x128xf32>
    tpu.vector_store %arg10[%c48, %c0_34], %76 {strides = array<i32>} : memref<64x128xf32, #tpu.memory_space<vmem>>, vector<16x128xf32>,
    %c0_35 = arith.constant 0 : index
    %c0_36 = arith.constant 0 : index
    %78 = vector.load %arg7[%c0_35, %c0_36] : memref<16x64xf32, #tpu.memory_space<vmem>>, vector<16x64xf32>
    %c0_37 = arith.constant 0 : index
    %c0_38 = arith.constant 0 : index
    %79 = vector.load %arg10[%c0_37, %c0_38] : memref<64x128xf32, #tpu.memory_space<vmem>>, vector<64x128xf32>
    %cst_39 = arith.constant dense<0.000000e+00> : vector<16x128xf32>
    %80 = tpu.matmul %78, %79, %cst_39 {dimension_numbers = #tpu.dot_dimension_numbers<[1], [0], [0], [1], [0, 0, 1, 1], [], []>} : vector<16x64xf32>, vector<64x128xf32>, vector<16x128xf32> -> vector<16x128xf32>
    %c0_40 = arith.constant 0 : index
    %c0_41 = arith.constant 0 : index
    %81 = vector.load %arg8[%c0_40, %c0_41] : memref<16x1xf32, #tpu.memory_space<vmem>>, vector<16x1xf32>
    %82 = vector.broadcast %81 : vector<16x1xf32> to vector<16x128xf32>
    %83 = arith.addf %80, %82 : vector<16x128xf32>
    %84 = arith.addf %83, %1 : vector<16x128xf32>
    %c0_42 = arith.constant 0 : index
    %c0_43 = arith.constant 0 : index
    %c0_44 = arith.constant 0 : index
    %85 = vector.load %arg9[%c0_42, %c0_43, %c0_44] : memref<1x16x128xf32, #tpu.memory_space<vmem>>, vector<1x16x128xf32>
    %86 = vector.shape_cast %85 : vector<1x16x128xf32> to vector<16x128xf32>
    %87 = vector.shape_cast %84 : vector<16x128xf32> to vector<1x16x128xf32>
    tpu.vector_store %arg9[%c0_42, %c0_43, %c0_44], %87 {strides = array<i32>} : memref<1x16x128xf32, #tpu.memory_space<vmem>>, vector<1x16x128xf32>,
    return
  }
  func.func @transform_0(%arg0: i32) -> (i32, i32, i32) {
    %c0_i32 = arith.constant 0 : i32
    %c0_i32_0 = arith.constant 0 : i32
    %c0_i32_1 = arith.constant 0 : i32
    return %arg0, %c0_i32, %c0_i32_0 : i32, i32, i32
  }
  func.func @transform_1(%arg0: i32) -> (i32, i32) {
    %c0_i32 = arith.constant 0 : i32
    %c0_i32_0 = arith.constant 0 : i32
    %c0_i32_1 = arith.constant 0 : i32
    return %c0_i32, %c0_i32_0 : i32, i32
  }
  func.func @transform_2(%arg0: i32) -> (i32, i32) {
    %c0_i32 = arith.constant 0 : i32
    %c0_i32_0 = arith.constant 0 : i32
    %c0_i32_1 = arith.constant 0 : i32
    return %c0_i32, %c0_i32_0 : i32, i32
  }
  func.func @transform_3(%arg0: i32) -> (i32, i32) {
    %c0_i32 = arith.constant 0 : i32
    %c0_i32_0 = arith.constant 0 : i32
    %c0_i32_1 = arith.constant 0 : i32
    return %c0_i32, %c0_i32_0 : i32, i32
  }
  func.func @transform_4(%arg0: i32) -> (i32, i32) {
    %c0_i32 = arith.constant 0 : i32
    %c0_i32_0 = arith.constant 0 : i32
    %c0_i32_1 = arith.constant 0 : i32
    return %c0_i32, %c0_i32_0 : i32, i32
  }
  func.func @transform_5(%arg0: i32) -> (i32, i32) {
    %c0_i32 = arith.constant 0 : i32
    %c0_i32_0 = arith.constant 0 : i32
    %c0_i32_1 = arith.constant 0 : i32
    return %c0_i32, %c0_i32_0 : i32, i32
  }
  func.func @transform_6(%arg0: i32) -> (i32, i32) {
    %c0_i32 = arith.constant 0 : i32
    %c0_i32_0 = arith.constant 0 : i32
    %c0_i32_1 = arith.constant 0 : i32
    return %c0_i32, %c0_i32_0 : i32, i32
  }
  func.func @transform_7(%arg0: i32) -> (i32, i32) {
    %c0_i32 = arith.constant 0 : i32
    %c0_i32_0 = arith.constant 0 : i32
    %c0_i32_1 = arith.constant 0 : i32
    return %c0_i32, %c0_i32_0 : i32, i32
  }
  func.func @transform_8(%arg0: i32) -> (i32, i32, i32) {
    %c0_i32 = arith.constant 0 : i32
    %c0_i32_0 = arith.constant 0 : i32
    %c0_i32_1 = arith.constant 0 : i32
    return %arg0, %c0_i32, %c0_i32_0 : i32, i32, i32
  }
}

module attributes {stable_mosaic.version = 11 : i64} {
  func.func @ffn_kernel(%arg0: i32, %arg1: memref<1x16x128xf32, #tpu.memory_space<vmem>>, %arg2: memref<16x1xf32, #tpu.memory_space<vmem>>, %arg3: memref<16x1xf32, #tpu.memory_space<vmem>>, %arg4: memref<32x16xf32, #tpu.memory_space<vmem>>, %arg5: memref<16x32xf32, #tpu.memory_space<vmem>>, %arg6: memref<1x16x128xf32, #tpu.memory_space<vmem>>) attributes {dimension_semantics = [#tpu.dimension_semantics<parallel>], iteration_bounds = array<i64: 2>, scalar_prefetch = 0 : i64, scratch_operands = 0 : i64, tpu.core_type = #tpu.core_type<tc>, window_params = [{transform_indices = @transform_0, window_bounds = array<i64: 1, 16, 128>}, {pipeline_mode = #tpu.pipeline_mode<synchronous>, transform_indices = @transform_1, window_bounds = array<i64: 16, 1>}, {pipeline_mode = #tpu.pipeline_mode<synchronous>, transform_indices = @transform_2, window_bounds = array<i64: 16, 1>}, {pipeline_mode = #tpu.pipeline_mode<synchronous>, transform_indices = @transform_3, window_bounds = array<i64: 32, 16>}, {pipeline_mode = #tpu.pipeline_mode<synchronous>, transform_indices = @transform_4, window_bounds = array<i64: 16, 32>}, {transform_indices = @transform_5, window_bounds = array<i64: 1, 16, 128>}]} {
    %c0 = arith.constant 0 : index
    %c0_0 = arith.constant 0 : index
    %c0_1 = arith.constant 0 : index
    %0 = vector.load %arg1[%c0, %c0_0, %c0_1] : memref<1x16x128xf32, #tpu.memory_space<vmem>>, vector<1x16x128xf32>
    %1 = vector.shape_cast %0 : vector<1x16x128xf32> to vector<16x128xf32>
    %c0_2 = arith.constant 0 : index
    %c0_3 = arith.constant 0 : index
    %2 = vector.load %arg2[%c0_2, %c0_3] : memref<16x1xf32, #tpu.memory_space<vmem>>, vector<16x1xf32>
    %3 = vector.broadcast %2 : vector<16x1xf32> to vector<16x128xf32>
    %4 = arith.mulf %1, %3 : vector<16x128xf32>
    %c0_4 = arith.constant 0 : index
    %c0_5 = arith.constant 0 : index
    %5 = vector.load %arg3[%c0_4, %c0_5] : memref<16x1xf32, #tpu.memory_space<vmem>>, vector<16x1xf32>
    %6 = vector.broadcast %5 : vector<16x1xf32> to vector<16x128xf32>
    %7 = arith.addf %4, %6 : vector<16x128xf32>
    %c0_6 = arith.constant 0 : index
    %c0_7 = arith.constant 0 : index
    %8 = vector.load %arg4[%c0_6, %c0_7] : memref<32x16xf32, #tpu.memory_space<vmem>>, vector<32x16xf32>
    %cst = arith.constant dense<0.000000e+00> : vector<32x128xf32>
    %9 = tpu.matmul %8, %7, %cst {dimension_numbers = #tpu.dot_dimension_numbers<[1], [0], [0], [1], [0, 0, 1, 1], [], []>} : vector<32x16xf32>, vector<16x128xf32>, vector<32x128xf32> -> vector<32x128xf32>
    %cst_8 = arith.constant 0.000000e+00 : f32
    %10 = vector.broadcast %cst_8 : f32 to vector<32x128xf32>
    %11 = arith.maximumf %9, %10 : vector<32x128xf32>
    %c0_9 = arith.constant 0 : index
    %c0_10 = arith.constant 0 : index
    %12 = vector.load %arg5[%c0_9, %c0_10] : memref<16x32xf32, #tpu.memory_space<vmem>>, vector<16x32xf32>
    %cst_11 = arith.constant dense<0.000000e+00> : vector<16x128xf32>
    %13 = tpu.matmul %12, %11, %cst_11 {dimension_numbers = #tpu.dot_dimension_numbers<[1], [0], [0], [1], [0, 0, 1, 1], [], []>} : vector<16x32xf32>, vector<32x128xf32>, vector<16x128xf32> -> vector<16x128xf32>
    %14 = arith.addf %1, %13 : vector<16x128xf32>
    %c0_12 = arith.constant 0 : index
    %c0_13 = arith.constant 0 : index
    %c0_14 = arith.constant 0 : index
    %15 = vector.load %arg6[%c0_12, %c0_13, %c0_14] : memref<1x16x128xf32, #tpu.memory_space<vmem>>, vector<1x16x128xf32>
    %16 = vector.shape_cast %15 : vector<1x16x128xf32> to vector<16x128xf32>
    %17 = vector.shape_cast %14 : vector<16x128xf32> to vector<1x16x128xf32>
    tpu.vector_store %arg6[%c0_12, %c0_13, %c0_14], %17 {strides = array<i32>} : memref<1x16x128xf32, #tpu.memory_space<vmem>>, vector<1x16x128xf32>,
    return
  }
  func.func @transform_0(%arg0: i32) -> (i32, i32, i32) {
    %c0_i32 = arith.constant 0 : i32
    %c0_i32_0 = arith.constant 0 : i32
    %c0_i32_1 = arith.constant 0 : i32
    return %arg0, %c0_i32, %c0_i32_0 : i32, i32, i32
  }
  func.func @transform_1(%arg0: i32) -> (i32, i32) {
    %c0_i32 = arith.constant 0 : i32
    %c0_i32_0 = arith.constant 0 : i32
    %c0_i32_1 = arith.constant 0 : i32
    return %c0_i32, %c0_i32_0 : i32, i32
  }
  func.func @transform_2(%arg0: i32) -> (i32, i32) {
    %c0_i32 = arith.constant 0 : i32
    %c0_i32_0 = arith.constant 0 : i32
    %c0_i32_1 = arith.constant 0 : i32
    return %c0_i32, %c0_i32_0 : i32, i32
  }
  func.func @transform_3(%arg0: i32) -> (i32, i32) {
    %c0_i32 = arith.constant 0 : i32
    %c0_i32_0 = arith.constant 0 : i32
    %c0_i32_1 = arith.constant 0 : i32
    return %c0_i32, %c0_i32_0 : i32, i32
  }
  func.func @transform_4(%arg0: i32) -> (i32, i32) {
    %c0_i32 = arith.constant 0 : i32
    %c0_i32_0 = arith.constant 0 : i32
    %c0_i32_1 = arith.constant 0 : i32
    return %c0_i32, %c0_i32_0 : i32, i32
  }
  func.func @transform_5(%arg0: i32) -> (i32, i32, i32) {
    %c0_i32 = arith.constant 0 : i32
    %c0_i32_0 = arith.constant 0 : i32
    %c0_i32_1 = arith.constant 0 : i32
    return %arg0, %c0_i32, %c0_i32_0 : i32, i32, i32
  }
}

</mosaic_0001>

<llo_original>
// kernel: transformer_block.3
$region0: #{transformer_block.3}
  #allocation0 [shape = 'u32[]', space=smem, size = 0x4, offset = 0x4, fixed_abs, tag = 'smem constant byte address 0x4 - core index']
  #allocation1 [shape = 'u32[72,128]{1,0:T(1,128)}', space=vmem, size = 0x9000, scoped, tag = 'internal scratch']
  %s0 = inlined_call_operand.vmem [shape: f32[2,16,128], index: 0, kind: input, shape index: {}]
  %s1 = inlined_call_operand.vmem [shape: f32[16,1], index: 1, kind: input, shape index: {}]
  %s2 = inlined_call_operand.vmem [shape: f32[16,1], index: 2, kind: input, shape index: {}]
  %s3 = inlined_call_operand.vmem [shape: f32[32,16], index: 3, kind: input, shape index: {}]
  %s4 = inlined_call_operand.vmem [shape: f32[16,32], index: 4, kind: input, shape index: {}]
  %s5 = inlined_call_operand.hbm [shape: f32[2,16,128], index: 5, kind: output, shape index: {}]
  %s6 = sld [smem:[#allocation0]]
  $region53: #{transformer_block.3} parent=0
    _
  %s8 = ssub.s32 1, %s6
  %s9 = scalar_select 0, %s8, %s6
  $region1: #{transformer_block.3} parent=0
    #allocation2 [shape = 'u8[16384]{0}', space=vmem, size = 0x4000, scoped, tag = 'output window, operand 0']
    #allocation3 [shape = 's32[2]{0}', space=sflag, size = 0x8, scoped, tag = 'scoped memory for transformer_block.3']
    %10 = vsyncpa [#allocation3], 0
    %s11 = scalar_lea.sflag [#allocation3], 1
    %12 = vsyncpa %s11, 0
    loop: start=0, step=1, limit=4
    $region2: #{transformer_block.3} parent=1 // loop_pre_header
      _
    $region3: #{transformer_block.3} parent=1 // loop_header
      %s14 = sphi 0, %s18
      %p15 = scmp.ge.s32.totalorder %s14, 4
      %s24 = sphi 0, %s26
      %s27 = sphi 0, %s24
      %s28 = sphi 0, %s27
      %s44 = sphi 0, %s28
      %s48 = sphi 0, %s48
      %s50 = sphi 0, %s48
      %s51 = sphi 0, %s50
      %s65 = sphi 0, %s51
      %s69 = sphi 0, %s69
      %s71 = sphi 0, %s69
      %s72 = sphi 0, %s71
      %s86 = sphi 0, %s72
      %s90 = sphi 0, %s90
      %s92 = sphi 0, %s90
      %s93 = sphi 0, %s92
      %s107 = sphi 0, %s93
      %s111 = sphi 0, %s111
      %s113 = sphi 0, %s111
      %s114 = sphi 0, %s113
      %s128 = sphi 0, %s114
      %s134 = sphi 0, %s136
      %s137 = sphi 0, %s134
      %s138 = sphi 0, %s137
      %s154 = sphi 0, %s138
    $region4: #{transformer_block.3} parent=1 // loop_header_branch
      %17 = sbr.rel (%p15) target = $region8
    $region5: #{transformer_block.3} parent=1 // loop_body
      %s19 = ssub.s32 %s14, 1
      %s20 = ssub.s32 %s14, 2
      %s21 = sadd.s32 %s14, 1
      %s22 = ssub.s32 %s14, %s21
      %p23 = scmp.eq.s32.totalorder %s22, 0
      %s25 = sadd.s32 %s24, 1
      %s26 = scalar_select %p23, %s24, %s25
      %p29 = pneg %p23
      %p30 = scmp.eq.s32.totalorder %s14, 1
      %p31 = por %p29, %p30
      %p32 = scmp.ne.s32.totalorder %s24, %s27
      %p33 = scmp.eq.s32.totalorder %s14, 0
      %p34 = por %p32, %p33
      %p35 = scmp.ne.s32.totalorder %s24, %s27
      %p36 = scmp.eq.s32.totalorder %s19, 1
      %p37 = por %p35, %p36
      %p38 = scmp.ne.s32.totalorder %s27, %s28
      %p39 = scmp.eq.s32.totalorder %s19, 0
      %p40 = por %p38, %p39
      %p41 = scmp.ne.s32.totalorder %s27, %s28
      %p42 = scmp.eq.s32.totalorder %s20, 1
      %p43 = por %p41, %p42
      %p45 = scmp.ne.s32.totalorder %s28, %s44
      %p46 = scmp.eq.s32.totalorder %s20, 0
      %p47 = por %p45, %p46
      %s49 = sadd.s32 %s48, 1
      %p52 = scmp.eq.s32.totalorder %s14, 1
      %p53 = scmp.ne.s32.totalorder %s48, %s50
      %p54 = scmp.eq.s32.totalorder %s14, 0
      %p55 = por %p53, %p54
      %p56 = scmp.ne.s32.totalorder %s48, %s50
      %p57 = scmp.eq.s32.totalorder %s19, 1
      %p58 = por %p56, %p57
      %p59 = scmp.ne.s32.totalorder %s50, %s51
      %p60 = scmp.eq.s32.totalorder %s19, 0
      %p61 = por %p59, %p60
      %p62 = scmp.ne.s32.totalorder %s50, %s51
      %p63 = scmp.eq.s32.totalorder %s20, 1
      %p64 = por %p62, %p63
      %p66 = scmp.ne.s32.totalorder %s51, %s65
      %p67 = scmp.eq.s32.totalorder %s20, 0
      %p68 = por %p66, %p67
      %s70 = sadd.s32 %s69, 1
      %p73 = scmp.eq.s32.totalorder %s14, 1
      %p74 = scmp.ne.s32.totalorder %s69, %s71
      %p75 = scmp.eq.s32.totalorder %s14, 0
      %p76 = por %p74, %p75
      %p77 = scmp.ne.s32.totalorder %s69, %s71
      %p78 = scmp.eq.s32.totalorder %s19, 1
      %p79 = por %p77, %p78
      %p80 = scmp.ne.s32.totalorder %s71, %s72
      %p81 = scmp.eq.s32.totalorder %s19, 0
      %p82 = por %p80, %p81
      %p83 = scmp.ne.s32.totalorder %s71, %s72
      %p84 = scmp.eq.s32.totalorder %s20, 1
      %p85 = por %p83, %p84
      %p87 = scmp.ne.s32.totalorder %s72, %s86
      %p88 = scmp.eq.s32.totalorder %s20, 0
      %p89 = por %p87, %p88
      %s91 = sadd.s32 %s90, 1
      %p94 = scmp.eq.s32.totalorder %s14, 1
      %p95 = scmp.ne.s32.totalorder %s90, %s92
      %p96 = scmp.eq.s32.totalorder %s14, 0
      %p97 = por %p95, %p96
      %p98 = scmp.ne.s32.totalorder %s90, %s92
      %p99 = scmp.eq.s32.totalorder %s19, 1
      %p100 = por %p98, %p99
      %p101 = scmp.ne.s32.totalorder %s92, %s93
      %p102 = scmp.eq.s32.totalorder %s19, 0
      %p103 = por %p101, %p102
      %p104 = scmp.ne.s32.totalorder %s92, %s93
      %p105 = scmp.eq.s32.totalorder %s20, 1
      %p106 = por %p104, %p105
      %p108 = scmp.ne.s32.totalorder %s93, %s107
      %p109 = scmp.eq.s32.totalorder %s20, 0
      %p110 = por %p108, %p109
      %s112 = sadd.s32 %s111, 1
      %p115 = scmp.eq.s32.totalorder %s14, 1
      %p116 = scmp.ne.s32.totalorder %s111, %s113
      %p117 = scmp.eq.s32.totalorder %s14, 0
      %p118 = por %p116, %p117
      %p119 = scmp.ne.s32.totalorder %s111, %s113
      %p120 = scmp.eq.s32.totalorder %s19, 1
      %p121 = por %p119, %p120
      %p122 = scmp.ne.s32.totalorder %s113, %s114
      %p123 = scmp.eq.s32.totalorder %s19, 0
      %p124 = por %p122, %p123
      %p125 = scmp.ne.s32.totalorder %s113, %s114
      %p126 = scmp.eq.s32.totalorder %s20, 1
      %p127 = por %p125, %p126
      %p129 = scmp.ne.s32.totalorder %s114, %s128
      %p130 = scmp.eq.s32.totalorder %s20, 0
      %p131 = por %p129, %p130
      %s132 = ssub.s32 %s14, %s21
      %p133 = scmp.eq.s32.totalorder %s132, 0
      %s135 = sadd.s32 %s134, 1
      %s136 = scalar_select %p133, %s134, %s135
      %p139 = pneg %p133
      %p140 = scmp.eq.s32.totalorder %s14, 1
      %p141 = por %p139, %p140
      %p142 = scmp.ne.s32.totalorder %s134, %s137
      %p143 = scmp.eq.s32.totalorder %s14, 0
      %p144 = por %p142, %p143
      %p145 = scmp.ne.s32.totalorder %s134, %s137
      %p146 = scmp.eq.s32.totalorder %s19, 1
      %p147 = por %p145, %p146
      %p148 = scmp.ne.s32.totalorder %s137, %s138
      %p149 = scmp.eq.s32.totalorder %s19, 0
      %p150 = por %p148, %p149
      %p151 = scmp.ne.s32.totalorder %s137, %s138
      %p152 = scmp.eq.s32.totalorder %s20, 1
      %p153 = por %p151, %p152
      %p155 = scmp.ne.s32.totalorder %s138, %s154
      %p156 = scmp.eq.s32.totalorder %s20, 0
      %p157 = por %p155, %p156
      %p158 = scmp.le.s32.totalorder 1, %s14
      %p159 = scmp.lt.s32.totalorder %s14, 3
      %p160 = pnand %p158, %p159
      %p161 = pneg %p160
      // Predicated region
      $region9: #{transformer_block.3} parent=5 // pred_check
        _
      $region10: #{transformer_block.3} parent=5 // pred_check_branch
        %163 = sbr.rel (%p160) target = $region12
      $region11: #{transformer_block.3} parent=5 // pred_region
        %s164 = ssub.s32 %s14, 1
        // Predicated region
        $region13: #{transformer_block.3} parent=11 // pred_check
          %p165 = pneg %p61
        $region14: #{transformer_block.3} parent=11 // pred_check_branch
          %167 = sbr.rel (%p165) target = $region16
        $region15: #{transformer_block.3} parent=11 // pred_region
          _
        $region16: #{transformer_block.3} parent=11 // pred_fallthru
          _
        // Predicated region
        $region17: #{transformer_block.3} parent=11 // pred_check
          %p168 = pneg %p82
        $region18: #{transformer_block.3} parent=11 // pred_check_branch
          %170 = sbr.rel (%p168) target = $region20
        $region19: #{transformer_block.3} parent=11 // pred_region
          _
        $region20: #{transformer_block.3} parent=11 // pred_fallthru
          _
        // Predicated region
        $region21: #{transformer_block.3} parent=11 // pred_check
          %p171 = pneg %p103
        $region22: #{transformer_block.3} parent=11 // pred_check_branch
          %173 = sbr.rel (%p171) target = $region24
        $region23: #{transformer_block.3} parent=11 // pred_region
          _
        $region24: #{transformer_block.3} parent=11 // pred_fallthru
          _
        // Predicated region
        $region25: #{transformer_block.3} parent=11 // pred_check
          %p174 = pneg %p124
        $region26: #{transformer_block.3} parent=11 // pred_check_branch
          %176 = sbr.rel (%p174) target = $region28
        $region27: #{transformer_block.3} parent=11 // pred_region
          _
        $region28: #{transformer_block.3} parent=11 // pred_fallthru
          _
      $region12: #{transformer_block.3} parent=5 // pred_fallthru
        _
      %p177 = scmp.lt.s32.totalorder %s14, 2
      // Predicated region
      $region29: #{transformer_block.3} parent=5 // pred_check
        %p178 = pneg %p177
      $region30: #{transformer_block.3} parent=5 // pred_check_branch
        %180 = sbr.rel (%p178) target = $region32
      $region31: #{transformer_block.3} parent=5 // pred_region
        // Predicated region
        $region33: #{transformer_block.3} parent=31 // pred_check
          %p181 = pneg %p34
        $region34: #{transformer_block.3} parent=31 // pred_check_branch
          %183 = sbr.rel (%p181) target = $region36
        $region35: #{transformer_block.3} parent=31 // pred_region
          %p184 = scmp.lt.s32.totalorder %s14, 1
          %s185 = scalar_select %p184, %s14, 1
          %s186 = smul.addr %s185, 2
          %s187 = smul.addr %s186, 8
          %s188 = scalar_lea.vmem %s0, %s187
        $region36: #{transformer_block.3} parent=31 // pred_fallthru
          _
      $region32: #{transformer_block.3} parent=5 // pred_fallthru
        _
      %p189 = scmp.le.s32.totalorder 1, %s14
      %p190 = scmp.lt.s32.totalorder %s14, 3
      %p191 = pnand %p189, %p190
      %p192 = pneg %p191
      // Predicated region
      $region37: #{transformer_block.3} parent=5 // pred_check
        _
      $region38: #{transformer_block.3} parent=5 // pred_check_branch
        %194 = sbr.rel (%p191) target = $region40
      $region39: #{transformer_block.3} parent=5 // pred_region
        %s195 = ssub.s32 %s14, 1
        %p196 = scmp.lt.s32.totalorder %s19, 1
        %s197 = scalar_select %p196, %s19, 1
        %s198 = smul.addr %s197, 2
        %s199 = smul.addr %s198, 8
        %s200 = scalar_lea.vmem %s0, %s199
        %p201 = pneg %p40
        %p202 = pneg %p37
        %p203 = pneg %p61
        %p204 = pneg %p58
        %p205 = pneg %p82
        %p206 = pneg %p79
        %p207 = pneg %p103
        %p208 = pneg %p100
        %p209 = pneg %p124
        %p210 = pneg %p121
        %p211 = pneg %p150
        %p212 = pneg %p147
        %s213 = sand.u32 %s137, 1
        %s214 = scalar_lea.sflag [#allocation3], %s213
        %s215 = sand.u32 %s137, 1
        %s216 = smul.addr %s215, 16
        %s217 = scalar_lea.vmem [#allocation2], %s216
        %p218 = scmp.lt.s32.totalorder %s19, 1
        %s219 = scalar_select %p218, %s19, 1
        %s220 = smul.addr %s219, 2
        %s221 = smul.addr %s220, 8
        %s222 = scalar_lea.vmem %s0, %s221
        %v223 = vld [vmem:[%s222] sm:$0xff]
        %v224 = vld [vmem:[%s222 + $0x8] sm:$0xff]
        %v225 = vld [vmem:[%s1] sm:$0xff]
        %v226 = vld [vmem:[%s1 + $0x8] sm:$0xff]
        %228 = vset.pattern.permute.xlu0 0
        %229 = vperm.xlu0 %228, %v225
        %v230 = vpop.permute.xlu0 %229
        %233 = vset.pattern.permute.xlu0 0
        %234 = vperm.xlu0 %233, %v226
        %v235 = vpop.permute.xlu0 %234
        %v237 = vmul.f32 %v223, %v230
        %v238 = vmul.f32 %v224, %v235
        %v239 = vld [vmem:[%s2] sm:$0xff]
        %v240 = vld [vmem:[%s2 + $0x8] sm:$0xff]
        %242 = vset.pattern.permute.xlu0 0
        %243 = vperm.xlu0 %242, %v239
        %v244 = vpop.permute.xlu0 %243
        %247 = vset.pattern.permute.xlu0 0
        %248 = vperm.xlu0 %247, %v240
        %v249 = vpop.permute.xlu0 %248
        %v251 = vadd.f32 %v237, %v244
        %v252 = vadd.f32 %v238, %v249
        %v253 = vld [vmem:[%s3] sm:$0xff]
        %v254 = vld [vmem:[%s3 + $0x8] sm:$0xff]
        %v255 = vld [vmem:[%s3 + $0x10] sm:$0xff]
        %v256 = vld [vmem:[%s3 + $0x18] sm:$0xff]
        %vm257 = vcmask 130048
        %v259 = vsel %vm257, %v253, 0
        %v262 = vsel %vm257, %v254, 0
        %v265 = vsel %vm257, %v255, 0
        %v268 = vsel %vm257, %v256, 0
        %270 = vmatpush.msra.mxu0 0.0
        %271 = vmatpush.msra.mxu0 0.0
        %272 = vmatpush.msra.mxu0 0.0
        %273 = vmatpush.msra.mxu0 0.0
        %274 = vmatpush.msra.mxu0 0.0
        %275 = vmatpush.msra.mxu0 0.0
        %276 = vmatpush.msra.mxu0 0.0
        %277 = vmatpush.msra.mxu0 0.0
        %278 = vmatpush.msra.mxu0 0.0
        %279 = vmatpush.msra.mxu0 0.0
        %280 = vmatpush.msra.mxu0 0.0
        %281 = vmatpush.msra.mxu0 0.0
        %282 = vmatpush.msra.mxu0 0.0
        %283 = vmatpush.msra.mxu0 0.0
        %284 = vmatpush.msra.mxu0 %v252
        %285 = vmatpush.msra.mxu0 %v251
        %286 = vmatmul.f32.gmra.mxu0 %v259
        %v287 = vpop.f32.mrf.mxu0
        %v288 = vadd.f32 0.0, %v287
        %289 = vmatmul.f32.gmra.mxu0 %v262
        %v290 = vpop.f32.mrf.mxu0
        %v291 = vadd.f32 0.0, %v290
        %292 = vmatmul.f32.gmra.mxu0 %v265
        %v293 = vpop.f32.mrf.mxu0
        %v294 = vadd.f32 0.0, %v293
        %295 = vmatmul.f32.gmra.mxu0 %v268
        %v296 = vpop.f32.mrf.mxu0
        %v297 = vadd.f32 0.0, %v296
        %298 = vdwg.mxu0
        %v299 = vmax.f32 %v288, 0.0
        %v300 = vmax.f32 %v291, 0.0
        %v301 = vmax.f32 %v294, 0.0
        %v302 = vmax.f32 %v297, 0.0
        %v303 = vld [vmem:[%s4] sm:$0xff]
        %v304 = vld [vmem:[%s4 + $0x8] sm:$0xff]
        %vm305 = vcmask 261120
        %v307 = vsel %vm305, %v303, 0
        %v310 = vsel %vm305, %v304, 0
        %312 = vmatpush.msra.mxu0 0.0
        %313 = vmatpush.msra.mxu0 0.0
        %314 = vmatpush.msra.mxu0 0.0
        %315 = vmatpush.msra.mxu0 0.0
        %316 = vmatpush.msra.mxu0 0.0
        %317 = vmatpush.msra.mxu0 0.0
        %318 = vmatpush.msra.mxu0 0.0
        %319 = vmatpush.msra.mxu0 0.0
        %320 = vmatpush.msra.mxu0 0.0
        %321 = vmatpush.msra.mxu0 0.0
        %322 = vmatpush.msra.mxu0 0.0
        %323 = vmatpush.msra.mxu0 0.0
        %324 = vmatpush.msra.mxu0 %v302
        %325 = vmatpush.msra.mxu0 %v301
        %326 = vmatpush.msra.mxu0 %v300
        %327 = vmatpush.msra.mxu0 %v299
        %328 = vmatmul.f32.gmra.mxu0 %v307
        %v329 = vpop.f32.mrf.mxu0
        %v330 = vadd.f32 0.0, %v329
        %331 = vmatmul.f32.gmra.mxu0 %v310
        %v332 = vpop.f32.mrf.mxu0
        %v333 = vadd.f32 0.0, %v332
        %334 = vdwg.mxu0
        %v335 = vadd.f32 %v223, %v330
        %v336 = vadd.f32 %v224, %v333
        %337 = vst [vmem:[%s217] sm:$0xff] %v335
        %338 = vst [vmem:[%s217 + $0x8] sm:$0xff] %v336
        %s339 = sand.u32 %s137, 1
        %s340 = scalar_lea.sflag [#allocation3], %s339
        %s341 = sand.u32 %s137, 1
        %s342 = smul.addr %s341, 16
        %s343 = scalar_lea.vmem [#allocation2], %s342
        // Predicated region
        $region41: #{transformer_block.3} parent=39 // pred_check
          %p344 = pneg %p147
        $region42: #{transformer_block.3} parent=39 // pred_check_branch
          %346 = sbr.rel (%p344) target = $region44
        $region43: #{transformer_block.3} parent=39 // pred_region
          %348 = vsyncadd %s340, 0
          %s349 = smul.addr %s19, 2
          %s350 = smul.addr %s349, 8
          %s351 = scalar_lea.hbm %s5, %s350
          %s352 = sshll.u32 %s343, 4
          %s353 = int_to_ptr.vmem [resolvable:$true] %s352
          %s354 = sshll.u32 %s351, 4
          %s355 = int_to_ptr.hbm [resolvable:$true] %s354
          %360 = dma.vmem_to_hbm [thread:$0]  %s353, 256, %s355, %s340, 128, 128, 8
        $region44: #{transformer_block.3} parent=39 // pred_fallthru
          _
      $region40: #{transformer_block.3} parent=5 // pred_fallthru
        _
      %p361 = scmp.le.s32.totalorder 2, %s14
      // Predicated region
      $region45: #{transformer_block.3} parent=5 // pred_check
        %p362 = pneg %p361
      $region46: #{transformer_block.3} parent=5 // pred_check_branch
        %364 = sbr.rel (%p362) target = $region48
      $region47: #{transformer_block.3} parent=5 // pred_region
        %s365 = ssub.s32 %s14, 2
        // Predicated region
        $region49: #{transformer_block.3} parent=47 // pred_check
          %p366 = pneg %p153
        $region50: #{transformer_block.3} parent=47 // pred_check_branch
          %368 = sbr.rel (%p366) target = $region52
        $region51: #{transformer_block.3} parent=47 // pred_region
          %s369 = sand.u32 %s138, 1
          %s370 = scalar_lea.sflag [#allocation3], %s369
          %s371 = sand.u32 %s138, 1
          %s372 = smul.addr %s371, 16
          %s373 = scalar_lea.vmem [#allocation2], %s372
          %375 = dma.done %s370, 256
        $region52: #{transformer_block.3} parent=47 // pred_fallthru
          _
      $region48: #{transformer_block.3} parent=5 // pred_fallthru
        _
    $region6: #{transformer_block.3} parent=1 // loop_footer
      %s18 = sadd.s32 1, %s14
    $region7: #{transformer_block.3} parent=1 // loop_footer_branch
      %13 = sbr.rel target = $region3
    $region8: #{transformer_block.3} parent=1 // loop_exit
      _
    %376 = vsyncpa [#allocation3], 1
    %s377 = scalar_lea.sflag [#allocation3], 1
    %378 = vsyncpa %s377, 1

// kernel: transformer_block.2
$region0: #{transformer_block.2}
  #allocation0 [shape = 'u32[]', space=smem, size = 0x4, offset = 0x4, fixed_abs, tag = 'smem constant byte address 0x4 - core index']
  #allocation1 [shape = 'u32[72,128]{1,0:T(1,128)}', space=vmem, size = 0x9000, scoped, tag = 'internal scratch']
  #allocation2 [shape = 'f32[64,128]{1,0:T(8,128)}', space=vmem, size = 0x8000, scoped, tag = 'scratch operand']
  %s0 = inlined_call_operand.vmem [shape: f32[2,16,128], index: 0, kind: input, shape index: {}]
  %s1 = inlined_call_operand.vmem [shape: f32[16,1], index: 1, kind: input, shape index: {}]
  %s2 = inlined_call_operand.vmem [shape: f32[16,1], index: 2, kind: input, shape index: {}]
  %s3 = inlined_call_operand.vmem [shape: f32[64,16], index: 3, kind: input, shape index: {}]
  %s4 = inlined_call_operand.vmem [shape: f32[64,16], index: 4, kind: input, shape index: {}]
  %s5 = inlined_call_operand.vmem [shape: f32[64,16], index: 5, kind: input, shape index: {}]
  %s6 = inlined_call_operand.vmem [shape: f32[16,64], index: 6, kind: input, shape index: {}]
  %s7 = inlined_call_operand.vmem [shape: f32[16,1], index: 7, kind: input, shape index: {}]
  %s8 = inlined_call_operand.vmem [shape: f32[2,16,128], index: 8, kind: output, shape index: {}]
  %s9 = sld [smem:[#allocation0]]
  $region65: #{transformer_block.2} parent=0
    _
  %s11 = ssub.s32 1, %s9
  %s12 = scalar_select 0, %s11, %s9
  loop: start=0, step=1, limit=4
  $region2: #{transformer_block.2} parent=0 // loop_pre_header
    _
  $region3: #{transformer_block.2} parent=0 // loop_header
    %s14 = sphi 0, %s18
    %p15 = scmp.ge.s32.totalorder %s14, 4
    %s24 = sphi 0, %s26
    %s27 = sphi 0, %s24
    %s28 = sphi 0, %s27
    %s44 = sphi 0, %s28
    %s48 = sphi 0, %s48
    %s50 = sphi 0, %s48
    %s51 = sphi 0, %s50
    %s65 = sphi 0, %s51
    %s69 = sphi 0, %s69
    %s71 = sphi 0, %s69
    %s72 = sphi 0, %s71
    %s86 = sphi 0, %s72
    %s90 = sphi 0, %s90
    %s92 = sphi 0, %s90
    %s93 = sphi 0, %s92
    %s107 = sphi 0, %s93
    %s111 = sphi 0, %s111
    %s113 = sphi 0, %s111
    %s114 = sphi 0, %s113
    %s128 = sphi 0, %s114
    %s132 = sphi 0, %s132
    %s134 = sphi 0, %s132
    %s135 = sphi 0, %s134
    %s149 = sphi 0, %s135
    %s153 = sphi 0, %s153
    %s155 = sphi 0, %s153
    %s156 = sphi 0, %s155
    %s170 = sphi 0, %s156
    %s174 = sphi 0, %s174
    %s176 = sphi 0, %s174
    %s177 = sphi 0, %s176
    %s191 = sphi 0, %s177
    %s197 = sphi 0, %s199
    %s200 = sphi 0, %s197
    %s201 = sphi 0, %s200
    %s217 = sphi 0, %s201
  $region4: #{transformer_block.2} parent=0 // loop_header_branch
    %17 = sbr.rel (%p15) target = $region8
  $region5: #{transformer_block.2} parent=0 // loop_body
    %s19 = ssub.s32 %s14, 1
    %s20 = ssub.s32 %s14, 2
    %s21 = sadd.s32 %s14, 1
    %s22 = ssub.s32 %s14, %s21
    %p23 = scmp.eq.s32.totalorder %s22, 0
    %s25 = sadd.s32 %s24, 1
    %s26 = scalar_select %p23, %s24, %s25
    %p29 = pneg %p23
    %p30 = scmp.eq.s32.totalorder %s14, 1
    %p31 = por %p29, %p30
    %p32 = scmp.ne.s32.totalorder %s24, %s27
    %p33 = scmp.eq.s32.totalorder %s14, 0
    %p34 = por %p32, %p33
    %p35 = scmp.ne.s32.totalorder %s24, %s27
    %p36 = scmp.eq.s32.totalorder %s19, 1
    %p37 = por %p35, %p36
    %p38 = scmp.ne.s32.totalorder %s27, %s28
    %p39 = scmp.eq.s32.totalorder %s19, 0
    %p40 = por %p38, %p39
    %p41 = scmp.ne.s32.totalorder %s27, %s28
    %p42 = scmp.eq.s32.totalorder %s20, 1
    %p43 = por %p41, %p42
    %p45 = scmp.ne.s32.totalorder %s28, %s44
    %p46 = scmp.eq.s32.totalorder %s20, 0
    %p47 = por %p45, %p46
    %s49 = sadd.s32 %s48, 1
    %p52 = scmp.eq.s32.totalorder %s14, 1
    %p53 = scmp.ne.s32.totalorder %s48, %s50
    %p54 = scmp.eq.s32.totalorder %s14, 0
    %p55 = por %p53, %p54
    %p56 = scmp.ne.s32.totalorder %s48, %s50
    %p57 = scmp.eq.s32.totalorder %s19, 1
    %p58 = por %p56, %p57
    %p59 = scmp.ne.s32.totalorder %s50, %s51
    %p60 = scmp.eq.s32.totalorder %s19, 0
    %p61 = por %p59, %p60
    %p62 = scmp.ne.s32.totalorder %s50, %s51
    %p63 = scmp.eq.s32.totalorder %s20, 1
    %p64 = por %p62, %p63
    %p66 = scmp.ne.s32.totalorder %s51, %s65
    %p67 = scmp.eq.s32.totalorder %s20, 0
    %p68 = por %p66, %p67
    %s70 = sadd.s32 %s69, 1
    %p73 = scmp.eq.s32.totalorder %s14, 1
    %p74 = scmp.ne.s32.totalorder %s69, %s71
    %p75 = scmp.eq.s32.totalorder %s14, 0
    %p76 = por %p74, %p75
    %p77 = scmp.ne.s32.totalorder %s69, %s71
    %p78 = scmp.eq.s32.totalorder %s19, 1
    %p79 = por %p77, %p78
    %p80 = scmp.ne.s32.totalorder %s71, %s72
    %p81 = scmp.eq.s32.totalorder %s19, 0
    %p82 = por %p80, %p81
    %p83 = scmp.ne.s32.totalorder %s71, %s72
    %p84 = scmp.eq.s32.totalorder %s20, 1
    %p85 = por %p83, %p84
    %p87 = scmp.ne.s32.totalorder %s72, %s86
    %p88 = scmp.eq.s32.totalorder %s20, 0
    %p89 = por %p87, %p88
    %s91 = sadd.s32 %s90, 1
    %p94 = scmp.eq.s32.totalorder %s14, 1
    %p95 = scmp.ne.s32.totalorder %s90, %s92
    %p96 = scmp.eq.s32.totalorder %s14, 0
    %p97 = por %p95, %p96
    %p98 = scmp.ne.s32.totalorder %s90, %s92
    %p99 = scmp.eq.s32.totalorder %s19, 1
    %p100 = por %p98, %p99
    %p101 = scmp.ne.s32.totalorder %s92, %s93
    %p102 = scmp.eq.s32.totalorder %s19, 0
    %p103 = por %p101, %p102
    %p104 = scmp.ne.s32.totalorder %s92, %s93
    %p105 = scmp.eq.s32.totalorder %s20, 1
    %p106 = por %p104, %p105
    %p108 = scmp.ne.s32.totalorder %s93, %s107
    %p109 = scmp.eq.s32.totalorder %s20, 0
    %p110 = por %p108, %p109
    %s112 = sadd.s32 %s111, 1
    %p115 = scmp.eq.s32.totalorder %s14, 1
    %p116 = scmp.ne.s32.totalorder %s111, %s113
    %p117 = scmp.eq.s32.totalorder %s14, 0
    %p118 = por %p116, %p117
    %p119 = scmp.ne.s32.totalorder %s111, %s113
    %p120 = scmp.eq.s32.totalorder %s19, 1
    %p121 = por %p119, %p120
    %p122 = scmp.ne.s32.totalorder %s113, %s114
    %p123 = scmp.eq.s32.totalorder %s19, 0
    %p124 = por %p122, %p123
    %p125 = scmp.ne.s32.totalorder %s113, %s114
    %p126 = scmp.eq.s32.totalorder %s20, 1
    %p127 = por %p125, %p126
    %p129 = scmp.ne.s32.totalorder %s114, %s128
    %p130 = scmp.eq.s32.totalorder %s20, 0
    %p131 = por %p129, %p130
    %s133 = sadd.s32 %s132, 1
    %p136 = scmp.eq.s32.totalorder %s14, 1
    %p137 = scmp.ne.s32.totalorder %s132, %s134
    %p138 = scmp.eq.s32.totalorder %s14, 0
    %p139 = por %p137, %p138
    %p140 = scmp.ne.s32.totalorder %s132, %s134
    %p141 = scmp.eq.s32.totalorder %s19, 1
    %p142 = por %p140, %p141
    %p143 = scmp.ne.s32.totalorder %s134, %s135
    %p144 = scmp.eq.s32.totalorder %s19, 0
    %p145 = por %p143, %p144
    %p146 = scmp.ne.s32.totalorder %s134, %s135
    %p147 = scmp.eq.s32.totalorder %s20, 1
    %p148 = por %p146, %p147
    %p150 = scmp.ne.s32.totalorder %s135, %s149
    %p151 = scmp.eq.s32.totalorder %s20, 0
    %p152 = por %p150, %p151
    %s154 = sadd.s32 %s153, 1
    %p157 = scmp.eq.s32.totalorder %s14, 1
    %p158 = scmp.ne.s32.totalorder %s153, %s155
    %p159 = scmp.eq.s32.totalorder %s14, 0
    %p160 = por %p158, %p159
    %p161 = scmp.ne.s32.totalorder %s153, %s155
    %p162 = scmp.eq.s32.totalorder %s19, 1
    %p163 = por %p161, %p162
    %p164 = scmp.ne.s32.totalorder %s155, %s156
    %p165 = scmp.eq.s32.totalorder %s19, 0
    %p166 = por %p164, %p165
    %p167 = scmp.ne.s32.totalorder %s155, %s156
    %p168 = scmp.eq.s32.totalorder %s20, 1
    %p169 = por %p167, %p168
    %p171 = scmp.ne.s32.totalorder %s156, %s170
    %p172 = scmp.eq.s32.totalorder %s20, 0
    %p173 = por %p171, %p172
    %s175 = sadd.s32 %s174, 1
    %p178 = scmp.eq.s32.totalorder %s14, 1
    %p179 = scmp.ne.s32.totalorder %s174, %s176
    %p180 = scmp.eq.s32.totalorder %s14, 0
    %p181 = por %p179, %p180
    %p182 = scmp.ne.s32.totalorder %s174, %s176
    %p183 = scmp.eq.s32.totalorder %s19, 1
    %p184 = por %p182, %p183
    %p185 = scmp.ne.s32.totalorder %s176, %s177
    %p186 = scmp.eq.s32.totalorder %s19, 0
    %p187 = por %p185, %p186
    %p188 = scmp.ne.s32.totalorder %s176, %s177
    %p189 = scmp.eq.s32.totalorder %s20, 1
    %p190 = por %p188, %p189
    %p192 = scmp.ne.s32.totalorder %s177, %s191
    %p193 = scmp.eq.s32.totalorder %s20, 0
    %p194 = por %p192, %p193
    %s195 = ssub.s32 %s14, %s21
    %p196 = scmp.eq.s32.totalorder %s195, 0
    %s198 = sadd.s32 %s197, 1
    %s199 = scalar_select %p196, %s197, %s198
    %p202 = pneg %p196
    %p203 = scmp.eq.s32.totalorder %s14, 1
    %p204 = por %p202, %p203
    %p205 = scmp.ne.s32.totalorder %s197, %s200
    %p206 = scmp.eq.s32.totalorder %s14, 0
    %p207 = por %p205, %p206
    %p208 = scmp.ne.s32.totalorder %s197, %s200
    %p209 = scmp.eq.s32.totalorder %s19, 1
    %p210 = por %p208, %p209
    %p211 = scmp.ne.s32.totalorder %s200, %s201
    %p212 = scmp.eq.s32.totalorder %s19, 0
    %p213 = por %p211, %p212
    %p214 = scmp.ne.s32.totalorder %s200, %s201
    %p215 = scmp.eq.s32.totalorder %s20, 1
    %p216 = por %p214, %p215
    %p218 = scmp.ne.s32.totalorder %s201, %s217
    %p219 = scmp.eq.s32.totalorder %s20, 0
    %p220 = por %p218, %p219
    %p221 = scmp.le.s32.totalorder 1, %s14
    %p222 = scmp.lt.s32.totalorder %s14, 3
    %p223 = pnand %p221, %p222
    %p224 = pneg %p223
    // Predicated region
    $region9: #{transformer_block.2} parent=5 // pred_check
      _
    $region10: #{transformer_block.2} parent=5 // pred_check_branch
      %226 = sbr.rel (%p223) target = $region12
    $region11: #{transformer_block.2} parent=5 // pred_region
      %s227 = ssub.s32 %s14, 1
      // Predicated region
      $region13: #{transformer_block.2} parent=11 // pred_check
        %p228 = pneg %p61
      $region14: #{transformer_block.2} parent=11 // pred_check_branch
        %230 = sbr.rel (%p228) target = $region16
      $region15: #{transformer_block.2} parent=11 // pred_region
        _
      $region16: #{transformer_block.2} parent=11 // pred_fallthru
        _
      // Predicated region
      $region17: #{transformer_block.2} parent=11 // pred_check
        %p231 = pneg %p82
      $region18: #{transformer_block.2} parent=11 // pred_check_branch
        %233 = sbr.rel (%p231) target = $region20
      $region19: #{transformer_block.2} parent=11 // pred_region
        _
      $region20: #{transformer_block.2} parent=11 // pred_fallthru
        _
      // Predicated region
      $region21: #{transformer_block.2} parent=11 // pred_check
        %p234 = pneg %p103
      $region22: #{transformer_block.2} parent=11 // pred_check_branch
        %236 = sbr.rel (%p234) target = $region24
      $region23: #{transformer_block.2} parent=11 // pred_region
        _
      $region24: #{transformer_block.2} parent=11 // pred_fallthru
        _
      // Predicated region
      $region25: #{transformer_block.2} parent=11 // pred_check
        %p237 = pneg %p124
      $region26: #{transformer_block.2} parent=11 // pred_check_branch
        %239 = sbr.rel (%p237) target = $region28
      $region27: #{transformer_block.2} parent=11 // pred_region
        _
      $region28: #{transformer_block.2} parent=11 // pred_fallthru
        _
      // Predicated region
      $region29: #{transformer_block.2} parent=11 // pred_check
        %p240 = pneg %p145
      $region30: #{transformer_block.2} parent=11 // pred_check_branch
        %242 = sbr.rel (%p240) target = $region32
      $region31: #{transformer_block.2} parent=11 // pred_region
        _
      $region32: #{transformer_block.2} parent=11 // pred_fallthru
        _
      // Predicated region
      $region33: #{transformer_block.2} parent=11 // pred_check
        %p243 = pneg %p166
      $region34: #{transformer_block.2} parent=11 // pred_check_branch
        %245 = sbr.rel (%p243) target = $region36
      $region35: #{transformer_block.2} parent=11 // pred_region
        _
      $region36: #{transformer_block.2} parent=11 // pred_fallthru
        _
      // Predicated region
      $region37: #{transformer_block.2} parent=11 // pred_check
        %p246 = pneg %p187
      $region38: #{transformer_block.2} parent=11 // pred_check_branch
        %248 = sbr.rel (%p246) target = $region40
      $region39: #{transformer_block.2} parent=11 // pred_region
        _
      $region40: #{transformer_block.2} parent=11 // pred_fallthru
        _
    $region12: #{transformer_block.2} parent=5 // pred_fallthru
      _
    %p249 = scmp.lt.s32.totalorder %s14, 2
    // Predicated region
    $region41: #{transformer_block.2} parent=5 // pred_check
      %p250 = pneg %p249
    $region42: #{transformer_block.2} parent=5 // pred_check_branch
      %252 = sbr.rel (%p250) target = $region44
    $region43: #{transformer_block.2} parent=5 // pred_region
      // Predicated region
      $region45: #{transformer_block.2} parent=43 // pred_check
        %p253 = pneg %p34
      $region46: #{transformer_block.2} parent=43 // pred_check_branch
        %255 = sbr.rel (%p253) target = $region48
      $region47: #{transformer_block.2} parent=43 // pred_region
        %p256 = scmp.lt.s32.totalorder %s14, 1
        %s257 = scalar_select %p256, %s14, 1
        %s258 = smul.addr %s257, 2
        %s259 = smul.addr %s258, 8
        %s260 = scalar_lea.vmem %s0, %s259
      $region48: #{transformer_block.2} parent=43 // pred_fallthru
        _
    $region44: #{transformer_block.2} parent=5 // pred_fallthru
      _
    %p261 = scmp.le.s32.totalorder 1, %s14
    %p262 = scmp.lt.s32.totalorder %s14, 3
    %p263 = pnand %p261, %p262
    %p264 = pneg %p263
    // Predicated region
    $region49: #{transformer_block.2} parent=5 // pred_check
      _
    $region50: #{transformer_block.2} parent=5 // pred_check_branch
      %266 = sbr.rel (%p263) target = $region52
    $region51: #{transformer_block.2} parent=5 // pred_region
      %s267 = ssub.s32 %s14, 1
      %p268 = scmp.lt.s32.totalorder %s19, 1
      %s269 = scalar_select %p268, %s19, 1
      %s270 = smul.addr %s269, 2
      %s271 = smul.addr %s270, 8
      %s272 = scalar_lea.vmem %s0, %s271
      %p273 = pneg %p40
      %p274 = pneg %p37
      %p275 = pneg %p61
      %p276 = pneg %p58
      %p277 = pneg %p82
      %p278 = pneg %p79
      %p279 = pneg %p103
      %p280 = pneg %p100
      %p281 = pneg %p124
      %p282 = pneg %p121
      %p283 = pneg %p145
      %p284 = pneg %p142
      %p285 = pneg %p166
      %p286 = pneg %p163
      %p287 = pneg %p187
      %p288 = pneg %p184
      %p289 = pneg %p213
      %p290 = pneg %p210
      %p291 = scmp.lt.s32.totalorder %s19, 1
      %s292 = scalar_select %p291, %s19, 1
      %s293 = smul.addr %s292, 2
      %s294 = smul.addr %s293, 8
      %s295 = scalar_lea.vmem %s8, %s294
      %p296 = scmp.lt.s32.totalorder %s19, 1
      %s297 = scalar_select %p296, %s19, 1
      %s298 = smul.addr %s297, 2
      %s299 = smul.addr %s298, 8
      %s300 = scalar_lea.vmem %s0, %s299
      %p301 = scmp.lt.s32.totalorder %s19, 1
      %s302 = scalar_select %p301, %s19, 1
      %s303 = smul.addr %s302, 2
      %s304 = smul.addr %s303, 8
      %s305 = scalar_lea.vmem %s8, %s304
      %v306 = vld [vmem:[%s300] sm:$0xff]
      %v307 = vld [vmem:[%s300 + $0x8] sm:$0xff]
      %v308 = vld [vmem:[%s1] sm:$0xff]
      %v309 = vld [vmem:[%s1 + $0x8] sm:$0xff]
      %311 = vset.pattern.permute.xlu0 0
      %312 = vperm.xlu0 %311, %v308
      %v313 = vpop.permute.xlu0 %312
      %316 = vset.pattern.permute.xlu0 0
      %317 = vperm.xlu0 %316, %v309
      %v318 = vpop.permute.xlu0 %317
      %v320 = vmul.f32 %v306, %v313
      %v321 = vmul.f32 %v307, %v318
      %v322 = vld [vmem:[%s2] sm:$0xff]
      %v323 = vld [vmem:[%s2 + $0x8] sm:$0xff]
      %325 = vset.pattern.permute.xlu0 0
      %326 = vperm.xlu0 %325, %v322
      %v327 = vpop.permute.xlu0 %326
      %330 = vset.pattern.permute.xlu0 0
      %331 = vperm.xlu0 %330, %v323
      %v332 = vpop.permute.xlu0 %331
      %v334 = vadd.f32 %v320, %v327
      %v335 = vadd.f32 %v321, %v332
      %v336 = vld [vmem:[%s3] sm:$0xff]
      %v337 = vld [vmem:[%s3 + $0x8] sm:$0xff]
      %v338 = vld [vmem:[%s3 + $0x10] sm:$0xff]
      %v339 = vld [vmem:[%s3 + $0x18] sm:$0xff]
      %v340 = vld [vmem:[%s3 + $0x20] sm:$0xff]
      %v341 = vld [vmem:[%s3 + $0x28] sm:$0xff]
      %v342 = vld [vmem:[%s3 + $0x30] sm:$0xff]
      %v343 = vld [vmem:[%s3 + $0x38] sm:$0xff]
      %vm344 = vcmask 130048
      %v346 = vsel %vm344, %v336, 0
      %v349 = vsel %vm344, %v337, 0
      %v352 = vsel %vm344, %v338, 0
      %v355 = vsel %vm344, %v339, 0
      %v358 = vsel %vm344, %v340, 0
      %v361 = vsel %vm344, %v341, 0
      %v364 = vsel %vm344, %v342, 0
      %v367 = vsel %vm344, %v343, 0
      %369 = vmatpush.msra.mxu0 0.0
      %370 = vmatpush.msra.mxu0 0.0
      %371 = vmatpush.msra.mxu0 0.0
      %372 = vmatpush.msra.mxu0 0.0
      %373 = vmatpush.msra.mxu0 0.0
      %374 = vmatpush.msra.mxu0 0.0
      %375 = vmatpush.msra.mxu0 0.0
      %376 = vmatpush.msra.mxu0 0.0
      %377 = vmatpush.msra.mxu0 0.0
      %378 = vmatpush.msra.mxu0 0.0
      %379 = vmatpush.msra.mxu0 0.0
      %380 = vmatpush.msra.mxu0 0.0
      %381 = vmatpush.msra.mxu0 0.0
      %382 = vmatpush.msra.mxu0 0.0
      %383 = vmatpush.msra.mxu0 %v335
      %384 = vmatpush.msra.mxu0 %v334
      %385 = vmatmul.f32.gmra.mxu0 %v346
      %v386 = vpop.f32.mrf.mxu0
      %v387 = vadd.f32 0.0, %v386
      %388 = vmatmul.f32.gmra.mxu0 %v349
      %v389 = vpop.f32.mrf.mxu0
      %v390 = vadd.f32 0.0, %v389
      %391 = vmatmul.f32.gmra.mxu0 %v352
      %v392 = vpop.f32.mrf.mxu0
      %v393 = vadd.f32 0.0, %v392
      %394 = vmatmul.f32.gmra.mxu0 %v355
      %v395 = vpop.f32.mrf.mxu0
      %v396 = vadd.f32 0.0, %v395
      %397 = vmatmul.f32.gmra.mxu0 %v358
      %v398 = vpop.f32.mrf.mxu0
      %v399 = vadd.f32 0.0, %v398
      %400 = vmatmul.f32.gmra.mxu0 %v361
      %v401 = vpop.f32.mrf.mxu0
      %v402 = vadd.f32 0.0, %v401
      %403 = vmatmul.f32.gmra.mxu0 %v364
      %v404 = vpop.f32.mrf.mxu0
      %v405 = vadd.f32 0.0, %v404
      %406 = vmatmul.f32.gmra.mxu0 %v367
      %v407 = vpop.f32.mrf.mxu0
      %v408 = vadd.f32 0.0, %v407
      %409 = vdwg.mxu0
      %v410 = vld [vmem:[%s4] sm:$0xff]
      %v411 = vld [vmem:[%s4 + $0x8] sm:$0xff]
      %v412 = vld [vmem:[%s4 + $0x10] sm:$0xff]
      %v413 = vld [vmem:[%s4 + $0x18] sm:$0xff]
      %v414 = vld [vmem:[%s4 + $0x20] sm:$0xff]
      %v415 = vld [vmem:[%s4 + $0x28] sm:$0xff]
      %v416 = vld [vmem:[%s4 + $0x30] sm:$0xff]
      %v417 = vld [vmem:[%s4 + $0x38] sm:$0xff]
      %v419 = vsel %vm344, %v410, 0
      %v422 = vsel %vm344, %v411, 0
      %v425 = vsel %vm344, %v412, 0
      %v428 = vsel %vm344, %v413, 0
      %v431 = vsel %vm344, %v414, 0
      %v434 = vsel %vm344, %v415, 0
      %v437 = vsel %vm344, %v416, 0
      %v440 = vsel %vm344, %v417, 0
      %442 = vmatpush.msra.mxu0 0.0
      %443 = vmatpush.msra.mxu0 0.0
      %444 = vmatpush.msra.mxu0 0.0
      %445 = vmatpush.msra.mxu0 0.0
      %446 = vmatpush.msra.mxu0 0.0
      %447 = vmatpush.msra.mxu0 0.0
      %448 = vmatpush.msra.mxu0 0.0
      %449 = vmatpush.msra.mxu0 0.0
      %450 = vmatpush.msra.mxu0 0.0
      %451 = vmatpush.msra.mxu0 0.0
      %452 = vmatpush.msra.mxu0 0.0
      %453 = vmatpush.msra.mxu0 0.0
      %454 = vmatpush.msra.mxu0 0.0
      %455 = vmatpush.msra.mxu0 0.0
      %456 = vmatpush.msra.mxu0 %v335
      %457 = vmatpush.msra.mxu0 %v334
      %458 = vmatmul.f32.gmra.mxu0 %v419
      %v459 = vpop.f32.mrf.mxu0
      %v460 = vadd.f32 0.0, %v459
      %461 = vmatmul.f32.gmra.mxu0 %v422
      %v462 = vpop.f32.mrf.mxu0
      %v463 = vadd.f32 0.0, %v462
      %464 = vmatmul.f32.gmra.mxu0 %v425
      %v465 = vpop.f32.mrf.mxu0
      %v466 = vadd.f32 0.0, %v465
      %467 = vmatmul.f32.gmra.mxu0 %v428
      %v468 = vpop.f32.mrf.mxu0
      %v469 = vadd.f32 0.0, %v468
      %470 = vmatmul.f32.gmra.mxu0 %v431
      %v471 = vpop.f32.mrf.mxu0
      %v472 = vadd.f32 0.0, %v471
      %473 = vmatmul.f32.gmra.mxu0 %v434
      %v474 = vpop.f32.mrf.mxu0
      %v475 = vadd.f32 0.0, %v474
      %476 = vmatmul.f32.gmra.mxu0 %v437
      %v477 = vpop.f32.mrf.mxu0
      %v478 = vadd.f32 0.0, %v477
      %479 = vmatmul.f32.gmra.mxu0 %v440
      %v480 = vpop.f32.mrf.mxu0
      %v481 = vadd.f32 0.0, %v480
      %482 = vdwg.mxu0
      %v483 = vld [vmem:[%s5] sm:$0xff]
      %v484 = vld [vmem:[%s5 + $0x8] sm:$0xff]
      %v485 = vld [vmem:[%s5 + $0x10] sm:$0xff]
      %v486 = vld [vmem:[%s5 + $0x18] sm:$0xff]
      %v487 = vld [vmem:[%s5 + $0x20] sm:$0xff]
      %v488 = vld [vmem:[%s5 + $0x28] sm:$0xff]
      %v489 = vld [vmem:[%s5 + $0x30] sm:$0xff]
      %v490 = vld [vmem:[%s5 + $0x38] sm:$0xff]
      %v492 = vsel %vm344, %v483, 0
      %v495 = vsel %vm344, %v484, 0
      %v498 = vsel %vm344, %v485, 0
      %v501 = vsel %vm344, %v486, 0
      %v504 = vsel %vm344, %v487, 0
      %v507 = vsel %vm344, %v488, 0
      %v510 = vsel %vm344, %v489, 0
      %v513 = vsel %vm344, %v490, 0
      %515 = vmatpush.msra.mxu0 0.0
      %516 = vmatpush.msra.mxu0 0.0
      %517 = vmatpush.msra.mxu0 0.0
      %518 = vmatpush.msra.mxu0 0.0
      %519 = vmatpush.msra.mxu0 0.0
      %520 = vmatpush.msra.mxu0 0.0
      %521 = vmatpush.msra.mxu0 0.0
      %522 = vmatpush.msra.mxu0 0.0
      %523 = vmatpush.msra.mxu0 0.0
      %524 = vmatpush.msra.mxu0 0.0
      %525 = vmatpush.msra.mxu0 0.0
      %526 = vmatpush.msra.mxu0 0.0
      %527 = vmatpush.msra.mxu0 0.0
      %528 = vmatpush.msra.mxu0 0.0
      %529 = vmatpush.msra.mxu0 %v335
      %530 = vmatpush.msra.mxu0 %v334
      %531 = vmatmul.f32.gmra.mxu0 %v492
      %v532 = vpop.f32.mrf.mxu0
      %v533 = vadd.f32 0.0, %v532
      %534 = vmatmul.f32.gmra.mxu0 %v495
      %v535 = vpop.f32.mrf.mxu0
      %v536 = vadd.f32 0.0, %v535
      %537 = vmatmul.f32.gmra.mxu0 %v498
      %v538 = vpop.f32.mrf.mxu0
      %v539 = vadd.f32 0.0, %v538
      %540 = vmatmul.f32.gmra.mxu0 %v501
      %v541 = vpop.f32.mrf.mxu0
      %v542 = vadd.f32 0.0, %v541
      %543 = vmatmul.f32.gmra.mxu0 %v504
      %v544 = vpop.f32.mrf.mxu0
      %v545 = vadd.f32 0.0, %v544
      %546 = vmatmul.f32.gmra.mxu0 %v507
      %v547 = vpop.f32.mrf.mxu0
      %v548 = vadd.f32 0.0, %v547
      %549 = vmatmul.f32.gmra.mxu0 %v510
      %v550 = vpop.f32.mrf.mxu0
      %v551 = vadd.f32 0.0, %v550
      %552 = vmatmul.f32.gmra.mxu0 %v513
      %v553 = vpop.f32.mrf.mxu0
      %v554 = vadd.f32 0.0, %v553
      %555 = vdwg.mxu0
      %556 = vxpose.xlu0.b32.start [1/16] %v387, 128
      %557 = vxpose.xlu0.b32.cont [2/16] %v390, 128
      %558 = vxpose.xlu0.b32.cont [3/16] 0.0, 128
      %559 = vxpose.xlu0.b32.cont [4/16] 0.0, 128
      %560 = vxpose.xlu0.b32.cont [5/16] 0.0, 128
      %561 = vxpose.xlu0.b32.cont [6/16] 0.0, 128
      %562 = vxpose.xlu0.b32.cont [7/16] 0.0, 128
      %563 = vxpose.xlu0.b32.cont [8/16] 0.0, 128
      %564 = vxpose.xlu0.b32.cont [9/16] 0.0, 128
      %565 = vxpose.xlu0.b32.cont [10/16] 0.0, 128
      %566 = vxpose.xlu0.b32.cont [11/16] 0.0, 128
      %567 = vxpose.xlu0.b32.cont [12/16] 0.0, 128
      %568 = vxpose.xlu0.b32.cont [13/16] 0.0, 128
      %569 = vxpose.xlu0.b32.cont [14/16] 0.0, 128
      %570 = vxpose.xlu0.b32.cont [15/16] 0.0, 128
      %571 = vxpose.xlu0.b32.end [16/16] 0.0, 128
      %v572 = vpop.trf.xlu0
      %v573 = vpop.trf.xlu0
      %v574 = vpop.trf.xlu0
      %v575 = vpop.trf.xlu0
      %v576 = vpop.trf.xlu0
      %v577 = vpop.trf.xlu0
      %v578 = vpop.trf.xlu0
      %v579 = vpop.trf.xlu0
      %v580 = vpop.trf.xlu0
      %v581 = vpop.trf.xlu0
      %v582 = vpop.trf.xlu0
      %v583 = vpop.trf.xlu0
      %v584 = vpop.trf.xlu0
      %v585 = vpop.trf.xlu0
      %v586 = vpop.trf.xlu0
      %v587 = vpop.trf.xlu0
      %v589 = vsel %vm344, %v572, 0
      %v592 = vsel %vm344, %v573, 0
      %v595 = vsel %vm344, %v574, 0
      %v598 = vsel %vm344, %v575, 0
      %v601 = vsel %vm344, %v576, 0
      %v604 = vsel %vm344, %v577, 0
      %v607 = vsel %vm344, %v578, 0
      %v610 = vsel %vm344, %v579, 0
      %v613 = vsel %vm344, %v580, 0
      %v616 = vsel %vm344, %v581, 0
      %v619 = vsel %vm344, %v582, 0
      %v622 = vsel %vm344, %v583, 0
      %v625 = vsel %vm344, %v584, 0
      %v628 = vsel %vm344, %v585, 0
      %v631 = vsel %vm344, %v586, 0
      %v634 = vsel %vm344, %v587, 0
      %636 = vmatpush.msra.mxu0 0.0
      %637 = vmatpush.msra.mxu0 0.0
      %638 = vmatpush.msra.mxu0 0.0
      %639 = vmatpush.msra.mxu0 0.0
      %640 = vmatpush.msra.mxu0 0.0
      %641 = vmatpush.msra.mxu0 0.0
      %642 = vmatpush.msra.mxu0 0.0
      %643 = vmatpush.msra.mxu0 0.0
      %644 = vmatpush.msra.mxu0 0.0
      %645 = vmatpush.msra.mxu0 0.0
      %646 = vmatpush.msra.mxu0 0.0
      %647 = vmatpush.msra.mxu0 0.0
      %648 = vmatpush.msra.mxu0 0.0
      %649 = vmatpush.msra.mxu0 0.0
      %650 = vmatpush.msra.mxu0 %v463
      %651 = vmatpush.msra.mxu0 %v460
      %652 = vmatmul.f32.gmra.mxu0 %v589
      %v653 = vpop.f32.mrf.mxu0
      %v654 = vadd.f32 0.0, %v653
      %655 = vmatmul.f32.gmra.mxu0 %v592
      %v656 = vpop.f32.mrf.mxu0
      %v657 = vadd.f32 0.0, %v656
      %658 = vmatmul.f32.gmra.mxu0 %v595
      %v659 = vpop.f32.mrf.mxu0
      %v660 = vadd.f32 0.0, %v659
      %661 = vmatmul.f32.gmra.mxu0 %v598
      %v662 = vpop.f32.mrf.mxu0
      %v663 = vadd.f32 0.0, %v662
      %664 = vmatmul.f32.gmra.mxu0 %v601
      %v665 = vpop.f32.mrf.mxu0
      %v666 = vadd.f32 0.0, %v665
      %667 = vmatmul.f32.gmra.mxu0 %v604
      %v668 = vpop.f32.mrf.mxu0
      %v669 = vadd.f32 0.0, %v668
      %670 = vmatmul.f32.gmra.mxu0 %v607
      %v671 = vpop.f32.mrf.mxu0
      %v672 = vadd.f32 0.0, %v671
      %673 = vmatmul.f32.gmra.mxu0 %v610
      %v674 = vpop.f32.mrf.mxu0
      %v675 = vadd.f32 0.0, %v674
      %676 = vmatmul.f32.gmra.mxu0 %v613
      %v677 = vpop.f32.mrf.mxu0
      %v678 = vadd.f32 0.0, %v677
      %679 = vmatmul.f32.gmra.mxu0 %v616
      %v680 = vpop.f32.mrf.mxu0
      %v681 = vadd.f32 0.0, %v680
      %682 = vmatmul.f32.gmra.mxu0 %v619
      %v683 = vpop.f32.mrf.mxu0
      %v684 = vadd.f32 0.0, %v683
      %685 = vmatmul.f32.gmra.mxu0 %v622
      %v686 = vpop.f32.mrf.mxu0
      %v687 = vadd.f32 0.0, %v686
      %688 = vmatmul.f32.gmra.mxu0 %v625
      %v689 = vpop.f32.mrf.mxu0
      %v690 = vadd.f32 0.0, %v689
      %691 = vmatmul.f32.gmra.mxu0 %v628
      %v692 = vpop.f32.mrf.mxu0
      %v693 = vadd.f32 0.0, %v692
      %694 = vmatmul.f32.gmra.mxu0 %v631
      %v695 = vpop.f32.mrf.mxu0
      %v696 = vadd.f32 0.0, %v695
      %697 = vmatmul.f32.gmra.mxu0 %v634
      %v698 = vpop.f32.mrf.mxu0
      %v699 = vadd.f32 0.0, %v698
      %700 = vdwg.mxu0
      %701 = vmax.xlane.f32.xlu0 %v654
      %v702 = vpop.xlane.xlu0 %701
      %703 = vmax.xlane.f32.xlu0 %v657
      %v704 = vpop.xlane.xlu0 %703
      %705 = vmax.xlane.f32.xlu0 %v660
      %v706 = vpop.xlane.xlu0 %705
      %707 = vmax.xlane.f32.xlu0 %v663
      %v708 = vpop.xlane.xlu0 %707
      %709 = vmax.xlane.f32.xlu0 %v666
      %v710 = vpop.xlane.xlu0 %709
      %711 = vmax.xlane.f32.xlu0 %v669
      %v712 = vpop.xlane.xlu0 %711
      %713 = vmax.xlane.f32.xlu0 %v672
      %v714 = vpop.xlane.xlu0 %713
      %715 = vmax.xlane.f32.xlu0 %v675
      %v716 = vpop.xlane.xlu0 %715
      %717 = vmax.xlane.f32.xlu0 %v678
      %v718 = vpop.xlane.xlu0 %717
      %719 = vmax.xlane.f32.xlu0 %v681
      %v720 = vpop.xlane.xlu0 %719
      %721 = vmax.xlane.f32.xlu0 %v684
      %v722 = vpop.xlane.xlu0 %721
      %723 = vmax.xlane.f32.xlu0 %v687
      %v724 = vpop.xlane.xlu0 %723
      %725 = vmax.xlane.f32.xlu0 %v690
      %v726 = vpop.xlane.xlu0 %725
      %727 = vmax.xlane.f32.xlu0 %v693
      %v728 = vpop.xlane.xlu0 %727
      %729 = vmax.xlane.f32.xlu0 %v696
      %v730 = vpop.xlane.xlu0 %729
      %731 = vmax.xlane.f32.xlu0 %v699
      %v732 = vpop.xlane.xlu0 %731
      %v733 = vsub.f32 %v654, %v702
      %v734 = vsub.f32 %v657, %v704
      %v735 = vsub.f32 %v660, %v706
      %v736 = vsub.f32 %v663, %v708
      %v737 = vsub.f32 %v666, %v710
      %v738 = vsub.f32 %v669, %v712
      %v739 = vsub.f32 %v672, %v714
      %v740 = vsub.f32 %v675, %v716
      %v741 = vsub.f32 %v678, %v718
      %v742 = vsub.f32 %v681, %v720
      %v743 = vsub.f32 %v684, %v722
      %v744 = vsub.f32 %v687, %v724
      %v745 = vsub.f32 %v690, %v726
      %v746 = vsub.f32 %v693, %v728
      %v747 = vsub.f32 %v696, %v730
      %v748 = vsub.f32 %v699, %v732
      %v749 = vmul.f32 %v733, 1.442695
      %v750 = vpow.pop %v749
      %v751 = vmul.f32 %v734, 1.442695
      %v752 = vpow.pop %v751
      %v753 = vmul.f32 %v735, 1.442695
      %v754 = vpow.pop %v753
      %v755 = vmul.f32 %v736, 1.442695
      %v756 = vpow.pop %v755
      %v757 = vmul.f32 %v737, 1.442695
      %v758 = vpow.pop %v757
      %v759 = vmul.f32 %v738, 1.442695
      %v760 = vpow.pop %v759
      %v761 = vmul.f32 %v739, 1.442695
      %v762 = vpow.pop %v761
      %v763 = vmul.f32 %v740, 1.442695
      %v764 = vpow.pop %v763
      %v765 = vmul.f32 %v741, 1.442695
      %v766 = vpow.pop %v765
      %v767 = vmul.f32 %v742, 1.442695
      %v768 = vpow.pop %v767
      %v769 = vmul.f32 %v743, 1.442695
      %v770 = vpow.pop %v769
      %v771 = vmul.f32 %v744, 1.442695
      %v772 = vpow.pop %v771
      %v773 = vmul.f32 %v745, 1.442695
      %v774 = vpow.pop %v773
      %v775 = vmul.f32 %v746, 1.442695
      %v776 = vpow.pop %v775
      %v777 = vmul.f32 %v747, 1.442695
      %v778 = vpow.pop %v777
      %v779 = vmul.f32 %v748, 1.442695
      %v780 = vpow.pop %v779
      %781 = vadd.xlane.f32.xlu0 %v750
      %v782 = vpop.xlane.xlu0 %781
      %783 = vadd.xlane.f32.xlu0 %v752
      %v784 = vpop.xlane.xlu0 %783
      %785 = vadd.xlane.f32.xlu0 %v754
      %v786 = vpop.xlane.xlu0 %785
      %787 = vadd.xlane.f32.xlu0 %v756
      %v788 = vpop.xlane.xlu0 %787
      %789 = vadd.xlane.f32.xlu0 %v758
      %v790 = vpop.xlane.xlu0 %789
      %791 = vadd.xlane.f32.xlu0 %v760
      %v792 = vpop.xlane.xlu0 %791
      %793 = vadd.xlane.f32.xlu0 %v762
      %v794 = vpop.xlane.xlu0 %793
      %795 = vadd.xlane.f32.xlu0 %v764
      %v796 = vpop.xlane.xlu0 %795
      %797 = vadd.xlane.f32.xlu0 %v766
      %v798 = vpop.xlane.xlu0 %797
      %799 = vadd.xlane.f32.xlu0 %v768
      %v800 = vpop.xlane.xlu0 %799
      %801 = vadd.xlane.f32.xlu0 %v770
      %v802 = vpop.xlane.xlu0 %801
      %803 = vadd.xlane.f32.xlu0 %v772
      %v804 = vpop.xlane.xlu0 %803
      %805 = vadd.xlane.f32.xlu0 %v774
      %v806 = vpop.xlane.xlu0 %805
      %807 = vadd.xlane.f32.xlu0 %v776
      %v808 = vpop.xlane.xlu0 %807
      %809 = vadd.xlane.f32.xlu0 %v778
      %v810 = vpop.xlane.xlu0 %809
      %811 = vadd.xlane.f32.xlu0 %v780
      %v812 = vpop.xlane.xlu0 %811
      %v813 = vrcp.pop %v782
      %v814 = vmul.f32 %v782, %v813
      %v815 = vsub.f32 1.0, %v814
      %v816 = vmul.f32 %v813, %v815
      %v817 = vadd.f32 %v813, %v816
      %vm818 = vweird.f32 %v782
      %vm819 = vweird.f32 %v813
      %vm820 = vmor %vm818, %vm819
      %v821 = vsel %vm820, %v813, %v817
      %v822 = vand.u32 2147483647, %v782
      %vm823 = vcmp.eq.f32.partialorder %v822, 8.507059e+37
      %v824 = vand.u32 %v782, 2147483648
      %v825 = vor.u32 1.1754944e-38, %v824
      %v826 = vsel %vm823, %v825, %v821
      %v827 = vrcp.pop %v784
      %v828 = vmul.f32 %v784, %v827
      %v829 = vsub.f32 1.0, %v828
      %v830 = vmul.f32 %v827, %v829
      %v831 = vadd.f32 %v827, %v830
      %vm832 = vweird.f32 %v784
      %vm833 = vweird.f32 %v827
      %vm834 = vmor %vm832, %vm833
      %v835 = vsel %vm834, %v827, %v831
      %v836 = vand.u32 2147483647, %v784
      %vm837 = vcmp.eq.f32.partialorder %v836, 8.507059e+37
      %v838 = vand.u32 %v784, 2147483648
      %v839 = vor.u32 1.1754944e-38, %v838
      %v840 = vsel %vm837, %v839, %v835
      %v841 = vrcp.pop %v786
      %v842 = vmul.f32 %v786, %v841
      %v843 = vsub.f32 1.0, %v842
      %v844 = vmul.f32 %v841, %v843
      %v845 = vadd.f32 %v841, %v844
      %vm846 = vweird.f32 %v786
      %vm847 = vweird.f32 %v841
      %vm848 = vmor %vm846, %vm847
      %v849 = vsel %vm848, %v841, %v845
      %v850 = vand.u32 2147483647, %v786
      %vm851 = vcmp.eq.f32.partialorder %v850, 8.507059e+37
      %v852 = vand.u32 %v786, 2147483648
      %v853 = vor.u32 1.1754944e-38, %v852
      %v854 = vsel %vm851, %v853, %v849
      %v855 = vrcp.pop %v788
      %v856 = vmul.f32 %v788, %v855
      %v857 = vsub.f32 1.0, %v856
      %v858 = vmul.f32 %v855, %v857
      %v859 = vadd.f32 %v855, %v858
      %vm860 = vweird.f32 %v788
      %vm861 = vweird.f32 %v855
      %vm862 = vmor %vm860, %vm861
      %v863 = vsel %vm862, %v855, %v859
      %v864 = vand.u32 2147483647, %v788
      %vm865 = vcmp.eq.f32.partialorder %v864, 8.507059e+37
      %v866 = vand.u32 %v788, 2147483648
      %v867 = vor.u32 1.1754944e-38, %v866
      %v868 = vsel %vm865, %v867, %v863
      %v869 = vrcp.pop %v790
      %v870 = vmul.f32 %v790, %v869
      %v871 = vsub.f32 1.0, %v870
      %v872 = vmul.f32 %v869, %v871
      %v873 = vadd.f32 %v869, %v872
      %vm874 = vweird.f32 %v790
      %vm875 = vweird.f32 %v869
      %vm876 = vmor %vm874, %vm875
      %v877 = vsel %vm876, %v869, %v873
      %v878 = vand.u32 2147483647, %v790
      %vm879 = vcmp.eq.f32.partialorder %v878, 8.507059e+37
      %v880 = vand.u32 %v790, 2147483648
      %v881 = vor.u32 1.1754944e-38, %v880
      %v882 = vsel %vm879, %v881, %v877
      %v883 = vrcp.pop %v792
      %v884 = vmul.f32 %v792, %v883
      %v885 = vsub.f32 1.0, %v884
      %v886 = vmul.f32 %v883, %v885
      %v887 = vadd.f32 %v883, %v886
      %vm888 = vweird.f32 %v792
      %vm889 = vweird.f32 %v883
      %vm890 = vmor %vm888, %vm889
      %v891 = vsel %vm890, %v883, %v887
      %v892 = vand.u32 2147483647, %v792
      %vm893 = vcmp.eq.f32.partialorder %v892, 8.507059e+37
      %v894 = vand.u32 %v792, 2147483648
      %v895 = vor.u32 1.1754944e-38, %v894
      %v896 = vsel %vm893, %v895, %v891
      %v897 = vrcp.pop %v794
      %v898 = vmul.f32 %v794, %v897
      %v899 = vsub.f32 1.0, %v898
      %v900 = vmul.f32 %v897, %v899
      %v901 = vadd.f32 %v897, %v900
      %vm902 = vweird.f32 %v794
      %vm903 = vweird.f32 %v897
      %vm904 = vmor %vm902, %vm903
      %v905 = vsel %vm904, %v897, %v901
      %v906 = vand.u32 2147483647, %v794
      %vm907 = vcmp.eq.f32.partialorder %v906, 8.507059e+37
      %v908 = vand.u32 %v794, 2147483648
      %v909 = vor.u32 1.1754944e-38, %v908
      %v910 = vsel %vm907, %v909, %v905
      %v911 = vrcp.pop %v796
      %v912 = vmul.f32 %v796, %v911
      %v913 = vsub.f32 1.0, %v912
      %v914 = vmul.f32 %v911, %v913
      %v915 = vadd.f32 %v911, %v914
      %vm916 = vweird.f32 %v796
      %vm917 = vweird.f32 %v911
      %vm918 = vmor %vm916, %vm917
      %v919 = vsel %vm918, %v911, %v915
      %v920 = vand.u32 2147483647, %v796
      %vm921 = vcmp.eq.f32.partialorder %v920, 8.507059e+37
      %v922 = vand.u32 %v796, 2147483648
      %v923 = vor.u32 1.1754944e-38, %v922
      %v924 = vsel %vm921, %v923, %v919
      %v925 = vrcp.pop %v798
      %v926 = vmul.f32 %v798, %v925
      %v927 = vsub.f32 1.0, %v926
      %v928 = vmul.f32 %v925, %v927
      %v929 = vadd.f32 %v925, %v928
      %vm930 = vweird.f32 %v798
      %vm931 = vweird.f32 %v925
      %vm932 = vmor %vm930, %vm931
      %v933 = vsel %vm932, %v925, %v929
      %v934 = vand.u32 2147483647, %v798
      %vm935 = vcmp.eq.f32.partialorder %v934, 8.507059e+37
      %v936 = vand.u32 %v798, 2147483648
      %v937 = vor.u32 1.1754944e-38, %v936
      %v938 = vsel %vm935, %v937, %v933
      %v939 = vrcp.pop %v800
      %v940 = vmul.f32 %v800, %v939
      %v941 = vsub.f32 1.0, %v940
      %v942 = vmul.f32 %v939, %v941
      %v943 = vadd.f32 %v939, %v942
      %vm944 = vweird.f32 %v800
      %vm945 = vweird.f32 %v939
      %vm946 = vmor %vm944, %vm945
      %v947 = vsel %vm946, %v939, %v943
      %v948 = vand.u32 2147483647, %v800
      %vm949 = vcmp.eq.f32.partialorder %v948, 8.507059e+37
      %v950 = vand.u32 %v800, 2147483648
      %v951 = vor.u32 1.1754944e-38, %v950
      %v952 = vsel %vm949, %v951, %v947
      %v953 = vrcp.pop %v802
      %v954 = vmul.f32 %v802, %v953
      %v955 = vsub.f32 1.0, %v954
      %v956 = vmul.f32 %v953, %v955
      %v957 = vadd.f32 %v953, %v956
      %vm958 = vweird.f32 %v802
      %vm959 = vweird.f32 %v953
      %vm960 = vmor %vm958, %vm959
      %v961 = vsel %vm960, %v953, %v957
      %v962 = vand.u32 2147483647, %v802
      %vm963 = vcmp.eq.f32.partialorder %v962, 8.507059e+37
      %v964 = vand.u32 %v802, 2147483648
      %v965 = vor.u32 1.1754944e-38, %v964
      %v966 = vsel %vm963, %v965, %v961
      %v967 = vrcp.pop %v804
      %v968 = vmul.f32 %v804, %v967
      %v969 = vsub.f32 1.0, %v968
      %v970 = vmul.f32 %v967, %v969
      %v971 = vadd.f32 %v967, %v970
      %vm972 = vweird.f32 %v804
      %vm973 = vweird.f32 %v967
      %vm974 = vmor %vm972, %vm973
      %v975 = vsel %vm974, %v967, %v971
      %v976 = vand.u32 2147483647, %v804
      %vm977 = vcmp.eq.f32.partialorder %v976, 8.507059e+37
      %v978 = vand.u32 %v804, 2147483648
      %v979 = vor.u32 1.1754944e-38, %v978
      %v980 = vsel %vm977, %v979, %v975
      %v981 = vrcp.pop %v806
      %v982 = vmul.f32 %v806, %v981
      %v983 = vsub.f32 1.0, %v982
      %v984 = vmul.f32 %v981, %v983
      %v985 = vadd.f32 %v981, %v984
      %vm986 = vweird.f32 %v806
      %vm987 = vweird.f32 %v981
      %vm988 = vmor %vm986, %vm987
      %v989 = vsel %vm988, %v981, %v985
      %v990 = vand.u32 2147483647, %v806
      %vm991 = vcmp.eq.f32.partialorder %v990, 8.507059e+37
      %v992 = vand.u32 %v806, 2147483648
      %v993 = vor.u32 1.1754944e-38, %v992
      %v994 = vsel %vm991, %v993, %v989
      %v995 = vrcp.pop %v808
      %v996 = vmul.f32 %v808, %v995
      %v997 = vsub.f32 1.0, %v996
      %v998 = vmul.f32 %v995, %v997
      %v999 = vadd.f32 %v995, %v998
      %vm1000 = vweird.f32 %v808
      %vm1001 = vweird.f32 %v995
      %vm1002 = vmor %vm1000, %vm1001
      %v1003 = vsel %vm1002, %v995, %v999
      %v1004 = vand.u32 2147483647, %v808
      %vm1005 = vcmp.eq.f32.partialorder %v1004, 8.507059e+37
      %v1006 = vand.u32 %v808, 2147483648
      %v1007 = vor.u32 1.1754944e-38, %v1006
      %v1008 = vsel %vm1005, %v1007, %v1003
      %v1009 = vrcp.pop %v810
      %v1010 = vmul.f32 %v810, %v1009
      %v1011 = vsub.f32 1.0, %v1010
      %v1012 = vmul.f32 %v1009, %v1011
      %v1013 = vadd.f32 %v1009, %v1012
      %vm1014 = vweird.f32 %v810
      %vm1015 = vweird.f32 %v1009
      %vm1016 = vmor %vm1014, %vm1015
      %v1017 = vsel %vm1016, %v1009, %v1013
      %v1018 = vand.u32 2147483647, %v810
      %vm1019 = vcmp.eq.f32.partialorder %v1018, 8.507059e+37
      %v1020 = vand.u32 %v810, 2147483648
      %v1021 = vor.u32 1.1754944e-38, %v1020
      %v1022 = vsel %vm1019, %v1021, %v1017
      %v1023 = vrcp.pop %v812
      %v1024 = vmul.f32 %v812, %v1023
      %v1025 = vsub.f32 1.0, %v1024
      %v1026 = vmul.f32 %v1023, %v1025
      %v1027 = vadd.f32 %v1023, %v1026
      %vm1028 = vweird.f32 %v812
      %vm1029 = vweird.f32 %v1023
      %vm1030 = vmor %vm1028, %vm1029
      %v1031 = vsel %vm1030, %v1023, %v1027
      %v1032 = vand.u32 2147483647, %v812
      %vm1033 = vcmp.eq.f32.partialorder %v1032, 8.507059e+37
      %v1034 = vand.u32 %v812, 2147483648
      %v1035 = vor.u32 1.1754944e-38, %v1034
      %v1036 = vsel %vm1033, %v1035, %v1031
      %v1037 = vmul.f32 %v750, %v826
      %v1038 = vmul.f32 %v752, %v840
      %v1039 = vmul.f32 %v754, %v854
      %v1040 = vmul.f32 %v756, %v868
      %v1041 = vmul.f32 %v758, %v882
      %v1042 = vmul.f32 %v760, %v896
      %v1043 = vmul.f32 %v762, %v910
      %v1044 = vmul.f32 %v764, %v924
      %v1045 = vmul.f32 %v766, %v938
      %v1046 = vmul.f32 %v768, %v952
      %v1047 = vmul.f32 %v770, %v966
      %v1048 = vmul.f32 %v772, %v980
      %v1049 = vmul.f32 %v774, %v994
      %v1050 = vmul.f32 %v776, %v1008
      %v1051 = vmul.f32 %v778, %v1022
      %v1052 = vmul.f32 %v780, %v1036
      %1053 = vmatpush.xpose.msra.mxu0 %v1052
      %1054 = vmatpush.xpose.msra.mxu0 %v1051
      %1055 = vmatpush.xpose.msra.mxu0 %v1050
      %1056 = vmatpush.xpose.msra.mxu0 %v1049
      %1057 = vmatpush.xpose.msra.mxu0 %v1048
      %1058 = vmatpush.xpose.msra.mxu0 %v1047
      %1059 = vmatpush.xpose.msra.mxu0 %v1046
      %1060 = vmatpush.xpose.msra.mxu0 %v1045
      %1061 = vmatpush.xpose.msra.mxu0 %v1044
      %1062 = vmatpush.xpose.msra.mxu0 %v1043
      %1063 = vmatpush.xpose.msra.mxu0 %v1042
      %1064 = vmatpush.xpose.msra.mxu0 %v1041
      %1065 = vmatpush.xpose.msra.mxu0 %v1040
      %1066 = vmatpush.xpose.msra.mxu0 %v1039
      %1067 = vmatpush.xpose.msra.mxu0 %v1038
      %1068 = vmatpush.xpose.msra.mxu0 %v1037
      %1069 = vmatmul.f32.gmra.mxu0 %v533
      %v1070 = vpop.f32.mrf.mxu0
      %v1071 = vadd.f32 0.0, %v1070
      %1072 = vmatmul.f32.gmra.mxu0 %v536
      %v1073 = vpop.f32.mrf.mxu0
      %v1074 = vadd.f32 0.0, %v1073
      %1075 = vdwg.mxu0
      %1076 = vst [vmem:[#allocation2] sm:$0xff] %v1071
      %1077 = vst [vmem:[#allocation2 + $0x8] sm:$0xff] %v1074
      %1078 = vxpose.xlu0.b32.start [1/16] %v393, 128
      %1079 = vxpose.xlu0.b32.cont [2/16] %v396, 128
      %1080 = vxpose.xlu0.b32.cont [3/16] 0.0, 128
      %1081 = vxpose.xlu0.b32.cont [4/16] 0.0, 128
      %1082 = vxpose.xlu0.b32.cont [5/16] 0.0, 128
      %1083 = vxpose.xlu0.b32.cont [6/16] 0.0, 128
      %1084 = vxpose.xlu0.b32.cont [7/16] 0.0, 128
      %1085 = vxpose.xlu0.b32.cont [8/16] 0.0, 128
      %1086 = vxpose.xlu0.b32.cont [9/16] 0.0, 128
      %1087 = vxpose.xlu0.b32.cont [10/16] 0.0, 128
      %1088 = vxpose.xlu0.b32.cont [11/16] 0.0, 128
      %1089 = vxpose.xlu0.b32.cont [12/16] 0.0, 128
      %1090 = vxpose.xlu0.b32.cont [13/16] 0.0, 128
      %1091 = vxpose.xlu0.b32.cont [14/16] 0.0, 128
      %1092 = vxpose.xlu0.b32.cont [15/16] 0.0, 128
      %1093 = vxpose.xlu0.b32.end [16/16] 0.0, 128
      %v1094 = vpop.trf.xlu0
      %v1095 = vpop.trf.xlu0
      %v1096 = vpop.trf.xlu0
      %v1097 = vpop.trf.xlu0
      %v1098 = vpop.trf.xlu0
      %v1099 = vpop.trf.xlu0
      %v1100 = vpop.trf.xlu0
      %v1101 = vpop.trf.xlu0
      %v1102 = vpop.trf.xlu0
      %v1103 = vpop.trf.xlu0
      %v1104 = vpop.trf.xlu0
      %v1105 = vpop.trf.xlu0
      %v1106 = vpop.trf.xlu0
      %v1107 = vpop.trf.xlu0
      %v1108 = vpop.trf.xlu0
      %v1109 = vpop.trf.xlu0
      %v1111 = vsel %vm344, %v1094, 0
      %v1114 = vsel %vm344, %v1095, 0
      %v1117 = vsel %vm344, %v1096, 0
      %v1120 = vsel %vm344, %v1097, 0
      %v1123 = vsel %vm344, %v1098, 0
      %v1126 = vsel %vm344, %v1099, 0
      %v1129 = vsel %vm344, %v1100, 0
      %v1132 = vsel %vm344, %v1101, 0
      %v1135 = vsel %vm344, %v1102, 0
      %v1138 = vsel %vm344, %v1103, 0
      %v1141 = vsel %vm344, %v1104, 0
      %v1144 = vsel %vm344, %v1105, 0
      %v1147 = vsel %vm344, %v1106, 0
      %v1150 = vsel %vm344, %v1107, 0
      %v1153 = vsel %vm344, %v1108, 0
      %v1156 = vsel %vm344, %v1109, 0
      %1158 = vmatpush.msra.mxu0 0.0
      %1159 = vmatpush.msra.mxu0 0.0
      %1160 = vmatpush.msra.mxu0 0.0
      %1161 = vmatpush.msra.mxu0 0.0
      %1162 = vmatpush.msra.mxu0 0.0
      %1163 = vmatpush.msra.mxu0 0.0
      %1164 = vmatpush.msra.mxu0 0.0
      %1165 = vmatpush.msra.mxu0 0.0
      %1166 = vmatpush.msra.mxu0 0.0
      %1167 = vmatpush.msra.mxu0 0.0
      %1168 = vmatpush.msra.mxu0 0.0
      %1169 = vmatpush.msra.mxu0 0.0
      %1170 = vmatpush.msra.mxu0 0.0
      %1171 = vmatpush.msra.mxu0 0.0
      %1172 = vmatpush.msra.mxu0 %v469
      %1173 = vmatpush.msra.mxu0 %v466
      %1174 = vmatmul.f32.gmra.mxu0 %v1111
      %v1175 = vpop.f32.mrf.mxu0
      %v1176 = vadd.f32 0.0, %v1175
      %1177 = vmatmul.f32.gmra.mxu0 %v1114
      %v1178 = vpop.f32.mrf.mxu0
      %v1179 = vadd.f32 0.0, %v1178
      %1180 = vmatmul.f32.gmra.mxu0 %v1117
      %v1181 = vpop.f32.mrf.mxu0
      %v1182 = vadd.f32 0.0, %v1181
      %1183 = vmatmul.f32.gmra.mxu0 %v1120
      %v1184 = vpop.f32.mrf.mxu0
      %v1185 = vadd.f32 0.0, %v1184
      %1186 = vmatmul.f32.gmra.mxu0 %v1123
      %v1187 = vpop.f32.mrf.mxu0
      %v1188 = vadd.f32 0.0, %v1187
      %1189 = vmatmul.f32.gmra.mxu0 %v1126
      %v1190 = vpop.f32.mrf.mxu0
      %v1191 = vadd.f32 0.0, %v1190
      %1192 = vmatmul.f32.gmra.mxu0 %v1129
      %v1193 = vpop.f32.mrf.mxu0
      %v1194 = vadd.f32 0.0, %v1193
      %1195 = vmatmul.f32.gmra.mxu0 %v1132
      %v1196 = vpop.f32.mrf.mxu0
      %v1197 = vadd.f32 0.0, %v1196
      %1198 = vmatmul.f32.gmra.mxu0 %v1135
      %v1199 = vpop.f32.mrf.mxu0
      %v1200 = vadd.f32 0.0, %v1199
      %1201 = vmatmul.f32.gmra.mxu0 %v1138
      %v1202 = vpop.f32.mrf.mxu0
      %v1203 = vadd.f32 0.0, %v1202
      %1204 = vmatmul.f32.gmra.mxu0 %v1141
      %v1205 = vpop.f32.mrf.mxu0
      %v1206 = vadd.f32 0.0, %v1205
      %1207 = vmatmul.f32.gmra.mxu0 %v1144
      %v1208 = vpop.f32.mrf.mxu0
      %v1209 = vadd.f32 0.0, %v1208
      %1210 = vmatmul.f32.gmra.mxu0 %v1147
      %v1211 = vpop.f32.mrf.mxu0
      %v1212 = vadd.f32 0.0, %v1211
      %1213 = vmatmul.f32.gmra.mxu0 %v1150
      %v1214 = vpop.f32.mrf.mxu0
      %v1215 = vadd.f32 0.0, %v1214
      %1216 = vmatmul.f32.gmra.mxu0 %v1153
      %v1217 = vpop.f32.mrf.mxu0
      %v1218 = vadd.f32 0.0, %v1217
      %1219 = vmatmul.f32.gmra.mxu0 %v1156
      %v1220 = vpop.f32.mrf.mxu0
      %v1221 = vadd.f32 0.0, %v1220
      %1222 = vdwg.mxu0
      %1223 = vmax.xlane.f32.xlu0 %v1176
      %v1224 = vpop.xlane.xlu0 %1223
      %1225 = vmax.xlane.f32.xlu0 %v1179
      %v1226 = vpop.xlane.xlu0 %1225
      %1227 = vmax.xlane.f32.xlu0 %v1182
      %v1228 = vpop.xlane.xlu0 %1227
      %1229 = vmax.xlane.f32.xlu0 %v1185
      %v1230 = vpop.xlane.xlu0 %1229
      %1231 = vmax.xlane.f32.xlu0 %v1188
      %v1232 = vpop.xlane.xlu0 %1231
      %1233 = vmax.xlane.f32.xlu0 %v1191
      %v1234 = vpop.xlane.xlu0 %1233
      %1235 = vmax.xlane.f32.xlu0 %v1194
      %v1236 = vpop.xlane.xlu0 %1235
      %1237 = vmax.xlane.f32.xlu0 %v1197
      %v1238 = vpop.xlane.xlu0 %1237
      %1239 = vmax.xlane.f32.xlu0 %v1200
      %v1240 = vpop.xlane.xlu0 %1239
      %1241 = vmax.xlane.f32.xlu0 %v1203
      %v1242 = vpop.xlane.xlu0 %1241
      %1243 = vmax.xlane.f32.xlu0 %v1206
      %v1244 = vpop.xlane.xlu0 %1243
      %1245 = vmax.xlane.f32.xlu0 %v1209
      %v1246 = vpop.xlane.xlu0 %1245
      %1247 = vmax.xlane.f32.xlu0 %v1212
      %v1248 = vpop.xlane.xlu0 %1247
      %1249 = vmax.xlane.f32.xlu0 %v1215
      %v1250 = vpop.xlane.xlu0 %1249
      %1251 = vmax.xlane.f32.xlu0 %v1218
      %v1252 = vpop.xlane.xlu0 %1251
      %1253 = vmax.xlane.f32.xlu0 %v1221
      %v1254 = vpop.xlane.xlu0 %1253
      %v1255 = vsub.f32 %v1176, %v1224
      %v1256 = vsub.f32 %v1179, %v1226
      %v1257 = vsub.f32 %v1182, %v1228
      %v1258 = vsub.f32 %v1185, %v1230
      %v1259 = vsub.f32 %v1188, %v1232
      %v1260 = vsub.f32 %v1191, %v1234
      %v1261 = vsub.f32 %v1194, %v1236
      %v1262 = vsub.f32 %v1197, %v1238
      %v1263 = vsub.f32 %v1200, %v1240
      %v1264 = vsub.f32 %v1203, %v1242
      %v1265 = vsub.f32 %v1206, %v1244
      %v1266 = vsub.f32 %v1209, %v1246
      %v1267 = vsub.f32 %v1212, %v1248
      %v1268 = vsub.f32 %v1215, %v1250
      %v1269 = vsub.f32 %v1218, %v1252
      %v1270 = vsub.f32 %v1221, %v1254
      %v1271 = vmul.f32 %v1255, 1.442695
      %v1272 = vpow.pop %v1271
      %v1273 = vmul.f32 %v1256, 1.442695
      %v1274 = vpow.pop %v1273
      %v1275 = vmul.f32 %v1257, 1.442695
      %v1276 = vpow.pop %v1275
      %v1277 = vmul.f32 %v1258, 1.442695
      %v1278 = vpow.pop %v1277
      %v1279 = vmul.f32 %v1259, 1.442695
      %v1280 = vpow.pop %v1279
      %v1281 = vmul.f32 %v1260, 1.442695
      %v1282 = vpow.pop %v1281
      %v1283 = vmul.f32 %v1261, 1.442695
      %v1284 = vpow.pop %v1283
      %v1285 = vmul.f32 %v1262, 1.442695
      %v1286 = vpow.pop %v1285
      %v1287 = vmul.f32 %v1263, 1.442695
      %v1288 = vpow.pop %v1287
      %v1289 = vmul.f32 %v1264, 1.442695
      %v1290 = vpow.pop %v1289
      %v1291 = vmul.f32 %v1265, 1.442695
      %v1292 = vpow.pop %v1291
      %v1293 = vmul.f32 %v1266, 1.442695
      %v1294 = vpow.pop %v1293
      %v1295 = vmul.f32 %v1267, 1.442695
      %v1296 = vpow.pop %v1295
      %v1297 = vmul.f32 %v1268, 1.442695
      %v1298 = vpow.pop %v1297
      %v1299 = vmul.f32 %v1269, 1.442695
      %v1300 = vpow.pop %v1299
      %v1301 = vmul.f32 %v1270, 1.442695
      %v1302 = vpow.pop %v1301
      %1303 = vadd.xlane.f32.xlu0 %v1272
      %v1304 = vpop.xlane.xlu0 %1303
      %1305 = vadd.xlane.f32.xlu0 %v1274
      %v1306 = vpop.xlane.xlu0 %1305
      %1307 = vadd.xlane.f32.xlu0 %v1276
      %v1308 = vpop.xlane.xlu0 %1307
      %1309 = vadd.xlane.f32.xlu0 %v1278
      %v1310 = vpop.xlane.xlu0 %1309
      %1311 = vadd.xlane.f32.xlu0 %v1280
      %v1312 = vpop.xlane.xlu0 %1311
      %1313 = vadd.xlane.f32.xlu0 %v1282
      %v1314 = vpop.xlane.xlu0 %1313
      %1315 = vadd.xlane.f32.xlu0 %v1284
      %v1316 = vpop.xlane.xlu0 %1315
      %1317 = vadd.xlane.f32.xlu0 %v1286
      %v1318 = vpop.xlane.xlu0 %1317
      %1319 = vadd.xlane.f32.xlu0 %v1288
      %v1320 = vpop.xlane.xlu0 %1319
      %1321 = vadd.xlane.f32.xlu0 %v1290
      %v1322 = vpop.xlane.xlu0 %1321
      %1323 = vadd.xlane.f32.xlu0 %v1292
      %v1324 = vpop.xlane.xlu0 %1323
      %1325 = vadd.xlane.f32.xlu0 %v1294
      %v1326 = vpop.xlane.xlu0 %1325
      %1327 = vadd.xlane.f32.xlu0 %v1296
      %v1328 = vpop.xlane.xlu0 %1327
      %1329 = vadd.xlane.f32.xlu0 %v1298
      %v1330 = vpop.xlane.xlu0 %1329
      %1331 = vadd.xlane.f32.xlu0 %v1300
      %v1332 = vpop.xlane.xlu0 %1331
      %1333 = vadd.xlane.f32.xlu0 %v1302
      %v1334 = vpop.xlane.xlu0 %1333
      %v1335 = vrcp.pop %v1304
      %v1336 = vmul.f32 %v1304, %v1335
      %v1337 = vsub.f32 1.0, %v1336
      %v1338 = vmul.f32 %v1335, %v1337
      %v1339 = vadd.f32 %v1335, %v1338
      %vm1340 = vweird.f32 %v1304
      %vm1341 = vweird.f32 %v1335
      %vm1342 = vmor %vm1340, %vm1341
      %v1343 = vsel %vm1342, %v1335, %v1339
      %v1344 = vand.u32 2147483647, %v1304
      %vm1345 = vcmp.eq.f32.partialorder %v1344, 8.507059e+37
      %v1346 = vand.u32 %v1304, 2147483648
      %v1347 = vor.u32 1.1754944e-38, %v1346
      %v1348 = vsel %vm1345, %v1347, %v1343
      %v1349 = vrcp.pop %v1306
      %v1350 = vmul.f32 %v1306, %v1349
      %v1351 = vsub.f32 1.0, %v1350
      %v1352 = vmul.f32 %v1349, %v1351
      %v1353 = vadd.f32 %v1349, %v1352
      %vm1354 = vweird.f32 %v1306
      %vm1355 = vweird.f32 %v1349
      %vm1356 = vmor %vm1354, %vm1355
      %v1357 = vsel %vm1356, %v1349, %v1353
      %v1358 = vand.u32 2147483647, %v1306
      %vm1359 = vcmp.eq.f32.partialorder %v1358, 8.507059e+37
      %v1360 = vand.u32 %v1306, 2147483648
      %v1361 = vor.u32 1.1754944e-38, %v1360
      %v1362 = vsel %vm1359, %v1361, %v1357
      %v1363 = vrcp.pop %v1308
      %v1364 = vmul.f32 %v1308, %v1363
      %v1365 = vsub.f32 1.0, %v1364
      %v1366 = vmul.f32 %v1363, %v1365
      %v1367 = vadd.f32 %v1363, %v1366
      %vm1368 = vweird.f32 %v1308
      %vm1369 = vweird.f32 %v1363
      %vm1370 = vmor %vm1368, %vm1369
      %v1371 = vsel %vm1370, %v1363, %v1367
      %v1372 = vand.u32 2147483647, %v1308
      %vm1373 = vcmp.eq.f32.partialorder %v1372, 8.507059e+37
      %v1374 = vand.u32 %v1308, 2147483648
      %v1375 = vor.u32 1.1754944e-38, %v1374
      %v1376 = vsel %vm1373, %v1375, %v1371
      %v1377 = vrcp.pop %v1310
      %v1378 = vmul.f32 %v1310, %v1377
      %v1379 = vsub.f32 1.0, %v1378
      %v1380 = vmul.f32 %v1377, %v1379
      %v1381 = vadd.f32 %v1377, %v1380
      %vm1382 = vweird.f32 %v1310
      %vm1383 = vweird.f32 %v1377
      %vm1384 = vmor %vm1382, %vm1383
      %v1385 = vsel %vm1384, %v1377, %v1381
      %v1386 = vand.u32 2147483647, %v1310
      %vm1387 = vcmp.eq.f32.partialorder %v1386, 8.507059e+37
      %v1388 = vand.u32 %v1310, 2147483648
      %v1389 = vor.u32 1.1754944e-38, %v1388
      %v1390 = vsel %vm1387, %v1389, %v1385
      %v1391 = vrcp.pop %v1312
      %v1392 = vmul.f32 %v1312, %v1391
      %v1393 = vsub.f32 1.0, %v1392
      %v1394 = vmul.f32 %v1391, %v1393
      %v1395 = vadd.f32 %v1391, %v1394
      %vm1396 = vweird.f32 %v1312
      %vm1397 = vweird.f32 %v1391
      %vm1398 = vmor %vm1396, %vm1397
      %v1399 = vsel %vm1398, %v1391, %v1395
      %v1400 = vand.u32 2147483647, %v1312
      %vm1401 = vcmp.eq.f32.partialorder %v1400, 8.507059e+37
      %v1402 = vand.u32 %v1312, 2147483648
      %v1403 = vor.u32 1.1754944e-38, %v1402
      %v1404 = vsel %vm1401, %v1403, %v1399
      %v1405 = vrcp.pop %v1314
      %v1406 = vmul.f32 %v1314, %v1405
      %v1407 = vsub.f32 1.0, %v1406
      %v1408 = vmul.f32 %v1405, %v1407
      %v1409 = vadd.f32 %v1405, %v1408
      %vm1410 = vweird.f32 %v1314
      %vm1411 = vweird.f32 %v1405
      %vm1412 = vmor %vm1410, %vm1411
      %v1413 = vsel %vm1412, %v1405, %v1409
      %v1414 = vand.u32 2147483647, %v1314
      %vm1415 = vcmp.eq.f32.partialorder %v1414, 8.507059e+37
      %v1416 = vand.u32 %v1314, 2147483648
      %v1417 = vor.u32 1.1754944e-38, %v1416
      %v1418 = vsel %vm1415, %v1417, %v1413
      %v1419 = vrcp.pop %v1316
      %v1420 = vmul.f32 %v1316, %v1419
      %v1421 = vsub.f32 1.0, %v1420
      %v1422 = vmul.f32 %v1419, %v1421
      %v1423 = vadd.f32 %v1419, %v1422
      %vm1424 = vweird.f32 %v1316
      %vm1425 = vweird.f32 %v1419
      %vm1426 = vmor %vm1424, %vm1425
      %v1427 = vsel %vm1426, %v1419, %v1423
      %v1428 = vand.u32 2147483647, %v1316
      %vm1429 = vcmp.eq.f32.partialorder %v1428, 8.507059e+37
      %v1430 = vand.u32 %v1316, 2147483648
      %v1431 = vor.u32 1.1754944e-38, %v1430
      %v1432 = vsel %vm1429, %v1431, %v1427
      %v1433 = vrcp.pop %v1318
      %v1434 = vmul.f32 %v1318, %v1433
      %v1435 = vsub.f32 1.0, %v1434
      %v1436 = vmul.f32 %v1433, %v1435
      %v1437 = vadd.f32 %v1433, %v1436
      %vm1438 = vweird.f32 %v1318
      %vm1439 = vweird.f32 %v1433
      %vm1440 = vmor %vm1438, %vm1439
      %v1441 = vsel %vm1440, %v1433, %v1437
      %v1442 = vand.u32 2147483647, %v1318
      %vm1443 = vcmp.eq.f32.partialorder %v1442, 8.507059e+37
      %v1444 = vand.u32 %v1318, 2147483648
      %v1445 = vor.u32 1.1754944e-38, %v1444
      %v1446 = vsel %vm1443, %v1445, %v1441
      %v1447 = vrcp.pop %v1320
      %v1448 = vmul.f32 %v1320, %v1447
      %v1449 = vsub.f32 1.0, %v1448
      %v1450 = vmul.f32 %v1447, %v1449
      %v1451 = vadd.f32 %v1447, %v1450
      %vm1452 = vweird.f32 %v1320
      %vm1453 = vweird.f32 %v1447
      %vm1454 = vmor %vm1452, %vm1453
      %v1455 = vsel %vm1454, %v1447, %v1451
      %v1456 = vand.u32 2147483647, %v1320
      %vm1457 = vcmp.eq.f32.partialorder %v1456, 8.507059e+37
      %v1458 = vand.u32 %v1320, 2147483648
      %v1459 = vor.u32 1.1754944e-38, %v1458
      %v1460 = vsel %vm1457, %v1459, %v1455
      %v1461 = vrcp.pop %v1322
      %v1462 = vmul.f32 %v1322, %v1461
      %v1463 = vsub.f32 1.0, %v1462
      %v1464 = vmul.f32 %v1461, %v1463
      %v1465 = vadd.f32 %v1461, %v1464
      %vm1466 = vweird.f32 %v1322
      %vm1467 = vweird.f32 %v1461
      %vm1468 = vmor %vm1466, %vm1467
      %v1469 = vsel %vm1468, %v1461, %v1465
      %v1470 = vand.u32 2147483647, %v1322
      %vm1471 = vcmp.eq.f32.partialorder %v1470, 8.507059e+37
      %v1472 = vand.u32 %v1322, 2147483648
      %v1473 = vor.u32 1.1754944e-38, %v1472
      %v1474 = vsel %vm1471, %v1473, %v1469
      %v1475 = vrcp.pop %v1324
      %v1476 = vmul.f32 %v1324, %v1475
      %v1477 = vsub.f32 1.0, %v1476
      %v1478 = vmul.f32 %v1475, %v1477
      %v1479 = vadd.f32 %v1475, %v1478
      %vm1480 = vweird.f32 %v1324
      %vm1481 = vweird.f32 %v1475
      %vm1482 = vmor %vm1480, %vm1481
      %v1483 = vsel %vm1482, %v1475, %v1479
      %v1484 = vand.u32 2147483647, %v1324
      %vm1485 = vcmp.eq.f32.partialorder %v1484, 8.507059e+37
      %v1486 = vand.u32 %v1324, 2147483648
      %v1487 = vor.u32 1.1754944e-38, %v1486
      %v1488 = vsel %vm1485, %v1487, %v1483
      %v1489 = vrcp.pop %v1326
      %v1490 = vmul.f32 %v1326, %v1489
      %v1491 = vsub.f32 1.0, %v1490
      %v1492 = vmul.f32 %v1489, %v1491
      %v1493 = vadd.f32 %v1489, %v1492
      %vm1494 = vweird.f32 %v1326
      %vm1495 = vweird.f32 %v1489
      %vm1496 = vmor %vm1494, %vm1495
      %v1497 = vsel %vm1496, %v1489, %v1493
      %v1498 = vand.u32 2147483647, %v1326
      %vm1499 = vcmp.eq.f32.partialorder %v1498, 8.507059e+37
      %v1500 = vand.u32 %v1326, 2147483648
      %v1501 = vor.u32 1.1754944e-38, %v1500
      %v1502 = vsel %vm1499, %v1501, %v1497
      %v1503 = vrcp.pop %v1328
      %v1504 = vmul.f32 %v1328, %v1503
      %v1505 = vsub.f32 1.0, %v1504
      %v1506 = vmul.f32 %v1503, %v1505
      %v1507 = vadd.f32 %v1503, %v1506
      %vm1508 = vweird.f32 %v1328
      %vm1509 = vweird.f32 %v1503
      %vm1510 = vmor %vm1508, %vm1509
      %v1511 = vsel %vm1510, %v1503, %v1507
      %v1512 = vand.u32 2147483647, %v1328
      %vm1513 = vcmp.eq.f32.partialorder %v1512, 8.507059e+37
      %v1514 = vand.u32 %v1328, 2147483648
      %v1515 = vor.u32 1.1754944e-38, %v1514
      %v1516 = vsel %vm1513, %v1515, %v1511
      %v1517 = vrcp.pop %v1330
      %v1518 = vmul.f32 %v1330, %v1517
      %v1519 = vsub.f32 1.0, %v1518
      %v1520 = vmul.f32 %v1517, %v1519
      %v1521 = vadd.f32 %v1517, %v1520
      %vm1522 = vweird.f32 %v1330
      %vm1523 = vweird.f32 %v1517
      %vm1524 = vmor %vm1522, %vm1523
      %v1525 = vsel %vm1524, %v1517, %v1521
      %v1526 = vand.u32 2147483647, %v1330
      %vm1527 = vcmp.eq.f32.partialorder %v1526, 8.507059e+37
      %v1528 = vand.u32 %v1330, 2147483648
      %v1529 = vor.u32 1.1754944e-38, %v1528
      %v1530 = vsel %vm1527, %v1529, %v1525
      %v1531 = vrcp.pop %v1332
      %v1532 = vmul.f32 %v1332, %v1531
      %v1533 = vsub.f32 1.0, %v1532
      %v1534 = vmul.f32 %v1531, %v1533
      %v1535 = vadd.f32 %v1531, %v1534
      %vm1536 = vweird.f32 %v1332
      %vm1537 = vweird.f32 %v1531
      %vm1538 = vmor %vm1536, %vm1537
      %v1539 = vsel %vm1538, %v1531, %v1535
      %v1540 = vand.u32 2147483647, %v1332
      %vm1541 = vcmp.eq.f32.partialorder %v1540, 8.507059e+37
      %v1542 = vand.u32 %v1332, 2147483648
      %v1543 = vor.u32 1.1754944e-38, %v1542
      %v1544 = vsel %vm1541, %v1543, %v1539
      %v1545 = vrcp.pop %v1334
      %v1546 = vmul.f32 %v1334, %v1545
      %v1547 = vsub.f32 1.0, %v1546
      %v1548 = vmul.f32 %v1545, %v1547
      %v1549 = vadd.f32 %v1545, %v1548
      %vm1550 = vweird.f32 %v1334
      %vm1551 = vweird.f32 %v1545
      %vm1552 = vmor %vm1550, %vm1551
      %v1553 = vsel %vm1552, %v1545, %v1549
      %v1554 = vand.u32 2147483647, %v1334
      %vm1555 = vcmp.eq.f32.partialorder %v1554, 8.507059e+37
      %v1556 = vand.u32 %v1334, 2147483648
      %v1557 = vor.u32 1.1754944e-38, %v1556
      %v1558 = vsel %vm1555, %v1557, %v1553
      %v1559 = vmul.f32 %v1272, %v1348
      %v1560 = vmul.f32 %v1274, %v1362
      %v1561 = vmul.f32 %v1276, %v1376
      %v1562 = vmul.f32 %v1278, %v1390
      %v1563 = vmul.f32 %v1280, %v1404
      %v1564 = vmul.f32 %v1282, %v1418
      %v1565 = vmul.f32 %v1284, %v1432
      %v1566 = vmul.f32 %v1286, %v1446
      %v1567 = vmul.f32 %v1288, %v1460
      %v1568 = vmul.f32 %v1290, %v1474
      %v1569 = vmul.f32 %v1292, %v1488
      %v1570 = vmul.f32 %v1294, %v1502
      %v1571 = vmul.f32 %v1296, %v1516
      %v1572 = vmul.f32 %v1298, %v1530
      %v1573 = vmul.f32 %v1300, %v1544
      %v1574 = vmul.f32 %v1302, %v1558
      %1575 = vmatpush.xpose.msra.mxu0 %v1574
      %1576 = vmatpush.xpose.msra.mxu0 %v1573
      %1577 = vmatpush.xpose.msra.mxu0 %v1572
      %1578 = vmatpush.xpose.msra.mxu0 %v1571
      %1579 = vmatpush.xpose.msra.mxu0 %v1570
      %1580 = vmatpush.xpose.msra.mxu0 %v1569
      %1581 = vmatpush.xpose.msra.mxu0 %v1568
      %1582 = vmatpush.xpose.msra.mxu0 %v1567
      %1583 = vmatpush.xpose.msra.mxu0 %v1566
      %1584 = vmatpush.xpose.msra.mxu0 %v1565
      %1585 = vmatpush.xpose.msra.mxu0 %v1564
      %1586 = vmatpush.xpose.msra.mxu0 %v1563
      %1587 = vmatpush.xpose.msra.mxu0 %v1562
      %1588 = vmatpush.xpose.msra.mxu0 %v1561
      %1589 = vmatpush.xpose.msra.mxu0 %v1560
      %1590 = vmatpush.xpose.msra.mxu0 %v1559
      %1591 = vmatmul.f32.gmra.mxu0 %v539
      %v1592 = vpop.f32.mrf.mxu0
      %v1593 = vadd.f32 0.0, %v1592
      %1594 = vmatmul.f32.gmra.mxu0 %v542
      %v1595 = vpop.f32.mrf.mxu0
      %v1596 = vadd.f32 0.0, %v1595
      %1597 = vdwg.mxu0
      %1598 = vst [vmem:[#allocation2 + $0x10] sm:$0xff] %v1593
      %1599 = vst [vmem:[#allocation2 + $0x18] sm:$0xff] %v1596
      %1600 = vxpose.xlu0.b32.start [1/16] %v399, 128
      %1601 = vxpose.xlu0.b32.cont [2/16] %v402, 128
      %1602 = vxpose.xlu0.b32.cont [3/16] 0.0, 128
      %1603 = vxpose.xlu0.b32.cont [4/16] 0.0, 128
      %1604 = vxpose.xlu0.b32.cont [5/16] 0.0, 128
      %1605 = vxpose.xlu0.b32.cont [6/16] 0.0, 128
      %1606 = vxpose.xlu0.b32.cont [7/16] 0.0, 128
      %1607 = vxpose.xlu0.b32.cont [8/16] 0.0, 128
      %1608 = vxpose.xlu0.b32.cont [9/16] 0.0, 128
      %1609 = vxpose.xlu0.b32.cont [10/16] 0.0, 128
      %1610 = vxpose.xlu0.b32.cont [11/16] 0.0, 128
      %1611 = vxpose.xlu0.b32.cont [12/16] 0.0, 128
      %1612 = vxpose.xlu0.b32.cont [13/16] 0.0, 128
      %1613 = vxpose.xlu0.b32.cont [14/16] 0.0, 128
      %1614 = vxpose.xlu0.b32.cont [15/16] 0.0, 128
      %1615 = vxpose.xlu0.b32.end [16/16] 0.0, 128
      %v1616 = vpop.trf.xlu0
      %v1617 = vpop.trf.xlu0
      %v1618 = vpop.trf.xlu0
      %v1619 = vpop.trf.xlu0
      %v1620 = vpop.trf.xlu0
      %v1621 = vpop.trf.xlu0
      %v1622 = vpop.trf.xlu0
      %v1623 = vpop.trf.xlu0
      %v1624 = vpop.trf.xlu0
      %v1625 = vpop.trf.xlu0
      %v1626 = vpop.trf.xlu0
      %v1627 = vpop.trf.xlu0
      %v1628 = vpop.trf.xlu0
      %v1629 = vpop.trf.xlu0
      %v1630 = vpop.trf.xlu0
      %v1631 = vpop.trf.xlu0
      %v1633 = vsel %vm344, %v1616, 0
      %v1636 = vsel %vm344, %v1617, 0
      %v1639 = vsel %vm344, %v1618, 0
      %v1642 = vsel %vm344, %v1619, 0
      %v1645 = vsel %vm344, %v1620, 0
      %v1648 = vsel %vm344, %v1621, 0
      %v1651 = vsel %vm344, %v1622, 0
      %v1654 = vsel %vm344, %v1623, 0
      %v1657 = vsel %vm344, %v1624, 0
      %v1660 = vsel %vm344, %v1625, 0
      %v1663 = vsel %vm344, %v1626, 0
      %v1666 = vsel %vm344, %v1627, 0
      %v1669 = vsel %vm344, %v1628, 0
      %v1672 = vsel %vm344, %v1629, 0
      %v1675 = vsel %vm344, %v1630, 0
      %v1678 = vsel %vm344, %v1631, 0
      %1680 = vmatpush.msra.mxu0 0.0
      %1681 = vmatpush.msra.mxu0 0.0
      %1682 = vmatpush.msra.mxu0 0.0
      %1683 = vmatpush.msra.mxu0 0.0
      %1684 = vmatpush.msra.mxu0 0.0
      %1685 = vmatpush.msra.mxu0 0.0
      %1686 = vmatpush.msra.mxu0 0.0
      %1687 = vmatpush.msra.mxu0 0.0
      %1688 = vmatpush.msra.mxu0 0.0
      %1689 = vmatpush.msra.mxu0 0.0
      %1690 = vmatpush.msra.mxu0 0.0
      %1691 = vmatpush.msra.mxu0 0.0
      %1692 = vmatpush.msra.mxu0 0.0
      %1693 = vmatpush.msra.mxu0 0.0
      %1694 = vmatpush.msra.mxu0 %v475
      %1695 = vmatpush.msra.mxu0 %v472
      %1696 = vmatmul.f32.gmra.mxu0 %v1633
      %v1697 = vpop.f32.mrf.mxu0
      %v1698 = vadd.f32 0.0, %v1697
      %1699 = vmatmul.f32.gmra.mxu0 %v1636
      %v1700 = vpop.f32.mrf.mxu0
      %v1701 = vadd.f32 0.0, %v1700
      %1702 = vmatmul.f32.gmra.mxu0 %v1639
      %v1703 = vpop.f32.mrf.mxu0
      %v1704 = vadd.f32 0.0, %v1703
      %1705 = vmatmul.f32.gmra.mxu0 %v1642
      %v1706 = vpop.f32.mrf.mxu0
      %v1707 = vadd.f32 0.0, %v1706
      %1708 = vmatmul.f32.gmra.mxu0 %v1645
      %v1709 = vpop.f32.mrf.mxu0
      %v1710 = vadd.f32 0.0, %v1709
      %1711 = vmatmul.f32.gmra.mxu0 %v1648
      %v1712 = vpop.f32.mrf.mxu0
      %v1713 = vadd.f32 0.0, %v1712
      %1714 = vmatmul.f32.gmra.mxu0 %v1651
      %v1715 = vpop.f32.mrf.mxu0
      %v1716 = vadd.f32 0.0, %v1715
      %1717 = vmatmul.f32.gmra.mxu0 %v1654
      %v1718 = vpop.f32.mrf.mxu0
      %v1719 = vadd.f32 0.0, %v1718
      %1720 = vmatmul.f32.gmra.mxu0 %v1657
      %v1721 = vpop.f32.mrf.mxu0
      %v1722 = vadd.f32 0.0, %v1721
      %1723 = vmatmul.f32.gmra.mxu0 %v1660
      %v1724 = vpop.f32.mrf.mxu0
      %v1725 = vadd.f32 0.0, %v1724
      %1726 = vmatmul.f32.gmra.mxu0 %v1663
      %v1727 = vpop.f32.mrf.mxu0
      %v1728 = vadd.f32 0.0, %v1727
      %1729 = vmatmul.f32.gmra.mxu0 %v1666
      %v1730 = vpop.f32.mrf.mxu0
      %v1731 = vadd.f32 0.0, %v1730
      %1732 = vmatmul.f32.gmra.mxu0 %v1669
      %v1733 = vpop.f32.mrf.mxu0
      %v1734 = vadd.f32 0.0, %v1733
      %1735 = vmatmul.f32.gmra.mxu0 %v1672
      %v1736 = vpop.f32.mrf.mxu0
      %v1737 = vadd.f32 0.0, %v1736
      %1738 = vmatmul.f32.gmra.mxu0 %v1675
      %v1739 = vpop.f32.mrf.mxu0
      %v1740 = vadd.f32 0.0, %v1739
      %1741 = vmatmul.f32.gmra.mxu0 %v1678
      %v1742 = vpop.f32.mrf.mxu0
      %v1743 = vadd.f32 0.0, %v1742
      %1744 = vdwg.mxu0
      %1745 = vmax.xlane.f32.xlu0 %v1698
      %v1746 = vpop.xlane.xlu0 %1745
      %1747 = vmax.xlane.f32.xlu0 %v1701
      %v1748 = vpop.xlane.xlu0 %1747
      %1749 = vmax.xlane.f32.xlu0 %v1704
      %v1750 = vpop.xlane.xlu0 %1749
      %1751 = vmax.xlane.f32.xlu0 %v1707
      %v1752 = vpop.xlane.xlu0 %1751
      %1753 = vmax.xlane.f32.xlu0 %v1710
      %v1754 = vpop.xlane.xlu0 %1753
      %1755 = vmax.xlane.f32.xlu0 %v1713
      %v1756 = vpop.xlane.xlu0 %1755
      %1757 = vmax.xlane.f32.xlu0 %v1716
      %v1758 = vpop.xlane.xlu0 %1757
      %1759 = vmax.xlane.f32.xlu0 %v1719
      %v1760 = vpop.xlane.xlu0 %1759
      %1761 = vmax.xlane.f32.xlu0 %v1722
      %v1762 = vpop.xlane.xlu0 %1761
      %1763 = vmax.xlane.f32.xlu0 %v1725
      %v1764 = vpop.xlane.xlu0 %1763
      %1765 = vmax.xlane.f32.xlu0 %v1728
      %v1766 = vpop.xlane.xlu0 %1765
      %1767 = vmax.xlane.f32.xlu0 %v1731
      %v1768 = vpop.xlane.xlu0 %1767
      %1769 = vmax.xlane.f32.xlu0 %v1734
      %v1770 = vpop.xlane.xlu0 %1769
      %1771 = vmax.xlane.f32.xlu0 %v1737
      %v1772 = vpop.xlane.xlu0 %1771
      %1773 = vmax.xlane.f32.xlu0 %v1740
      %v1774 = vpop.xlane.xlu0 %1773
      %1775 = vmax.xlane.f32.xlu0 %v1743
      %v1776 = vpop.xlane.xlu0 %1775
      %v1777 = vsub.f32 %v1698, %v1746
      %v1778 = vsub.f32 %v1701, %v1748
      %v1779 = vsub.f32 %v1704, %v1750
      %v1780 = vsub.f32 %v1707, %v1752
      %v1781 = vsub.f32 %v1710, %v1754
      %v1782 = vsub.f32 %v1713, %v1756
      %v1783 = vsub.f32 %v1716, %v1758
      %v1784 = vsub.f32 %v1719, %v1760
      %v1785 = vsub.f32 %v1722, %v1762
      %v1786 = vsub.f32 %v1725, %v1764
      %v1787 = vsub.f32 %v1728, %v1766
      %v1788 = vsub.f32 %v1731, %v1768
      %v1789 = vsub.f32 %v1734, %v1770
      %v1790 = vsub.f32 %v1737, %v1772
      %v1791 = vsub.f32 %v1740, %v1774
      %v1792 = vsub.f32 %v1743, %v1776
      %v1793 = vmul.f32 %v1777, 1.442695
      %v1794 = vpow.pop %v1793
      %v1795 = vmul.f32 %v1778, 1.442695
      %v1796 = vpow.pop %v1795
      %v1797 = vmul.f32 %v1779, 1.442695
      %v1798 = vpow.pop %v1797
      %v1799 = vmul.f32 %v1780, 1.442695
      %v1800 = vpow.pop %v1799
      %v1801 = vmul.f32 %v1781, 1.442695
      %v1802 = vpow.pop %v1801
      %v1803 = vmul.f32 %v1782, 1.442695
      %v1804 = vpow.pop %v1803
      %v1805 = vmul.f32 %v1783, 1.442695
      %v1806 = vpow.pop %v1805
      %v1807 = vmul.f32 %v1784, 1.442695
      %v1808 = vpow.pop %v1807
      %v1809 = vmul.f32 %v1785, 1.442695
      %v1810 = vpow.pop %v1809
      %v1811 = vmul.f32 %v1786, 1.442695
      %v1812 = vpow.pop %v1811
      %v1813 = vmul.f32 %v1787, 1.442695
      %v1814 = vpow.pop %v1813
      %v1815 = vmul.f32 %v1788, 1.442695
      %v1816 = vpow.pop %v1815
      %v1817 = vmul.f32 %v1789, 1.442695
      %v1818 = vpow.pop %v1817
      %v1819 = vmul.f32 %v1790, 1.442695
      %v1820 = vpow.pop %v1819
      %v1821 = vmul.f32 %v1791, 1.442695
      %v1822 = vpow.pop %v1821
      %v1823 = vmul.f32 %v1792, 1.442695
      %v1824 = vpow.pop %v1823
      %1825 = vadd.xlane.f32.xlu0 %v1794
      %v1826 = vpop.xlane.xlu0 %1825
      %1827 = vadd.xlane.f32.xlu0 %v1796
      %v1828 = vpop.xlane.xlu0 %1827
      %1829 = vadd.xlane.f32.xlu0 %v1798
      %v1830 = vpop.xlane.xlu0 %1829
      %1831 = vadd.xlane.f32.xlu0 %v1800
      %v1832 = vpop.xlane.xlu0 %1831
      %1833 = vadd.xlane.f32.xlu0 %v1802
      %v1834 = vpop.xlane.xlu0 %1833
      %1835 = vadd.xlane.f32.xlu0 %v1804
      %v1836 = vpop.xlane.xlu0 %1835
      %1837 = vadd.xlane.f32.xlu0 %v1806
      %v1838 = vpop.xlane.xlu0 %1837
      %1839 = vadd.xlane.f32.xlu0 %v1808
      %v1840 = vpop.xlane.xlu0 %1839
      %1841 = vadd.xlane.f32.xlu0 %v1810
      %v1842 = vpop.xlane.xlu0 %1841
      %1843 = vadd.xlane.f32.xlu0 %v1812
      %v1844 = vpop.xlane.xlu0 %1843
      %1845 = vadd.xlane.f32.xlu0 %v1814
      %v1846 = vpop.xlane.xlu0 %1845
      %1847 = vadd.xlane.f32.xlu0 %v1816
      %v1848 = vpop.xlane.xlu0 %1847
      %1849 = vadd.xlane.f32.xlu0 %v1818
      %v1850 = vpop.xlane.xlu0 %1849
      %1851 = vadd.xlane.f32.xlu0 %v1820
      %v1852 = vpop.xlane.xlu0 %1851
      %1853 = vadd.xlane.f32.xlu0 %v1822
      %v1854 = vpop.xlane.xlu0 %1853
      %1855 = vadd.xlane.f32.xlu0 %v1824
      %v1856 = vpop.xlane.xlu0 %1855
      %v1857 = vrcp.pop %v1826
      %v1858 = vmul.f32 %v1826, %v1857
      %v1859 = vsub.f32 1.0, %v1858
      %v1860 = vmul.f32 %v1857, %v1859
      %v1861 = vadd.f32 %v1857, %v1860
      %vm1862 = vweird.f32 %v1826
      %vm1863 = vweird.f32 %v1857
      %vm1864 = vmor %vm1862, %vm1863
      %v1865 = vsel %vm1864, %v1857, %v1861
      %v1866 = vand.u32 2147483647, %v1826
      %vm1867 = vcmp.eq.f32.partialorder %v1866, 8.507059e+37
      %v1868 = vand.u32 %v1826, 2147483648
      %v1869 = vor.u32 1.1754944e-38, %v1868
      %v1870 = vsel %vm1867, %v1869, %v1865
      %v1871 = vrcp.pop %v1828
      %v1872 = vmul.f32 %v1828, %v1871
      %v1873 = vsub.f32 1.0, %v1872
      %v1874 = vmul.f32 %v1871, %v1873
      %v1875 = vadd.f32 %v1871, %v1874
      %vm1876 = vweird.f32 %v1828
      %vm1877 = vweird.f32 %v1871
      %vm1878 = vmor %vm1876, %vm1877
      %v1879 = vsel %vm1878, %v1871, %v1875
      %v1880 = vand.u32 2147483647, %v1828
      %vm1881 = vcmp.eq.f32.partialorder %v1880, 8.507059e+37
      %v1882 = vand.u32 %v1828, 2147483648
      %v1883 = vor.u32 1.1754944e-38, %v1882
      %v1884 = vsel %vm1881, %v1883, %v1879
      %v1885 = vrcp.pop %v1830
      %v1886 = vmul.f32 %v1830, %v1885
      %v1887 = vsub.f32 1.0, %v1886
      %v1888 = vmul.f32 %v1885, %v1887
      %v1889 = vadd.f32 %v1885, %v1888
      %vm1890 = vweird.f32 %v1830
      %vm1891 = vweird.f32 %v1885
      %vm1892 = vmor %vm1890, %vm1891
      %v1893 = vsel %vm1892, %v1885, %v1889
      %v1894 = vand.u32 2147483647, %v1830
      %vm1895 = vcmp.eq.f32.partialorder %v1894, 8.507059e+37
      %v1896 = vand.u32 %v1830, 2147483648
      %v1897 = vor.u32 1.1754944e-38, %v1896
      %v1898 = vsel %vm1895, %v1897, %v1893
      %v1899 = vrcp.pop %v1832
      %v1900 = vmul.f32 %v1832, %v1899
      %v1901 = vsub.f32 1.0, %v1900
      %v1902 = vmul.f32 %v1899, %v1901
      %v1903 = vadd.f32 %v1899, %v1902
      %vm1904 = vweird.f32 %v1832
      %vm1905 = vweird.f32 %v1899
      %vm1906 = vmor %vm1904, %vm1905
      %v1907 = vsel %vm1906, %v1899, %v1903
      %v1908 = vand.u32 2147483647, %v1832
      %vm1909 = vcmp.eq.f32.partialorder %v1908, 8.507059e+37
      %v1910 = vand.u32 %v1832, 2147483648
      %v1911 = vor.u32 1.1754944e-38, %v1910
      %v1912 = vsel %vm1909, %v1911, %v1907
      %v1913 = vrcp.pop %v1834
      %v1914 = vmul.f32 %v1834, %v1913
      %v1915 = vsub.f32 1.0, %v1914
      %v1916 = vmul.f32 %v1913, %v1915
      %v1917 = vadd.f32 %v1913, %v1916
      %vm1918 = vweird.f32 %v1834
      %vm1919 = vweird.f32 %v1913
      %vm1920 = vmor %vm1918, %vm1919
      %v1921 = vsel %vm1920, %v1913, %v1917
      %v1922 = vand.u32 2147483647, %v1834
      %vm1923 = vcmp.eq.f32.partialorder %v1922, 8.507059e+37
      %v1924 = vand.u32 %v1834, 2147483648
      %v1925 = vor.u32 1.1754944e-38, %v1924
      %v1926 = vsel %vm1923, %v1925, %v1921
      %v1927 = vrcp.pop %v1836
      %v1928 = vmul.f32 %v1836, %v1927
      %v1929 = vsub.f32 1.0, %v1928
      %v1930 = vmul.f32 %v1927, %v1929
      %v1931 = vadd.f32 %v1927, %v1930
      %vm1932 = vweird.f32 %v1836
      %vm1933 = vweird.f32 %v1927
      %vm1934 = vmor %vm1932, %vm1933
      %v1935 = vsel %vm1934, %v1927, %v1931
      %v1936 = vand.u32 2147483647, %v1836
      %vm1937 = vcmp.eq.f32.partialorder %v1936, 8.507059e+37
      %v1938 = vand.u32 %v1836, 2147483648
      %v1939 = vor.u32 1.1754944e-38, %v1938
      %v1940 = vsel %vm1937, %v1939, %v1935
      %v1941 = vrcp.pop %v1838
      %v1942 = vmul.f32 %v1838, %v1941
      %v1943 = vsub.f32 1.0, %v1942
      %v1944 = vmul.f32 %v1941, %v1943
      %v1945 = vadd.f32 %v1941, %v1944
      %vm1946 = vweird.f32 %v1838
      %vm1947 = vweird.f32 %v1941
      %vm1948 = vmor %vm1946, %vm1947
      %v1949 = vsel %vm1948, %v1941, %v1945
      %v1950 = vand.u32 2147483647, %v1838
      %vm1951 = vcmp.eq.f32.partialorder %v1950, 8.507059e+37
      %v1952 = vand.u32 %v1838, 2147483648
      %v1953 = vor.u32 1.1754944e-38, %v1952
      %v1954 = vsel %vm1951, %v1953, %v1949
      %v1955 = vrcp.pop %v1840
      %v1956 = vmul.f32 %v1840, %v1955
      %v1957 = vsub.f32 1.0, %v1956
      %v1958 = vmul.f32 %v1955, %v1957
      %v1959 = vadd.f32 %v1955, %v1958
      %vm1960 = vweird.f32 %v1840
      %vm1961 = vweird.f32 %v1955
      %vm1962 = vmor %vm1960, %vm1961
      %v1963 = vsel %vm1962, %v1955, %v1959
      %v1964 = vand.u32 2147483647, %v1840
      %vm1965 = vcmp.eq.f32.partialorder %v1964, 8.507059e+37
      %v1966 = vand.u32 %v1840, 2147483648
      %v1967 = vor.u32 1.1754944e-38, %v1966
      %v1968 = vsel %vm1965, %v1967, %v1963
      %v1969 = vrcp.pop %v1842
      %v1970 = vmul.f32 %v1842, %v1969
      %v1971 = vsub.f32 1.0, %v1970
      %v1972 = vmul.f32 %v1969, %v1971
      %v1973 = vadd.f32 %v1969, %v1972
      %vm1974 = vweird.f32 %v1842
      %vm1975 = vweird.f32 %v1969
      %vm1976 = vmor %vm1974, %vm1975
      %v1977 = vsel %vm1976, %v1969, %v1973
      %v1978 = vand.u32 2147483647, %v1842
      %vm1979 = vcmp.eq.f32.partialorder %v1978, 8.507059e+37
      %v1980 = vand.u32 %v1842, 2147483648
      %v1981 = vor.u32 1.1754944e-38, %v1980
      %v1982 = vsel %vm1979, %v1981, %v1977
      %v1983 = vrcp.pop %v1844
      %v1984 = vmul.f32 %v1844, %v1983
      %v1985 = vsub.f32 1.0, %v1984
      %v1986 = vmul.f32 %v1983, %v1985
      %v1987 = vadd.f32 %v1983, %v1986
      %vm1988 = vweird.f32 %v1844
      %vm1989 = vweird.f32 %v1983
      %vm1990 = vmor %vm1988, %vm1989
      %v1991 = vsel %vm1990, %v1983, %v1987
      %v1992 = vand.u32 2147483647, %v1844
      %vm1993 = vcmp.eq.f32.partialorder %v1992, 8.507059e+37
      %v1994 = vand.u32 %v1844, 2147483648
      %v1995 = vor.u32 1.1754944e-38, %v1994
      %v1996 = vsel %vm1993, %v1995, %v1991
      %v1997 = vrcp.pop %v1846
      %v1998 = vmul.f32 %v1846, %v1997
      %v1999 = vsub.f32 1.0, %v1998
      %v2000 = vmul.f32 %v1997, %v1999
      %v2001 = vadd.f32 %v1997, %v2000
      %vm2002 = vweird.f32 %v1846
      %vm2003 = vweird.f32 %v1997
      %vm2004 = vmor %vm2002, %vm2003
      %v2005 = vsel %vm2004, %v1997, %v2001
      %v2006 = vand.u32 2147483647, %v1846
      %vm2007 = vcmp.eq.f32.partialorder %v2006, 8.507059e+37
      %v2008 = vand.u32 %v1846, 2147483648
      %v2009 = vor.u32 1.1754944e-38, %v2008
      %v2010 = vsel %vm2007, %v2009, %v2005
      %v2011 = vrcp.pop %v1848
      %v2012 = vmul.f32 %v1848, %v2011
      %v2013 = vsub.f32 1.0, %v2012
      %v2014 = vmul.f32 %v2011, %v2013
      %v2015 = vadd.f32 %v2011, %v2014
      %vm2016 = vweird.f32 %v1848
      %vm2017 = vweird.f32 %v2011
      %vm2018 = vmor %vm2016, %vm2017
      %v2019 = vsel %vm2018, %v2011, %v2015
      %v2020 = vand.u32 2147483647, %v1848
      %vm2021 = vcmp.eq.f32.partialorder %v2020, 8.507059e+37
      %v2022 = vand.u32 %v1848, 2147483648
      %v2023 = vor.u32 1.1754944e-38, %v2022
      %v2024 = vsel %vm2021, %v2023, %v2019
      %v2025 = vrcp.pop %v1850
      %v2026 = vmul.f32 %v1850, %v2025
      %v2027 = vsub.f32 1.0, %v2026
      %v2028 = vmul.f32 %v2025, %v2027
      %v2029 = vadd.f32 %v2025, %v2028
      %vm2030 = vweird.f32 %v1850
      %vm2031 = vweird.f32 %v2025
      %vm2032 = vmor %vm2030, %vm2031
      %v2033 = vsel %vm2032, %v2025, %v2029
      %v2034 = vand.u32 2147483647, %v1850
      %vm2035 = vcmp.eq.f32.partialorder %v2034, 8.507059e+37
      %v2036 = vand.u32 %v1850, 2147483648
      %v2037 = vor.u32 1.1754944e-38, %v2036
      %v2038 = vsel %vm2035, %v2037, %v2033
      %v2039 = vrcp.pop %v1852
      %v2040 = vmul.f32 %v1852, %v2039
      %v2041 = vsub.f32 1.0, %v2040
      %v2042 = vmul.f32 %v2039, %v2041
      %v2043 = vadd.f32 %v2039, %v2042
      %vm2044 = vweird.f32 %v1852
      %vm2045 = vweird.f32 %v2039
      %vm2046 = vmor %vm2044, %vm2045
      %v2047 = vsel %vm2046, %v2039, %v2043
      %v2048 = vand.u32 2147483647, %v1852
      %vm2049 = vcmp.eq.f32.partialorder %v2048, 8.507059e+37
      %v2050 = vand.u32 %v1852, 2147483648
      %v2051 = vor.u32 1.1754944e-38, %v2050
      %v2052 = vsel %vm2049, %v2051, %v2047
      %v2053 = vrcp.pop %v1854
      %v2054 = vmul.f32 %v1854, %v2053
      %v2055 = vsub.f32 1.0, %v2054
      %v2056 = vmul.f32 %v2053, %v2055
      %v2057 = vadd.f32 %v2053, %v2056
      %vm2058 = vweird.f32 %v1854
      %vm2059 = vweird.f32 %v2053
      %vm2060 = vmor %vm2058, %vm2059
      %v2061 = vsel %vm2060, %v2053, %v2057
      %v2062 = vand.u32 2147483647, %v1854
      %vm2063 = vcmp.eq.f32.partialorder %v2062, 8.507059e+37
      %v2064 = vand.u32 %v1854, 2147483648
      %v2065 = vor.u32 1.1754944e-38, %v2064
      %v2066 = vsel %vm2063, %v2065, %v2061
      %v2067 = vrcp.pop %v1856
      %v2068 = vmul.f32 %v1856, %v2067
      %v2069 = vsub.f32 1.0, %v2068
      %v2070 = vmul.f32 %v2067, %v2069
      %v2071 = vadd.f32 %v2067, %v2070
      %vm2072 = vweird.f32 %v1856
      %vm2073 = vweird.f32 %v2067
      %vm2074 = vmor %vm2072, %vm2073
      %v2075 = vsel %vm2074, %v2067, %v2071
      %v2076 = vand.u32 2147483647, %v1856
      %vm2077 = vcmp.eq.f32.partialorder %v2076, 8.507059e+37
      %v2078 = vand.u32 %v1856, 2147483648
      %v2079 = vor.u32 1.1754944e-38, %v2078
      %v2080 = vsel %vm2077, %v2079, %v2075
      %v2081 = vmul.f32 %v1794, %v1870
      %v2082 = vmul.f32 %v1796, %v1884
      %v2083 = vmul.f32 %v1798, %v1898
      %v2084 = vmul.f32 %v1800, %v1912
      %v2085 = vmul.f32 %v1802, %v1926
      %v2086 = vmul.f32 %v1804, %v1940
      %v2087 = vmul.f32 %v1806, %v1954
      %v2088 = vmul.f32 %v1808, %v1968
      %v2089 = vmul.f32 %v1810, %v1982
      %v2090 = vmul.f32 %v1812, %v1996
      %v2091 = vmul.f32 %v1814, %v2010
      %v2092 = vmul.f32 %v1816, %v2024
      %v2093 = vmul.f32 %v1818, %v2038
      %v2094 = vmul.f32 %v1820, %v2052
      %v2095 = vmul.f32 %v1822, %v2066
      %v2096 = vmul.f32 %v1824, %v2080
      %2097 = vmatpush.xpose.msra.mxu0 %v2096
      %2098 = vmatpush.xpose.msra.mxu0 %v2095
      %2099 = vmatpush.xpose.msra.mxu0 %v2094
      %2100 = vmatpush.xpose.msra.mxu0 %v2093
      %2101 = vmatpush.xpose.msra.mxu0 %v2092
      %2102 = vmatpush.xpose.msra.mxu0 %v2091
      %2103 = vmatpush.xpose.msra.mxu0 %v2090
      %2104 = vmatpush.xpose.msra.mxu0 %v2089
      %2105 = vmatpush.xpose.msra.mxu0 %v2088
      %2106 = vmatpush.xpose.msra.mxu0 %v2087
      %2107 = vmatpush.xpose.msra.mxu0 %v2086
      %2108 = vmatpush.xpose.msra.mxu0 %v2085
      %2109 = vmatpush.xpose.msra.mxu0 %v2084
      %2110 = vmatpush.xpose.msra.mxu0 %v2083
      %2111 = vmatpush.xpose.msra.mxu0 %v2082
      %2112 = vmatpush.xpose.msra.mxu0 %v2081
      %2113 = vmatmul.f32.gmra.mxu0 %v545
      %v2114 = vpop.f32.mrf.mxu0
      %v2115 = vadd.f32 0.0, %v2114
      %2116 = vmatmul.f32.gmra.mxu0 %v548
      %v2117 = vpop.f32.mrf.mxu0
      %v2118 = vadd.f32 0.0, %v2117
      %2119 = vdwg.mxu0
      %2120 = vst [vmem:[#allocation2 + $0x20] sm:$0xff] %v2115
      %2121 = vst [vmem:[#allocation2 + $0x28] sm:$0xff] %v2118
      %2122 = vxpose.xlu0.b32.start [1/16] %v405, 128
      %2123 = vxpose.xlu0.b32.cont [2/16] %v408, 128
      %2124 = vxpose.xlu0.b32.cont [3/16] 0.0, 128
      %2125 = vxpose.xlu0.b32.cont [4/16] 0.0, 128
      %2126 = vxpose.xlu0.b32.cont [5/16] 0.0, 128
      %2127 = vxpose.xlu0.b32.cont [6/16] 0.0, 128
      %2128 = vxpose.xlu0.b32.cont [7/16] 0.0, 128
      %2129 = vxpose.xlu0.b32.cont [8/16] 0.0, 128
      %2130 = vxpose.xlu0.b32.cont [9/16] 0.0, 128
      %2131 = vxpose.xlu0.b32.cont [10/16] 0.0, 128
      %2132 = vxpose.xlu0.b32.cont [11/16] 0.0, 128
      %2133 = vxpose.xlu0.b32.cont [12/16] 0.0, 128
      %2134 = vxpose.xlu0.b32.cont [13/16] 0.0, 128
      %2135 = vxpose.xlu0.b32.cont [14/16] 0.0, 128
      %2136 = vxpose.xlu0.b32.cont [15/16] 0.0, 128
      %2137 = vxpose.xlu0.b32.end [16/16] 0.0, 128
      %v2138 = vpop.trf.xlu0
      %v2139 = vpop.trf.xlu0
      %v2140 = vpop.trf.xlu0
      %v2141 = vpop.trf.xlu0
      %v2142 = vpop.trf.xlu0
      %v2143 = vpop.trf.xlu0
      %v2144 = vpop.trf.xlu0
      %v2145 = vpop.trf.xlu0
      %v2146 = vpop.trf.xlu0
      %v2147 = vpop.trf.xlu0
      %v2148 = vpop.trf.xlu0
      %v2149 = vpop.trf.xlu0
      %v2150 = vpop.trf.xlu0
      %v2151 = vpop.trf.xlu0
      %v2152 = vpop.trf.xlu0
      %v2153 = vpop.trf.xlu0
      %v2155 = vsel %vm344, %v2138, 0
      %v2158 = vsel %vm344, %v2139, 0
      %v2161 = vsel %vm344, %v2140, 0
      %v2164 = vsel %vm344, %v2141, 0
      %v2167 = vsel %vm344, %v2142, 0
      %v2170 = vsel %vm344, %v2143, 0
      %v2173 = vsel %vm344, %v2144, 0
      %v2176 = vsel %vm344, %v2145, 0
      %v2179 = vsel %vm344, %v2146, 0
      %v2182 = vsel %vm344, %v2147, 0
      %v2185 = vsel %vm344, %v2148, 0
      %v2188 = vsel %vm344, %v2149, 0
      %v2191 = vsel %vm344, %v2150, 0
      %v2194 = vsel %vm344, %v2151, 0
      %v2197 = vsel %vm344, %v2152, 0
      %v2200 = vsel %vm344, %v2153, 0
      %2202 = vmatpush.msra.mxu0 0.0
      %2203 = vmatpush.msra.mxu0 0.0
      %2204 = vmatpush.msra.mxu0 0.0
      %2205 = vmatpush.msra.mxu0 0.0
      %2206 = vmatpush.msra.mxu0 0.0
      %2207 = vmatpush.msra.mxu0 0.0
      %2208 = vmatpush.msra.mxu0 0.0
      %2209 = vmatpush.msra.mxu0 0.0
      %2210 = vmatpush.msra.mxu0 0.0
      %2211 = vmatpush.msra.mxu0 0.0
      %2212 = vmatpush.msra.mxu0 0.0
      %2213 = vmatpush.msra.mxu0 0.0
      %2214 = vmatpush.msra.mxu0 0.0
      %2215 = vmatpush.msra.mxu0 0.0
      %2216 = vmatpush.msra.mxu0 %v481
      %2217 = vmatpush.msra.mxu0 %v478
      %2218 = vmatmul.f32.gmra.mxu0 %v2155
      %v2219 = vpop.f32.mrf.mxu0
      %v2220 = vadd.f32 0.0, %v2219
      %2221 = vmatmul.f32.gmra.mxu0 %v2158
      %v2222 = vpop.f32.mrf.mxu0
      %v2223 = vadd.f32 0.0, %v2222
      %2224 = vmatmul.f32.gmra.mxu0 %v2161
      %v2225 = vpop.f32.mrf.mxu0
      %v2226 = vadd.f32 0.0, %v2225
      %2227 = vmatmul.f32.gmra.mxu0 %v2164
      %v2228 = vpop.f32.mrf.mxu0
      %v2229 = vadd.f32 0.0, %v2228
      %2230 = vmatmul.f32.gmra.mxu0 %v2167
      %v2231 = vpop.f32.mrf.mxu0
      %v2232 = vadd.f32 0.0, %v2231
      %2233 = vmatmul.f32.gmra.mxu0 %v2170
      %v2234 = vpop.f32.mrf.mxu0
      %v2235 = vadd.f32 0.0, %v2234
      %2236 = vmatmul.f32.gmra.mxu0 %v2173
      %v2237 = vpop.f32.mrf.mxu0
      %v2238 = vadd.f32 0.0, %v2237
      %2239 = vmatmul.f32.gmra.mxu0 %v2176
      %v2240 = vpop.f32.mrf.mxu0
      %v2241 = vadd.f32 0.0, %v2240
      %2242 = vmatmul.f32.gmra.mxu0 %v2179
      %v2243 = vpop.f32.mrf.mxu0
      %v2244 = vadd.f32 0.0, %v2243
      %2245 = vmatmul.f32.gmra.mxu0 %v2182
      %v2246 = vpop.f32.mrf.mxu0
      %v2247 = vadd.f32 0.0, %v2246
      %2248 = vmatmul.f32.gmra.mxu0 %v2185
      %v2249 = vpop.f32.mrf.mxu0
      %v2250 = vadd.f32 0.0, %v2249
      %2251 = vmatmul.f32.gmra.mxu0 %v2188
      %v2252 = vpop.f32.mrf.mxu0
      %v2253 = vadd.f32 0.0, %v2252
      %2254 = vmatmul.f32.gmra.mxu0 %v2191
      %v2255 = vpop.f32.mrf.mxu0
      %v2256 = vadd.f32 0.0, %v2255
      %2257 = vmatmul.f32.gmra.mxu0 %v2194
      %v2258 = vpop.f32.mrf.mxu0
      %v2259 = vadd.f32 0.0, %v2258
      %2260 = vmatmul.f32.gmra.mxu0 %v2197
      %v2261 = vpop.f32.mrf.mxu0
      %v2262 = vadd.f32 0.0, %v2261
      %2263 = vmatmul.f32.gmra.mxu0 %v2200
      %v2264 = vpop.f32.mrf.mxu0
      %v2265 = vadd.f32 0.0, %v2264
      %2266 = vdwg.mxu0
      %2267 = vmax.xlane.f32.xlu0 %v2220
      %v2268 = vpop.xlane.xlu0 %2267
      %2269 = vmax.xlane.f32.xlu0 %v2223
      %v2270 = vpop.xlane.xlu0 %2269
      %2271 = vmax.xlane.f32.xlu0 %v2226
      %v2272 = vpop.xlane.xlu0 %2271
      %2273 = vmax.xlane.f32.xlu0 %v2229
      %v2274 = vpop.xlane.xlu0 %2273
      %2275 = vmax.xlane.f32.xlu0 %v2232
      %v2276 = vpop.xlane.xlu0 %2275
      %2277 = vmax.xlane.f32.xlu0 %v2235
      %v2278 = vpop.xlane.xlu0 %2277
      %2279 = vmax.xlane.f32.xlu0 %v2238
      %v2280 = vpop.xlane.xlu0 %2279
      %2281 = vmax.xlane.f32.xlu0 %v2241
      %v2282 = vpop.xlane.xlu0 %2281
      %2283 = vmax.xlane.f32.xlu0 %v2244
      %v2284 = vpop.xlane.xlu0 %2283
      %2285 = vmax.xlane.f32.xlu0 %v2247
      %v2286 = vpop.xlane.xlu0 %2285
      %2287 = vmax.xlane.f32.xlu0 %v2250
      %v2288 = vpop.xlane.xlu0 %2287
      %2289 = vmax.xlane.f32.xlu0 %v2253
      %v2290 = vpop.xlane.xlu0 %2289
      %2291 = vmax.xlane.f32.xlu0 %v2256
      %v2292 = vpop.xlane.xlu0 %2291
      %2293 = vmax.xlane.f32.xlu0 %v2259
      %v2294 = vpop.xlane.xlu0 %2293
      %2295 = vmax.xlane.f32.xlu0 %v2262
      %v2296 = vpop.xlane.xlu0 %2295
      %2297 = vmax.xlane.f32.xlu0 %v2265
      %v2298 = vpop.xlane.xlu0 %2297
      %v2299 = vsub.f32 %v2220, %v2268
      %v2300 = vsub.f32 %v2223, %v2270
      %v2301 = vsub.f32 %v2226, %v2272
      %v2302 = vsub.f32 %v2229, %v2274
      %v2303 = vsub.f32 %v2232, %v2276
      %v2304 = vsub.f32 %v2235, %v2278
      %v2305 = vsub.f32 %v2238, %v2280
      %v2306 = vsub.f32 %v2241, %v2282
      %v2307 = vsub.f32 %v2244, %v2284
      %v2308 = vsub.f32 %v2247, %v2286
      %v2309 = vsub.f32 %v2250, %v2288
      %v2310 = vsub.f32 %v2253, %v2290
      %v2311 = vsub.f32 %v2256, %v2292
      %v2312 = vsub.f32 %v2259, %v2294
      %v2313 = vsub.f32 %v2262, %v2296
      %v2314 = vsub.f32 %v2265, %v2298
      %v2315 = vmul.f32 %v2299, 1.442695
      %v2316 = vpow.pop %v2315
      %v2317 = vmul.f32 %v2300, 1.442695
      %v2318 = vpow.pop %v2317
      %v2319 = vmul.f32 %v2301, 1.442695
      %v2320 = vpow.pop %v2319
      %v2321 = vmul.f32 %v2302, 1.442695
      %v2322 = vpow.pop %v2321
      %v2323 = vmul.f32 %v2303, 1.442695
      %v2324 = vpow.pop %v2323
      %v2325 = vmul.f32 %v2304, 1.442695
      %v2326 = vpow.pop %v2325
      %v2327 = vmul.f32 %v2305, 1.442695
      %v2328 = vpow.pop %v2327
      %v2329 = vmul.f32 %v2306, 1.442695
      %v2330 = vpow.pop %v2329
      %v2331 = vmul.f32 %v2307, 1.442695
      %v2332 = vpow.pop %v2331
      %v2333 = vmul.f32 %v2308, 1.442695
      %v2334 = vpow.pop %v2333
      %v2335 = vmul.f32 %v2309, 1.442695
      %v2336 = vpow.pop %v2335
      %v2337 = vmul.f32 %v2310, 1.442695
      %v2338 = vpow.pop %v2337
      %v2339 = vmul.f32 %v2311, 1.442695
      %v2340 = vpow.pop %v2339
      %v2341 = vmul.f32 %v2312, 1.442695
      %v2342 = vpow.pop %v2341
      %v2343 = vmul.f32 %v2313, 1.442695
      %v2344 = vpow.pop %v2343
      %v2345 = vmul.f32 %v2314, 1.442695
      %v2346 = vpow.pop %v2345
      %2347 = vadd.xlane.f32.xlu0 %v2316
      %v2348 = vpop.xlane.xlu0 %2347
      %2349 = vadd.xlane.f32.xlu0 %v2318
      %v2350 = vpop.xlane.xlu0 %2349
      %2351 = vadd.xlane.f32.xlu0 %v2320
      %v2352 = vpop.xlane.xlu0 %2351
      %2353 = vadd.xlane.f32.xlu0 %v2322
      %v2354 = vpop.xlane.xlu0 %2353
      %2355 = vadd.xlane.f32.xlu0 %v2324
      %v2356 = vpop.xlane.xlu0 %2355
      %2357 = vadd.xlane.f32.xlu0 %v2326
      %v2358 = vpop.xlane.xlu0 %2357
      %2359 = vadd.xlane.f32.xlu0 %v2328
      %v2360 = vpop.xlane.xlu0 %2359
      %2361 = vadd.xlane.f32.xlu0 %v2330
      %v2362 = vpop.xlane.xlu0 %2361
      %2363 = vadd.xlane.f32.xlu0 %v2332
      %v2364 = vpop.xlane.xlu0 %2363
      %2365 = vadd.xlane.f32.xlu0 %v2334
      %v2366 = vpop.xlane.xlu0 %2365
      %2367 = vadd.xlane.f32.xlu0 %v2336
      %v2368 = vpop.xlane.xlu0 %2367
      %2369 = vadd.xlane.f32.xlu0 %v2338
      %v2370 = vpop.xlane.xlu0 %2369
      %2371 = vadd.xlane.f32.xlu0 %v2340
      %v2372 = vpop.xlane.xlu0 %2371
      %2373 = vadd.xlane.f32.xlu0 %v2342
      %v2374 = vpop.xlane.xlu0 %2373
      %2375 = vadd.xlane.f32.xlu0 %v2344
      %v2376 = vpop.xlane.xlu0 %2375
      %2377 = vadd.xlane.f32.xlu0 %v2346
      %v2378 = vpop.xlane.xlu0 %2377
      %v2379 = vrcp.pop %v2348
      %v2380 = vmul.f32 %v2348, %v2379
      %v2381 = vsub.f32 1.0, %v2380
      %v2382 = vmul.f32 %v2379, %v2381
      %v2383 = vadd.f32 %v2379, %v2382
      %vm2384 = vweird.f32 %v2348
      %vm2385 = vweird.f32 %v2379
      %vm2386 = vmor %vm2384, %vm2385
      %v2387 = vsel %vm2386, %v2379, %v2383
      %v2388 = vand.u32 2147483647, %v2348
      %vm2389 = vcmp.eq.f32.partialorder %v2388, 8.507059e+37
      %v2390 = vand.u32 %v2348, 2147483648
      %v2391 = vor.u32 1.1754944e-38, %v2390
      %v2392 = vsel %vm2389, %v2391, %v2387
      %v2393 = vrcp.pop %v2350
      %v2394 = vmul.f32 %v2350, %v2393
      %v2395 = vsub.f32 1.0, %v2394
      %v2396 = vmul.f32 %v2393, %v2395
      %v2397 = vadd.f32 %v2393, %v2396
      %vm2398 = vweird.f32 %v2350
      %vm2399 = vweird.f32 %v2393
      %vm2400 = vmor %vm2398, %vm2399
      %v2401 = vsel %vm2400, %v2393, %v2397
      %v2402 = vand.u32 2147483647, %v2350
      %vm2403 = vcmp.eq.f32.partialorder %v2402, 8.507059e+37
      %v2404 = vand.u32 %v2350, 2147483648
      %v2405 = vor.u32 1.1754944e-38, %v2404
      %v2406 = vsel %vm2403, %v2405, %v2401
      %v2407 = vrcp.pop %v2352
      %v2408 = vmul.f32 %v2352, %v2407
      %v2409 = vsub.f32 1.0, %v2408
      %v2410 = vmul.f32 %v2407, %v2409
      %v2411 = vadd.f32 %v2407, %v2410
      %vm2412 = vweird.f32 %v2352
      %vm2413 = vweird.f32 %v2407
      %vm2414 = vmor %vm2412, %vm2413
      %v2415 = vsel %vm2414, %v2407, %v2411
      %v2416 = vand.u32 2147483647, %v2352
      %vm2417 = vcmp.eq.f32.partialorder %v2416, 8.507059e+37
      %v2418 = vand.u32 %v2352, 2147483648
      %v2419 = vor.u32 1.1754944e-38, %v2418
      %v2420 = vsel %vm2417, %v2419, %v2415
      %v2421 = vrcp.pop %v2354
      %v2422 = vmul.f32 %v2354, %v2421
      %v2423 = vsub.f32 1.0, %v2422
      %v2424 = vmul.f32 %v2421, %v2423
      %v2425 = vadd.f32 %v2421, %v2424
      %vm2426 = vweird.f32 %v2354
      %vm2427 = vweird.f32 %v2421
      %vm2428 = vmor %vm2426, %vm2427
      %v2429 = vsel %vm2428, %v2421, %v2425
      %v2430 = vand.u32 2147483647, %v2354
      %vm2431 = vcmp.eq.f32.partialorder %v2430, 8.507059e+37
      %v2432 = vand.u32 %v2354, 2147483648
      %v2433 = vor.u32 1.1754944e-38, %v2432
      %v2434 = vsel %vm2431, %v2433, %v2429
      %v2435 = vrcp.pop %v2356
      %v2436 = vmul.f32 %v2356, %v2435
      %v2437 = vsub.f32 1.0, %v2436
      %v2438 = vmul.f32 %v2435, %v2437
      %v2439 = vadd.f32 %v2435, %v2438
      %vm2440 = vweird.f32 %v2356
      %vm2441 = vweird.f32 %v2435
      %vm2442 = vmor %vm2440, %vm2441
      %v2443 = vsel %vm2442, %v2435, %v2439
      %v2444 = vand.u32 2147483647, %v2356
      %vm2445 = vcmp.eq.f32.partialorder %v2444, 8.507059e+37
      %v2446 = vand.u32 %v2356, 2147483648
      %v2447 = vor.u32 1.1754944e-38, %v2446
      %v2448 = vsel %vm2445, %v2447, %v2443
      %v2449 = vrcp.pop %v2358
      %v2450 = vmul.f32 %v2358, %v2449
      %v2451 = vsub.f32 1.0, %v2450
      %v2452 = vmul.f32 %v2449, %v2451
      %v2453 = vadd.f32 %v2449, %v2452
      %vm2454 = vweird.f32 %v2358
      %vm2455 = vweird.f32 %v2449
      %vm2456 = vmor %vm2454, %vm2455
      %v2457 = vsel %vm2456, %v2449, %v2453
      %v2458 = vand.u32 2147483647, %v2358
      %vm2459 = vcmp.eq.f32.partialorder %v2458, 8.507059e+37
      %v2460 = vand.u32 %v2358, 2147483648
      %v2461 = vor.u32 1.1754944e-38, %v2460
      %v2462 = vsel %vm2459, %v2461, %v2457
      %v2463 = vrcp.pop %v2360
      %v2464 = vmul.f32 %v2360, %v2463
      %v2465 = vsub.f32 1.0, %v2464
      %v2466 = vmul.f32 %v2463, %v2465
      %v2467 = vadd.f32 %v2463, %v2466
      %vm2468 = vweird.f32 %v2360
      %vm2469 = vweird.f32 %v2463
      %vm2470 = vmor %vm2468, %vm2469
      %v2471 = vsel %vm2470, %v2463, %v2467
      %v2472 = vand.u32 2147483647, %v2360
      %vm2473 = vcmp.eq.f32.partialorder %v2472, 8.507059e+37
      %v2474 = vand.u32 %v2360, 2147483648
      %v2475 = vor.u32 1.1754944e-38, %v2474
      %v2476 = vsel %vm2473, %v2475, %v2471
      %v2477 = vrcp.pop %v2362
      %v2478 = vmul.f32 %v2362, %v2477
      %v2479 = vsub.f32 1.0, %v2478
      %v2480 = vmul.f32 %v2477, %v2479
      %v2481 = vadd.f32 %v2477, %v2480
      %vm2482 = vweird.f32 %v2362
      %vm2483 = vweird.f32 %v2477
      %vm2484 = vmor %vm2482, %vm2483
      %v2485 = vsel %vm2484, %v2477, %v2481
      %v2486 = vand.u32 2147483647, %v2362
      %vm2487 = vcmp.eq.f32.partialorder %v2486, 8.507059e+37
      %v2488 = vand.u32 %v2362, 2147483648
      %v2489 = vor.u32 1.1754944e-38, %v2488
      %v2490 = vsel %vm2487, %v2489, %v2485
      %v2491 = vrcp.pop %v2364
      %v2492 = vmul.f32 %v2364, %v2491
      %v2493 = vsub.f32 1.0, %v2492
      %v2494 = vmul.f32 %v2491, %v2493
      %v2495 = vadd.f32 %v2491, %v2494
      %vm2496 = vweird.f32 %v2364
      %vm2497 = vweird.f32 %v2491
      %vm2498 = vmor %vm2496, %vm2497
      %v2499 = vsel %vm2498, %v2491, %v2495
      %v2500 = vand.u32 2147483647, %v2364
      %vm2501 = vcmp.eq.f32.partialorder %v2500, 8.507059e+37
      %v2502 = vand.u32 %v2364, 2147483648
      %v2503 = vor.u32 1.1754944e-38, %v2502
      %v2504 = vsel %vm2501, %v2503, %v2499
      %v2505 = vrcp.pop %v2366
      %v2506 = vmul.f32 %v2366, %v2505
      %v2507 = vsub.f32 1.0, %v2506
      %v2508 = vmul.f32 %v2505, %v2507
      %v2509 = vadd.f32 %v2505, %v2508
      %vm2510 = vweird.f32 %v2366
      %vm2511 = vweird.f32 %v2505
      %vm2512 = vmor %vm2510, %vm2511
      %v2513 = vsel %vm2512, %v2505, %v2509
      %v2514 = vand.u32 2147483647, %v2366
      %vm2515 = vcmp.eq.f32.partialorder %v2514, 8.507059e+37
      %v2516 = vand.u32 %v2366, 2147483648
      %v2517 = vor.u32 1.1754944e-38, %v2516
      %v2518 = vsel %vm2515, %v2517, %v2513
      %v2519 = vrcp.pop %v2368
      %v2520 = vmul.f32 %v2368, %v2519
      %v2521 = vsub.f32 1.0, %v2520
      %v2522 = vmul.f32 %v2519, %v2521
      %v2523 = vadd.f32 %v2519, %v2522
      %vm2524 = vweird.f32 %v2368
      %vm2525 = vweird.f32 %v2519
      %vm2526 = vmor %vm2524, %vm2525
      %v2527 = vsel %vm2526, %v2519, %v2523
      %v2528 = vand.u32 2147483647, %v2368
      %vm2529 = vcmp.eq.f32.partialorder %v2528, 8.507059e+37
      %v2530 = vand.u32 %v2368, 2147483648
      %v2531 = vor.u32 1.1754944e-38, %v2530
      %v2532 = vsel %vm2529, %v2531, %v2527
      %v2533 = vrcp.pop %v2370
      %v2534 = vmul.f32 %v2370, %v2533
      %v2535 = vsub.f32 1.0, %v2534
      %v2536 = vmul.f32 %v2533, %v2535
      %v2537 = vadd.f32 %v2533, %v2536
      %vm2538 = vweird.f32 %v2370
      %vm2539 = vweird.f32 %v2533
      %vm2540 = vmor %vm2538, %vm2539
      %v2541 = vsel %vm2540, %v2533, %v2537
      %v2542 = vand.u32 2147483647, %v2370
      %vm2543 = vcmp.eq.f32.partialorder %v2542, 8.507059e+37
      %v2544 = vand.u32 %v2370, 2147483648
      %v2545 = vor.u32 1.1754944e-38, %v2544
      %v2546 = vsel %vm2543, %v2545, %v2541
      %v2547 = vrcp.pop %v2372
      %v2548 = vmul.f32 %v2372, %v2547
      %v2549 = vsub.f32 1.0, %v2548
      %v2550 = vmul.f32 %v2547, %v2549
      %v2551 = vadd.f32 %v2547, %v2550
      %vm2552 = vweird.f32 %v2372
      %vm2553 = vweird.f32 %v2547
      %vm2554 = vmor %vm2552, %vm2553
      %v2555 = vsel %vm2554, %v2547, %v2551
      %v2556 = vand.u32 2147483647, %v2372
      %vm2557 = vcmp.eq.f32.partialorder %v2556, 8.507059e+37
      %v2558 = vand.u32 %v2372, 2147483648
      %v2559 = vor.u32 1.1754944e-38, %v2558
      %v2560 = vsel %vm2557, %v2559, %v2555
      %v2561 = vrcp.pop %v2374
      %v2562 = vmul.f32 %v2374, %v2561
      %v2563 = vsub.f32 1.0, %v2562
      %v2564 = vmul.f32 %v2561, %v2563
      %v2565 = vadd.f32 %v2561, %v2564
      %vm2566 = vweird.f32 %v2374
      %vm2567 = vweird.f32 %v2561
      %vm2568 = vmor %vm2566, %vm2567
      %v2569 = vsel %vm2568, %v2561, %v2565
      %v2570 = vand.u32 2147483647, %v2374
      %vm2571 = vcmp.eq.f32.partialorder %v2570, 8.507059e+37
      %v2572 = vand.u32 %v2374, 2147483648
      %v2573 = vor.u32 1.1754944e-38, %v2572
      %v2574 = vsel %vm2571, %v2573, %v2569
      %v2575 = vrcp.pop %v2376
      %v2576 = vmul.f32 %v2376, %v2575
      %v2577 = vsub.f32 1.0, %v2576
      %v2578 = vmul.f32 %v2575, %v2577
      %v2579 = vadd.f32 %v2575, %v2578
      %vm2580 = vweird.f32 %v2376
      %vm2581 = vweird.f32 %v2575
      %vm2582 = vmor %vm2580, %vm2581
      %v2583 = vsel %vm2582, %v2575, %v2579
      %v2584 = vand.u32 2147483647, %v2376
      %vm2585 = vcmp.eq.f32.partialorder %v2584, 8.507059e+37
      %v2586 = vand.u32 %v2376, 2147483648
      %v2587 = vor.u32 1.1754944e-38, %v2586
      %v2588 = vsel %vm2585, %v2587, %v2583
      %v2589 = vrcp.pop %v2378
      %v2590 = vmul.f32 %v2378, %v2589
      %v2591 = vsub.f32 1.0, %v2590
      %v2592 = vmul.f32 %v2589, %v2591
      %v2593 = vadd.f32 %v2589, %v2592
      %vm2594 = vweird.f32 %v2378
      %vm2595 = vweird.f32 %v2589
      %vm2596 = vmor %vm2594, %vm2595
      %v2597 = vsel %vm2596, %v2589, %v2593
      %v2598 = vand.u32 2147483647, %v2378
      %vm2599 = vcmp.eq.f32.partialorder %v2598, 8.507059e+37
      %v2600 = vand.u32 %v2378, 2147483648
      %v2601 = vor.u32 1.1754944e-38, %v2600
      %v2602 = vsel %vm2599, %v2601, %v2597
      %v2603 = vmul.f32 %v2316, %v2392
      %v2604 = vmul.f32 %v2318, %v2406
      %v2605 = vmul.f32 %v2320, %v2420
      %v2606 = vmul.f32 %v2322, %v2434
      %v2607 = vmul.f32 %v2324, %v2448
      %v2608 = vmul.f32 %v2326, %v2462
      %v2609 = vmul.f32 %v2328, %v2476
      %v2610 = vmul.f32 %v2330, %v2490
      %v2611 = vmul.f32 %v2332, %v2504
      %v2612 = vmul.f32 %v2334, %v2518
      %v2613 = vmul.f32 %v2336, %v2532
      %v2614 = vmul.f32 %v2338, %v2546
      %v2615 = vmul.f32 %v2340, %v2560
      %v2616 = vmul.f32 %v2342, %v2574
      %v2617 = vmul.f32 %v2344, %v2588
      %v2618 = vmul.f32 %v2346, %v2602
      %2619 = vmatpush.xpose.msra.mxu0 %v2618
      %2620 = vmatpush.xpose.msra.mxu0 %v2617
      %2621 = vmatpush.xpose.msra.mxu0 %v2616
      %2622 = vmatpush.xpose.msra.mxu0 %v2615
      %2623 = vmatpush.xpose.msra.mxu0 %v2614
      %2624 = vmatpush.xpose.msra.mxu0 %v2613
      %2625 = vmatpush.xpose.msra.mxu0 %v2612
      %2626 = vmatpush.xpose.msra.mxu0 %v2611
      %2627 = vmatpush.xpose.msra.mxu0 %v2610
      %2628 = vmatpush.xpose.msra.mxu0 %v2609
      %2629 = vmatpush.xpose.msra.mxu0 %v2608
      %2630 = vmatpush.xpose.msra.mxu0 %v2607
      %2631 = vmatpush.xpose.msra.mxu0 %v2606
      %2632 = vmatpush.xpose.msra.mxu0 %v2605
      %2633 = vmatpush.xpose.msra.mxu0 %v2604
      %2634 = vmatpush.xpose.msra.mxu0 %v2603
      %2635 = vmatmul.f32.gmra.mxu0 %v551
      %v2636 = vpop.f32.mrf.mxu0
      %v2637 = vadd.f32 0.0, %v2636
      %2638 = vmatmul.f32.gmra.mxu0 %v554
      %v2639 = vpop.f32.mrf.mxu0
      %v2640 = vadd.f32 0.0, %v2639
      %2641 = vdwg.mxu0
      %2642 = vst [vmem:[#allocation2 + $0x30] sm:$0xff] %v2637
      %2643 = vst [vmem:[#allocation2 + $0x38] sm:$0xff] %v2640
      %v2644 = vld [vmem:[%s6] sm:$0xff]
      %v2645 = vld [vmem:[%s6 + $0x8] sm:$0xff]
      %v2646 = vld [vmem:[#allocation2] sm:$0xff]
      %v2647 = vld [vmem:[#allocation2 + $0x8] sm:$0xff]
      %v2648 = vld [vmem:[#allocation2 + $0x10] sm:$0xff]
      %v2649 = vld [vmem:[#allocation2 + $0x18] sm:$0xff]
      %v2650 = vld [vmem:[#allocation2 + $0x20] sm:$0xff]
      %v2651 = vld [vmem:[#allocation2 + $0x28] sm:$0xff]
      %v2652 = vld [vmem:[#allocation2 + $0x30] sm:$0xff]
      %v2653 = vld [vmem:[#allocation2 + $0x38] sm:$0xff]
      %v2654 = vld [vmem:[%s7] sm:$0xff]
      %v2655 = vld [vmem:[%s7 + $0x8] sm:$0xff]
      %2657 = vset.pattern.permute.xlu0 0
      %2658 = vperm.xlu0 %2657, %v2654
      %v2659 = vpop.permute.xlu0 %2658
      %2662 = vset.pattern.permute.xlu0 0
      %2663 = vperm.xlu0 %2662, %v2655
      %v2664 = vpop.permute.xlu0 %2663
      %vm2666 = vcmask 523264
      %v2668 = vsel %vm2666, %v2644, 0
      %v2671 = vsel %vm2666, %v2645, 0
      %2673 = vmatpush.msra.mxu0 0.0
      %2674 = vmatpush.msra.mxu0 0.0
      %2675 = vmatpush.msra.mxu0 0.0
      %2676 = vmatpush.msra.mxu0 0.0
      %2677 = vmatpush.msra.mxu0 0.0
      %2678 = vmatpush.msra.mxu0 0.0
      %2679 = vmatpush.msra.mxu0 0.0
      %2680 = vmatpush.msra.mxu0 0.0
      %2681 = vmatpush.msra.mxu0 %v2653
      %2682 = vmatpush.msra.mxu0 %v2652
      %2683 = vmatpush.msra.mxu0 %v2651
      %2684 = vmatpush.msra.mxu0 %v2650
      %2685 = vmatpush.msra.mxu0 %v2649
      %2686 = vmatpush.msra.mxu0 %v2648
      %2687 = vmatpush.msra.mxu0 %v2647
      %2688 = vmatpush.msra.mxu0 %v2646
      %2689 = vmatmul.f32.gmra.mxu0 %v2668
      %v2690 = vpop.f32.mrf.mxu0
      %v2691 = vadd.f32 %v2659, %v2690
      %2692 = vmatmul.f32.gmra.mxu0 %v2671
      %v2693 = vpop.f32.mrf.mxu0
      %v2694 = vadd.f32 %v2664, %v2693
      %2695 = vdwg.mxu0
      %v2696 = vadd.f32 %v2691, %v306
      %v2697 = vadd.f32 %v2694, %v307
      %2698 = vst [vmem:[%s305] sm:$0xff] %v2696
      %2699 = vst [vmem:[%s305 + $0x8] sm:$0xff] %v2697
      %p2700 = scmp.lt.s32.totalorder %s19, 1
      %s2701 = scalar_select %p2700, %s19, 1
      %s2702 = smul.addr %s2701, 2
      %s2703 = smul.addr %s2702, 8
      %s2704 = scalar_lea.vmem %s8, %s2703
      // Predicated region
      $region53: #{transformer_block.2} parent=51 // pred_check
        %p2705 = pneg %p210
      $region54: #{transformer_block.2} parent=51 // pred_check_branch
        %2707 = sbr.rel (%p2705) target = $region56
      $region55: #{transformer_block.2} parent=51 // pred_region
        _
      $region56: #{transformer_block.2} parent=51 // pred_fallthru
        _
    $region52: #{transformer_block.2} parent=5 // pred_fallthru
      _
    %p2708 = scmp.le.s32.totalorder 2, %s14
    // Predicated region
    $region57: #{transformer_block.2} parent=5 // pred_check
      %p2709 = pneg %p2708
    $region58: #{transformer_block.2} parent=5 // pred_check_branch
      %2711 = sbr.rel (%p2709) target = $region60
    $region59: #{transformer_block.2} parent=5 // pred_region
      %s2712 = ssub.s32 %s14, 2
      // Predicated region
      $region61: #{transformer_block.2} parent=59 // pred_check
        %p2713 = pneg %p216
      $region62: #{transformer_block.2} parent=59 // pred_check_branch
        %2715 = sbr.rel (%p2713) target = $region64
      $region63: #{transformer_block.2} parent=59 // pred_region
        %p2716 = scmp.lt.s32.totalorder %s20, 1
        %s2717 = scalar_select %p2716, %s20, 1
        %s2718 = smul.addr %s2717, 2
        %s2719 = smul.addr %s2718, 8
        %s2720 = scalar_lea.vmem %s8, %s2719
      $region64: #{transformer_block.2} parent=59 // pred_fallthru
        _
    $region60: #{transformer_block.2} parent=5 // pred_fallthru
      _
  $region6: #{transformer_block.2} parent=0 // loop_footer
    %s18 = sadd.s32 1, %s14
  $region7: #{transformer_block.2} parent=0 // loop_footer_branch
    %13 = sbr.rel target = $region3
  $region8: #{transformer_block.2} parent=0 // loop_exit
    _

</llo_original>
